<compile_context>
chip_gen: v5e
topology: v5e:2x2
jax: 0.10.0
libtpu: 0.0.40
codegen_flags: <defaults>
</compile_context>

<pallas_src>
import functools

import numpy as np
import jax
import jax.numpy as jnp
from jax.experimental import pallas as pl
from jax.experimental.pallas import tpu as pltpu

BN_EPS = 1e-5
LRELU_SLOPE = 0.2
K = 4      # conv kernel size
S = 2      # conv stride
LANE = 128


def _conv_out(n):
    return (n - K) // S + 1


def _ceil_to(v, m):
    return ((v + m - 1) // m) * m


# ----------------------------------------------------------------------------
# Fused Pallas kernel: conv1 + BN + LReLU -> conv2 + BN + LReLU -> conv3 (+b)
# ----------------------------------------------------------------------------
def _encoder_kernel(x_ref,
                    s1_ref, w1_ref, r1_ref, r1t_ref, g1_ref, be1_ref,
                    s2_ref, w2_ref, r2_ref, r2t_ref, g2_ref, be2_ref,
                    s3_ref, w3_ref, b3_ref,
                    o_ref, *, inv_count1, inv_count2):
    def conv(xb, s_ref, w_ref):
        # xb: (Mp_in, Lp_in) bf16 slab, channels innermost, lane-padded.
        # 4 tiny bf16 selection matmuls (exact: S is 0/1) pick rows 2*ho+kh;
        # lane-concat the selected slabs (Lp_in multiple of 128 => pure vreg
        # placement) and run ONE deep heavy GEMM against the row-stacked
        # Toeplitz weights.  bf16-in / f32-acc throughout.
        parts = []
        for kh in range(K):
            sel = jnp.dot(s_ref[kh], xb, preferred_element_type=jnp.float32)
            parts.append(sel.astype(jnp.bfloat16))   # exact (values already bf16)
        xs = jnp.concatenate(parts, axis=1)          # (Mp_out, K*Lp_in) bf16
        return jnp.dot(xs, w_ref[...], preferred_element_type=jnp.float32)

    def bn_lrelu(y, r_ref, rt_ref, g_ref, be_ref, inv_count):
        # BatchNorm2d (training-mode batch stats, biased variance) fused with
        # LeakyReLU(0.2).  Single pass over the slab: var = E[y^2] - mean^2,
        # mean folded into the shift => normalize is one FMA.  Row reductions
        # on the XLU; W_out->channel fold and channel->column broadcast are
        # tiny 0/1 matmuls.  Padded rows/lanes of y are zero, and the true
        # element count is baked into inv_count, so padding is harmless.
        col_sum = jnp.sum(y, axis=0, keepdims=True)          # (1, Lp)
        col_sq = jnp.sum(y * y, axis=0, keepdims=True)       # (1, Lp)
        mean_c = jnp.dot(col_sum, r_ref[...],
                         preferred_element_type=jnp.float32) * inv_count
        ex2_c = jnp.dot(col_sq, r_ref[...],
                        preferred_element_type=jnp.float32) * inv_count
        var_c = ex2_c - mean_c * mean_c
        scale_c = g_ref[...] * jax.lax.rsqrt(var_c + BN_EPS)   # EUP rsqrt
        shift_c = be_ref[...] - mean_c * scale_c
        scale_row = jnp.dot(scale_c, rt_ref[...],
                            preferred_element_type=jnp.float32)
        shift_row = jnp.dot(shift_c, rt_ref[...],
                            preferred_element_type=jnp.float32)
        z = y * scale_row + shift_row
        return jnp.where(z > 0, z, LRELU_SLOPE * z)

    # Conv biases of blocks 1-2 are omitted: training-mode BN mean subtraction
    # cancels them exactly (eval-mode BN would require them restored).
    y1 = conv(x_ref[...], s1_ref, w1_ref)
    h1 = bn_lrelu(y1, r1_ref, r1t_ref, g1_ref, be1_ref, inv_count1)
    y2 = conv(h1.astype(jnp.bfloat16), s2_ref, w2_ref)
    h2 = bn_lrelu(y2, r2_ref, r2t_ref, g2_ref, be2_ref, inv_count2)
    o_ref[...] = conv(h2.astype(jnp.bfloat16), s3_ref, w3_ref) + b3_ref[...]


# ----------------------------------------------------------------------------
# Wrapper-side (trace-time) constant / weight-layout builders
# ----------------------------------------------------------------------------
def _build_sel(n, h_in, h_out, mp_out, mp_in):
    """S[kh, b*h_out + ho, b*h_in + 2*ho + kh] = 1  (0/1 row selection), bf16,
    zero-padded to (mp_out, mp_in) so padded output rows stay zero."""
    sel = np.zeros((K, mp_out, mp_in), np.float32)
    for kh in range(K):
        for b in range(n):
            for ho in range(h_out):
                sel[kh, b * h_out + ho, b * h_in + S * ho + kh] = 1.0
    return jnp.asarray(sel, dtype=jnp.bfloat16)


def _build_wstack(w, w_in, w_out, lp_in, lp_out):
    """Row-stacked, lane-padded Toeplitz-along-W weights:
       Wstack[kh*lp_in + w*Cin + ci, wo*Cout + co] = w[co, ci, kh, w - 2*wo]."""
    c_out, c_in, k, _ = w.shape
    m = np.zeros((k, w_in, w_out), np.float32)
    for kw in range(k):
        for wo in range(w_out):
            m[kw, S * wo + kw, wo] = 1.0
    wt = jnp.transpose(w.astype(jnp.float32), (2, 3, 1, 0))   # (kh, kw, ci, co)
    wb = jnp.einsum('kab,hkic->haibc', jnp.asarray(m), wt)    # (kh, w, ci, wo, co)
    wb = wb.reshape(k, w_in * c_in, w_out * c_out)
    wb = jnp.pad(wb, ((0, 0),
                      (0, lp_in - w_in * c_in),
                      (0, lp_out - w_out * c_out)))
    return wb.reshape(k * lp_in, lp_out).astype(jnp.bfloat16)


def _build_chan_map(w_out, c_out, lp):
    """R[wo*c_out + c, c] = 1 (column -> channel fold, lane-padded) and R^T."""
    r = np.zeros((lp, c_out), np.float32)
    for wo in range(w_out):
        for c in range(c_out):
            r[wo * c_out + c, c] = 1.0
    return jnp.asarray(r), jnp.asarray(np.ascontiguousarray(r.T))


def encoder_forward(image_nchw, params):
    n, c0, h0, w0 = image_nchw.shape
    c1 = params['w1'].shape[0]
    c2 = params['w2'].shape[0]
    c3 = params['w3'].shape[0]
    h1, w1 = _conv_out(h0), _conv_out(w0)
    h2, w2 = _conv_out(h1), _conv_out(w1)
    h3, w3 = _conv_out(h2), _conv_out(w2)

    # Padded slab geometry: lane widths -> multiples of 128, rows -> 16 / 8.
    lp0, lp1 = _ceil_to(w0 * c0, LANE), _ceil_to(w1 * c1, LANE)
    lp2, lp3 = _ceil_to(w2 * c2, LANE), _ceil_to(w3 * c3, LANE)
    mp0, mp1 = _ceil_to(n * h0, 16), _ceil_to(n * h1, 16)
    mp2, mp3 = _ceil_to(n * h2, 16), _ceil_to(n * h3, 8)

    # Input as a lane-padded bf16 (N*H, pad128(W*C)) slab, channels innermost.
    x2d = jnp.transpose(image_nchw, (0, 2, 3, 1)).reshape(n * h0, w0 * c0)
    x2d = jnp.pad(x2d.astype(jnp.float32),
                  ((0, mp0 - n * h0), (0, lp0 - w0 * c0))).astype(jnp.bfloat16)

    wst1 = _build_wstack(params['w1'], w0, w1, lp0, lp1)
    wst2 = _build_wstack(params['w2'], w1, w2, lp1, lp2)
    wst3 = _build_wstack(params['w3'], w2, w3, lp2, lp3)
    s1 = _build_sel(n, h0, h1, mp1, mp0)
    s2 = _build_sel(n, h1, h2, mp2, mp1)
    s3 = _build_sel(n, h2, h3, mp3, mp2)
    r1, r1t = _build_chan_map(w1, c1, lp1)
    r2, r2t = _build_chan_map(w2, c2, lp2)

    g1 = params['g1'].reshape(1, c1).astype(jnp.float32)
    be1 = params['be1'].reshape(1, c1).astype(jnp.float32)
    g2 = params['g2'].reshape(1, c2).astype(jnp.float32)
    be2 = params['be2'].reshape(1, c2).astype(jnp.float32)
    # Bias of the final (no-BN) conv, pre-broadcast to one lane-padded row.
    b3 = jnp.pad(jnp.tile(params['b3'].astype(jnp.float32), (w3,)),
                 (0, lp3 - w3 * c3)).reshape(1, lp3)

    kernel = functools.partial(
        _encoder_kernel,
        inv_count1=1.0 / float(n * h1 * w1),
        inv_count2=1.0 / float(n * h2 * w2))

    vmem_spec = pl.BlockSpec(memory_space=pltpu.MemorySpace.VMEM)
    out2d = pl.pallas_call(
        kernel,
        out_shape=jax.ShapeDtypeStruct((mp3, lp3), jnp.float32),
        in_specs=[vmem_spec] * 16,
        out_specs=vmem_spec,
    )(x2d, s1, wst1, r1, r1t, g1, be1,
      s2, wst2, r2, r2t, g2, be2,
      s3, wst3, b3)

    # Un-pad, then (N*H3, W3*C3) -> NCHW flatten order (c,h,w), matching .view.
    out = out2d[:n * h3, :w3 * c3].reshape(n, h3, w3, c3)
    return out.transpose(0, 3, 1, 2).reshape(n, -1)


# ----------------------------------------------------------------------------
# Pure-JAX f32 reference (for correctness check)
# ----------------------------------------------------------------------------
def ref_forward(image, params):
    def conv(x, w, b):
        y = jax.lax.conv_general_dilated(
            x, w, (S, S), 'VALID',
            dimension_numbers=('NCHW', 'OIHW', 'NCHW'))
        return y + b.reshape(1, -1, 1, 1)

    def bn_lrelu(y, g, be):
        mean = y.mean(axis=(0, 2, 3), keepdims=True)
        var = ((y - mean) ** 2).mean(axis=(0, 2, 3), keepdims=True)
        y = (y - mean) * jax.lax.rsqrt(var + BN_EPS)
        y = y * g.reshape(1, -1, 1, 1) + be.reshape(1, -1, 1, 1)
        return jnp.where(y > 0, y, LRELU_SLOPE * y)

    h = bn_lrelu(conv(image, params['w1'], params['b1']),
                 params['g1'], params['be1'])
    h = bn_lrelu(conv(h, params['w2'], params['b2']),
                 params['g2'], params['be2'])
    h = conv(h, params['w3'], params['b3'])
    return h.reshape(h.shape[0], -1)


if __name__ == "__main__":
    key = jax.random.PRNGKey(0)
    ks = jax.random.split(key, 8)
    num_channels, nf = 3, 16

    params = {
        'w1': 0.05 * jax.random.normal(ks[0], (nf, num_channels, 4, 4), jnp.float32),
        'b1': 0.05 * jax.random.normal(ks[1], (nf,), jnp.float32),
        'g1': jnp.ones((nf,), jnp.float32),
        'be1': jnp.zeros((nf,), jnp.float32),
        'w2': 0.05 * jax.random.normal(ks[2], (nf * 2, nf, 4, 4), jnp.float32),
        'b2': 0.05 * jax.random.normal(ks[3], (nf * 2,), jnp.float32),
        'g2': jnp.ones((nf * 2,), jnp.float32),
        'be2': jnp.zeros((nf * 2,), jnp.float32),
        'w3': 0.05 * jax.random.normal(ks[4], (1, nf * 2, 4, 4), jnp.float32),
        'b3': 0.05 * jax.random.normal(ks[5], (1,), jnp.float32),
    }

    # N=2, C=3, H=W=32  ->  15x15 -> 6x6 -> 2x2 -> view (2, 4)
    image = jax.random.normal(ks[6], (2, 3, 32, 32), jnp.float32)

    fwd = jax.jit(encoder_forward)
    out = jax.block_until_ready(fwd(image, params))

    assert out.shape == (2, 4), out.shape
    ref = ref_forward(image, params)
    # Kernel uses bf16 MXU inputs with f32 accumulation; compared against the
    # all-f32 XLA reference, so use a bf16-appropriate tolerance.
    np.testing.assert_allclose(np.asarray(out), np.asarray(ref),
                               atol=2e-2, rtol=2e-2)
    print("KERNEL_OK")
</pallas_src>

<mosaic_0001>
module attributes {stable_mosaic.version = 11 : i64} {
  func.func @_encoder_kernel(%arg0: memref<64x128xbf16, #tpu.memory_space<vmem>>, %arg1: memref<4x32x64xbf16, #tpu.memory_space<vmem>>, %arg2: memref<512x256xbf16, #tpu.memory_space<vmem>>, %arg3: memref<256x16xf32, #tpu.memory_space<vmem>>, %arg4: memref<16x256xf32, #tpu.memory_space<vmem>>, %arg5: memref<1x16xf32, #tpu.memory_space<vmem>>, %arg6: memref<1x16xf32, #tpu.memory_space<vmem>>, %arg7: memref<4x16x32xbf16, #tpu.memory_space<vmem>>, %arg8: memref<1024x256xbf16, #tpu.memory_space<vmem>>, %arg9: memref<256x32xf32, #tpu.memory_space<vmem>>, %arg10: memref<32x256xf32, #tpu.memory_space<vmem>>, %arg11: memref<1x32xf32, #tpu.memory_space<vmem>>, %arg12: memref<1x32xf32, #tpu.memory_space<vmem>>, %arg13: memref<4x8x16xbf16, #tpu.memory_space<vmem>>, %arg14: memref<1024x128xbf16, #tpu.memory_space<vmem>>, %arg15: memref<1x128xf32, #tpu.memory_space<vmem>>, %arg16: memref<8x128xf32, #tpu.memory_space<vmem>>) attributes {dimension_semantics = [], scalar_prefetch = 0 : i64, scratch_operands = 0 : i64, tpu.core_type = #tpu.core_type<tc>} {
    %c0 = arith.constant 0 : index
    %c0_0 = arith.constant 0 : index
    %0 = vector.load %arg0[%c0, %c0_0] : memref<64x128xbf16, #tpu.memory_space<vmem>>, vector<64x128xbf16>
    %c0_1 = arith.constant 0 : index
    %c0_2 = arith.constant 0 : index
    %c0_3 = arith.constant 0 : index
    %1 = vector.load %arg1[%c0_1, %c0_2, %c0_3] : memref<4x32x64xbf16, #tpu.memory_space<vmem>>, vector<1x32x64xbf16>
    %2 = vector.shape_cast %1 : vector<1x32x64xbf16> to vector<32x64xbf16>
    %cst = arith.constant dense<0.000000e+00> : vector<32x128xf32>
    %3 = tpu.matmul %2, %0, %cst {dimension_numbers = #tpu.dot_dimension_numbers<[1], [0], [0], [1], [0, 0, 1, 1], [], []>} : vector<32x64xbf16>, vector<64x128xbf16>, vector<32x128xf32> -> vector<32x128xf32>
    %4 = arith.truncf %3 : vector<32x128xf32> to vector<32x128xbf16>
    %c1 = arith.constant 1 : index
    %c0_4 = arith.constant 0 : index
    %c0_5 = arith.constant 0 : index
    %5 = vector.load %arg1[%c1, %c0_4, %c0_5] : memref<4x32x64xbf16, #tpu.memory_space<vmem>>, vector<1x32x64xbf16>
    %6 = vector.shape_cast %5 : vector<1x32x64xbf16> to vector<32x64xbf16>
    %cst_6 = arith.constant dense<0.000000e+00> : vector<32x128xf32>
    %7 = tpu.matmul %6, %0, %cst_6 {dimension_numbers = #tpu.dot_dimension_numbers<[1], [0], [0], [1], [0, 0, 1, 1], [], []>} : vector<32x64xbf16>, vector<64x128xbf16>, vector<32x128xf32> -> vector<32x128xf32>
    %8 = arith.truncf %7 : vector<32x128xf32> to vector<32x128xbf16>
    %c2 = arith.constant 2 : index
    %c0_7 = arith.constant 0 : index
    %c0_8 = arith.constant 0 : index
    %9 = vector.load %arg1[%c2, %c0_7, %c0_8] : memref<4x32x64xbf16, #tpu.memory_space<vmem>>, vector<1x32x64xbf16>
    %10 = vector.shape_cast %9 : vector<1x32x64xbf16> to vector<32x64xbf16>
    %cst_9 = arith.constant dense<0.000000e+00> : vector<32x128xf32>
    %11 = tpu.matmul %10, %0, %cst_9 {dimension_numbers = #tpu.dot_dimension_numbers<[1], [0], [0], [1], [0, 0, 1, 1], [], []>} : vector<32x64xbf16>, vector<64x128xbf16>, vector<32x128xf32> -> vector<32x128xf32>
    %12 = arith.truncf %11 : vector<32x128xf32> to vector<32x128xbf16>
    %c3 = arith.constant 3 : index
    %c0_10 = arith.constant 0 : index
    %c0_11 = arith.constant 0 : index
    %13 = vector.load %arg1[%c3, %c0_10, %c0_11] : memref<4x32x64xbf16, #tpu.memory_space<vmem>>, vector<1x32x64xbf16>
    %14 = vector.shape_cast %13 : vector<1x32x64xbf16> to vector<32x64xbf16>
    %cst_12 = arith.constant dense<0.000000e+00> : vector<32x128xf32>
    %15 = tpu.matmul %14, %0, %cst_12 {dimension_numbers = #tpu.dot_dimension_numbers<[1], [0], [0], [1], [0, 0, 1, 1], [], []>} : vector<32x64xbf16>, vector<64x128xbf16>, vector<32x128xf32> -> vector<32x128xf32>
    %16 = arith.truncf %15 : vector<32x128xf32> to vector<32x128xbf16>
    %17 = tpu.concatenate %4, %8, %12, %16 in 1 : vector<32x128xbf16>, vector<32x128xbf16>, vector<32x128xbf16>, vector<32x128xbf16> -> vector<32x512xbf16>
    %c0_13 = arith.constant 0 : index
    %c0_14 = arith.constant 0 : index
    %18 = vector.load %arg2[%c0_13, %c0_14] : memref<512x256xbf16, #tpu.memory_space<vmem>>, vector<512x256xbf16>
    %cst_15 = arith.constant dense<0.000000e+00> : vector<32x256xf32>
    %19 = tpu.matmul %17, %18, %cst_15 {dimension_numbers = #tpu.dot_dimension_numbers<[1], [0], [0], [1], [0, 0, 1, 1], [], []>} : vector<32x512xbf16>, vector<512x256xbf16>, vector<32x256xf32> -> vector<32x256xf32>
    %cst_16 = arith.constant dense<0.000000e+00> : vector<256xf32>
    %20 = vector.multi_reduction <add>, %19, %cst_16 [0] : vector<32x256xf32> to vector<256xf32>
    %21 = vector.shape_cast %20 : vector<256xf32> to vector<1x256xf32>
    %22 = arith.mulf %19, %19 : vector<32x256xf32>
    %cst_17 = arith.constant dense<0.000000e+00> : vector<256xf32>
    %23 = vector.multi_reduction <add>, %22, %cst_17 [0] : vector<32x256xf32> to vector<256xf32>
    %24 = vector.shape_cast %23 : vector<256xf32> to vector<1x256xf32>
    %c0_18 = arith.constant 0 : index
    %c0_19 = arith.constant 0 : index
    %25 = vector.load %arg3[%c0_18, %c0_19] : memref<256x16xf32, #tpu.memory_space<vmem>>, vector<256x16xf32>
    %cst_20 = arith.constant dense<0.000000e+00> : vector<1x16xf32>
    %26 = tpu.matmul %21, %25, %cst_20 {dimension_numbers = #tpu.dot_dimension_numbers<[1], [0], [0], [1], [0, 0, 1, 1], [], []>} : vector<1x256xf32>, vector<256x16xf32>, vector<1x16xf32> -> vector<1x16xf32>
    %cst_21 = arith.constant 0.00222222228 : f32
    %27 = vector.broadcast %cst_21 : f32 to vector<1x16xf32>
    %28 = arith.mulf %26, %27 : vector<1x16xf32>
    %c0_22 = arith.constant 0 : index
    %c0_23 = arith.constant 0 : index
    %29 = vector.load %arg3[%c0_22, %c0_23] : memref<256x16xf32, #tpu.memory_space<vmem>>, vector<256x16xf32>
    %cst_24 = arith.constant dense<0.000000e+00> : vector<1x16xf32>
    %30 = tpu.matmul %24, %29, %cst_24 {dimension_numbers = #tpu.dot_dimension_numbers<[1], [0], [0], [1], [0, 0, 1, 1], [], []>} : vector<1x256xf32>, vector<256x16xf32>, vector<1x16xf32> -> vector<1x16xf32>
    %cst_25 = arith.constant 0.00222222228 : f32
    %31 = vector.broadcast %cst_25 : f32 to vector<1x16xf32>
    %32 = arith.mulf %30, %31 : vector<1x16xf32>
    %33 = arith.mulf %28, %28 : vector<1x16xf32>
    %34 = arith.subf %32, %33 : vector<1x16xf32>
    %c0_26 = arith.constant 0 : index
    %c0_27 = arith.constant 0 : index
    %35 = vector.load %arg5[%c0_26, %c0_27] : memref<1x16xf32, #tpu.memory_space<vmem>>, vector<1x16xf32>
    %cst_28 = arith.constant 9.99999974E-6 : f32
    %36 = vector.broadcast %cst_28 : f32 to vector<1x16xf32>
    %37 = arith.addf %34, %36 : vector<1x16xf32>
    %38 = math.rsqrt %37 : vector<1x16xf32>
    %39 = arith.mulf %35, %38 : vector<1x16xf32>
    %c0_29 = arith.constant 0 : index
    %c0_30 = arith.constant 0 : index
    %40 = vector.load %arg6[%c0_29, %c0_30] : memref<1x16xf32, #tpu.memory_space<vmem>>, vector<1x16xf32>
    %41 = arith.mulf %28, %39 : vector<1x16xf32>
    %42 = arith.subf %40, %41 : vector<1x16xf32>
    %c0_31 = arith.constant 0 : index
    %c0_32 = arith.constant 0 : index
    %43 = vector.load %arg4[%c0_31, %c0_32] : memref<16x256xf32, #tpu.memory_space<vmem>>, vector<16x256xf32>
    %cst_33 = arith.constant dense<0.000000e+00> : vector<1x256xf32>
    %44 = tpu.matmul %39, %43, %cst_33 {dimension_numbers = #tpu.dot_dimension_numbers<[1], [0], [0], [1], [0, 0, 1, 1], [], []>} : vector<1x16xf32>, vector<16x256xf32>, vector<1x256xf32> -> vector<1x256xf32>
    %c0_34 = arith.constant 0 : index
    %c0_35 = arith.constant 0 : index
    %45 = vector.load %arg4[%c0_34, %c0_35] : memref<16x256xf32, #tpu.memory_space<vmem>>, vector<16x256xf32>
    %cst_36 = arith.constant dense<0.000000e+00> : vector<1x256xf32>
    %46 = tpu.matmul %42, %45, %cst_36 {dimension_numbers = #tpu.dot_dimension_numbers<[1], [0], [0], [1], [0, 0, 1, 1], [], []>} : vector<1x16xf32>, vector<16x256xf32>, vector<1x256xf32> -> vector<1x256xf32>
    %47 = vector.broadcast %44 : vector<1x256xf32> to vector<32x256xf32>
    %48 = arith.mulf %19, %47 : vector<32x256xf32>
    %49 = vector.broadcast %46 : vector<1x256xf32> to vector<32x256xf32>
    %50 = arith.addf %48, %49 : vector<32x256xf32>
    %cst_37 = arith.constant 0.000000e+00 : f32
    %51 = vector.broadcast %cst_37 : f32 to vector<32x256xf32>
    %52 = arith.cmpf ogt, %50, %51 : vector<32x256xf32>
    %cst_38 = arith.constant 2.000000e-01 : f32
    %53 = vector.broadcast %cst_38 : f32 to vector<32x256xf32>
    %54 = arith.mulf %53, %50 : vector<32x256xf32>
    %55 = arith.select %52, %50, %54 : vector<32x256xi1>, vector<32x256xf32>
    %56 = arith.truncf %55 : vector<32x256xf32> to vector<32x256xbf16>
    %c0_39 = arith.constant 0 : index
    %c0_40 = arith.constant 0 : index
    %c0_41 = arith.constant 0 : index
    %57 = vector.load %arg7[%c0_39, %c0_40, %c0_41] : memref<4x16x32xbf16, #tpu.memory_space<vmem>>, vector<1x16x32xbf16>
    %58 = vector.shape_cast %57 : vector<1x16x32xbf16> to vector<16x32xbf16>
    %cst_42 = arith.constant dense<0.000000e+00> : vector<16x256xf32>
    %59 = tpu.matmul %58, %56, %cst_42 {dimension_numbers = #tpu.dot_dimension_numbers<[1], [0], [0], [1], [0, 0, 1, 1], [], []>} : vector<16x32xbf16>, vector<32x256xbf16>, vector<16x256xf32> -> vector<16x256xf32>
    %60 = arith.truncf %59 : vector<16x256xf32> to vector<16x256xbf16>
    %c1_43 = arith.constant 1 : index
    %c0_44 = arith.constant 0 : index
    %c0_45 = arith.constant 0 : index
    %61 = vector.load %arg7[%c1_43, %c0_44, %c0_45] : memref<4x16x32xbf16, #tpu.memory_space<vmem>>, vector<1x16x32xbf16>
    %62 = vector.shape_cast %61 : vector<1x16x32xbf16> to vector<16x32xbf16>
    %cst_46 = arith.constant dense<0.000000e+00> : vector<16x256xf32>
    %63 = tpu.matmul %62, %56, %cst_46 {dimension_numbers = #tpu.dot_dimension_numbers<[1], [0], [0], [1], [0, 0, 1, 1], [], []>} : vector<16x32xbf16>, vector<32x256xbf16>, vector<16x256xf32> -> vector<16x256xf32>
    %64 = arith.truncf %63 : vector<16x256xf32> to vector<16x256xbf16>
    %c2_47 = arith.constant 2 : index
    %c0_48 = arith.constant 0 : index
    %c0_49 = arith.constant 0 : index
    %65 = vector.load %arg7[%c2_47, %c0_48, %c0_49] : memref<4x16x32xbf16, #tpu.memory_space<vmem>>, vector<1x16x32xbf16>
    %66 = vector.shape_cast %65 : vector<1x16x32xbf16> to vector<16x32xbf16>
    %cst_50 = arith.constant dense<0.000000e+00> : vector<16x256xf32>
    %67 = tpu.matmul %66, %56, %cst_50 {dimension_numbers = #tpu.dot_dimension_numbers<[1], [0], [0], [1], [0, 0, 1, 1], [], []>} : vector<16x32xbf16>, vector<32x256xbf16>, vector<16x256xf32> -> vector<16x256xf32>
    %68 = arith.truncf %67 : vector<16x256xf32> to vector<16x256xbf16>
    %c3_51 = arith.constant 3 : index
    %c0_52 = arith.constant 0 : index
    %c0_53 = arith.constant 0 : index
    %69 = vector.load %arg7[%c3_51, %c0_52, %c0_53] : memref<4x16x32xbf16, #tpu.memory_space<vmem>>, vector<1x16x32xbf16>
    %70 = vector.shape_cast %69 : vector<1x16x32xbf16> to vector<16x32xbf16>
    %cst_54 = arith.constant dense<0.000000e+00> : vector<16x256xf32>
    %71 = tpu.matmul %70, %56, %cst_54 {dimension_numbers = #tpu.dot_dimension_numbers<[1], [0], [0], [1], [0, 0, 1, 1], [], []>} : vector<16x32xbf16>, vector<32x256xbf16>, vector<16x256xf32> -> vector<16x256xf32>
    %72 = arith.truncf %71 : vector<16x256xf32> to vector<16x256xbf16>
    %73 = tpu.concatenate %60, %64, %68, %72 in 1 : vector<16x256xbf16>, vector<16x256xbf16>, vector<16x256xbf16>, vector<16x256xbf16> -> vector<16x1024xbf16>
    %c0_55 = arith.constant 0 : index
    %c0_56 = arith.constant 0 : index
    %74 = vector.load %arg8[%c0_55, %c0_56] : memref<1024x256xbf16, #tpu.memory_space<vmem>>, vector<1024x256xbf16>
    %cst_57 = arith.constant dense<0.000000e+00> : vector<16x256xf32>
    %75 = tpu.matmul %73, %74, %cst_57 {dimension_numbers = #tpu.dot_dimension_numbers<[1], [0], [0], [1], [0, 0, 1, 1], [], []>} : vector<16x1024xbf16>, vector<1024x256xbf16>, vector<16x256xf32> -> vector<16x256xf32>
    %cst_58 = arith.constant dense<0.000000e+00> : vector<256xf32>
    %76 = vector.multi_reduction <add>, %75, %cst_58 [0] : vector<16x256xf32> to vector<256xf32>
    %77 = vector.shape_cast %76 : vector<256xf32> to vector<1x256xf32>
    %78 = arith.mulf %75, %75 : vector<16x256xf32>
    %cst_59 = arith.constant dense<0.000000e+00> : vector<256xf32>
    %79 = vector.multi_reduction <add>, %78, %cst_59 [0] : vector<16x256xf32> to vector<256xf32>
    %80 = vector.shape_cast %79 : vector<256xf32> to vector<1x256xf32>
    %c0_60 = arith.constant 0 : index
    %c0_61 = arith.constant 0 : index
    %81 = vector.load %arg9[%c0_60, %c0_61] : memref<256x32xf32, #tpu.memory_space<vmem>>, vector<256x32xf32>
    %cst_62 = arith.constant dense<0.000000e+00> : vector<1x32xf32>
    %82 = tpu.matmul %77, %81, %cst_62 {dimension_numbers = #tpu.dot_dimension_numbers<[1], [0], [0], [1], [0, 0, 1, 1], [], []>} : vector<1x256xf32>, vector<256x32xf32>, vector<1x32xf32> -> vector<1x32xf32>
    %cst_63 = arith.constant 0.013888889 : f32
    %83 = vector.broadcast %cst_63 : f32 to vector<1x32xf32>
    %84 = arith.mulf %82, %83 : vector<1x32xf32>
    %c0_64 = arith.constant 0 : index
    %c0_65 = arith.constant 0 : index
    %85 = vector.load %arg9[%c0_64, %c0_65] : memref<256x32xf32, #tpu.memory_space<vmem>>, vector<256x32xf32>
    %cst_66 = arith.constant dense<0.000000e+00> : vector<1x32xf32>
    %86 = tpu.matmul %80, %85, %cst_66 {dimension_numbers = #tpu.dot_dimension_numbers<[1], [0], [0], [1], [0, 0, 1, 1], [], []>} : vector<1x256xf32>, vector<256x32xf32>, vector<1x32xf32> -> vector<1x32xf32>
    %cst_67 = arith.constant 0.013888889 : f32
    %87 = vector.broadcast %cst_67 : f32 to vector<1x32xf32>
    %88 = arith.mulf %86, %87 : vector<1x32xf32>
    %89 = arith.mulf %84, %84 : vector<1x32xf32>
    %90 = arith.subf %88, %89 : vector<1x32xf32>
    %c0_68 = arith.constant 0 : index
    %c0_69 = arith.constant 0 : index
    %91 = vector.load %arg11[%c0_68, %c0_69] : memref<1x32xf32, #tpu.memory_space<vmem>>, vector<1x32xf32>
    %cst_70 = arith.constant 9.99999974E-6 : f32
    %92 = vector.broadcast %cst_70 : f32 to vector<1x32xf32>
    %93 = arith.addf %90, %92 : vector<1x32xf32>
    %94 = math.rsqrt %93 : vector<1x32xf32>
    %95 = arith.mulf %91, %94 : vector<1x32xf32>
    %c0_71 = arith.constant 0 : index
    %c0_72 = arith.constant 0 : index
    %96 = vector.load %arg12[%c0_71, %c0_72] : memref<1x32xf32, #tpu.memory_space<vmem>>, vector<1x32xf32>
    %97 = arith.mulf %84, %95 : vector<1x32xf32>
    %98 = arith.subf %96, %97 : vector<1x32xf32>
    %c0_73 = arith.constant 0 : index
    %c0_74 = arith.constant 0 : index
    %99 = vector.load %arg10[%c0_73, %c0_74] : memref<32x256xf32, #tpu.memory_space<vmem>>, vector<32x256xf32>
    %cst_75 = arith.constant dense<0.000000e+00> : vector<1x256xf32>
    %100 = tpu.matmul %95, %99, %cst_75 {dimension_numbers = #tpu.dot_dimension_numbers<[1], [0], [0], [1], [0, 0, 1, 1], [], []>} : vector<1x32xf32>, vector<32x256xf32>, vector<1x256xf32> -> vector<1x256xf32>
    %c0_76 = arith.constant 0 : index
    %c0_77 = arith.constant 0 : index
    %101 = vector.load %arg10[%c0_76, %c0_77] : memref<32x256xf32, #tpu.memory_space<vmem>>, vector<32x256xf32>
    %cst_78 = arith.constant dense<0.000000e+00> : vector<1x256xf32>
    %102 = tpu.matmul %98, %101, %cst_78 {dimension_numbers = #tpu.dot_dimension_numbers<[1], [0], [0], [1], [0, 0, 1, 1], [], []>} : vector<1x32xf32>, vector<32x256xf32>, vector<1x256xf32> -> vector<1x256xf32>
    %103 = vector.broadcast %100 : vector<1x256xf32> to vector<16x256xf32>
    %104 = arith.mulf %75, %103 : vector<16x256xf32>
    %105 = vector.broadcast %102 : vector<1x256xf32> to vector<16x256xf32>
    %106 = arith.addf %104, %105 : vector<16x256xf32>
    %cst_79 = arith.constant 0.000000e+00 : f32
    %107 = vector.broadcast %cst_79 : f32 to vector<16x256xf32>
    %108 = arith.cmpf ogt, %106, %107 : vector<16x256xf32>
    %cst_80 = arith.constant 2.000000e-01 : f32
    %109 = vector.broadcast %cst_80 : f32 to vector<16x256xf32>
    %110 = arith.mulf %109, %106 : vector<16x256xf32>
    %111 = arith.select %108, %106, %110 : vector<16x256xi1>, vector<16x256xf32>
    %112 = arith.truncf %111 : vector<16x256xf32> to vector<16x256xbf16>
    %c0_81 = arith.constant 0 : index
    %c0_82 = arith.constant 0 : index
    %c0_83 = arith.constant 0 : index
    %113 = vector.load %arg13[%c0_81, %c0_82, %c0_83] : memref<4x8x16xbf16, #tpu.memory_space<vmem>>, vector<1x8x16xbf16>
    %114 = vector.shape_cast %113 : vector<1x8x16xbf16> to vector<8x16xbf16>
    %cst_84 = arith.constant dense<0.000000e+00> : vector<8x256xf32>
    %115 = tpu.matmul %114, %112, %cst_84 {dimension_numbers = #tpu.dot_dimension_numbers<[1], [0], [0], [1], [0, 0, 1, 1], [], []>} : vector<8x16xbf16>, vector<16x256xbf16>, vector<8x256xf32> -> vector<8x256xf32>
    %116 = arith.truncf %115 : vector<8x256xf32> to vector<8x256xbf16>
    %c1_85 = arith.constant 1 : index
    %c0_86 = arith.constant 0 : index
    %c0_87 = arith.constant 0 : index
    %117 = vector.load %arg13[%c1_85, %c0_86, %c0_87] : memref<4x8x16xbf16, #tpu.memory_space<vmem>>, vector<1x8x16xbf16>
    %118 = vector.shape_cast %117 : vector<1x8x16xbf16> to vector<8x16xbf16>
    %cst_88 = arith.constant dense<0.000000e+00> : vector<8x256xf32>
    %119 = tpu.matmul %118, %112, %cst_88 {dimension_numbers = #tpu.dot_dimension_numbers<[1], [0], [0], [1], [0, 0, 1, 1], [], []>} : vector<8x16xbf16>, vector<16x256xbf16>, vector<8x256xf32> -> vector<8x256xf32>
    %120 = arith.truncf %119 : vector<8x256xf32> to vector<8x256xbf16>
    %c2_89 = arith.constant 2 : index
    %c0_90 = arith.constant 0 : index
    %c0_91 = arith.constant 0 : index
    %121 = vector.load %arg13[%c2_89, %c0_90, %c0_91] : memref<4x8x16xbf16, #tpu.memory_space<vmem>>, vector<1x8x16xbf16>
    %122 = vector.shape_cast %121 : vector<1x8x16xbf16> to vector<8x16xbf16>
    %cst_92 = arith.constant dense<0.000000e+00> : vector<8x256xf32>
    %123 = tpu.matmul %122, %112, %cst_92 {dimension_numbers = #tpu.dot_dimension_numbers<[1], [0], [0], [1], [0, 0, 1, 1], [], []>} : vector<8x16xbf16>, vector<16x256xbf16>, vector<8x256xf32> -> vector<8x256xf32>
    %124 = arith.truncf %123 : vector<8x256xf32> to vector<8x256xbf16>
    %c3_93 = arith.constant 3 : index
    %c0_94 = arith.constant 0 : index
    %c0_95 = arith.constant 0 : index
    %125 = vector.load %arg13[%c3_93, %c0_94, %c0_95] : memref<4x8x16xbf16, #tpu.memory_space<vmem>>, vector<1x8x16xbf16>
    %126 = vector.shape_cast %125 : vector<1x8x16xbf16> to vector<8x16xbf16>
    %cst_96 = arith.constant dense<0.000000e+00> : vector<8x256xf32>
    %127 = tpu.matmul %126, %112, %cst_96 {dimension_numbers = #tpu.dot_dimension_numbers<[1], [0], [0], [1], [0, 0, 1, 1], [], []>} : vector<8x16xbf16>, vector<16x256xbf16>, vector<8x256xf32> -> vector<8x256xf32>
    %128 = arith.truncf %127 : vector<8x256xf32> to vector<8x256xbf16>
    %129 = tpu.concatenate %116, %120, %124, %128 in 1 : vector<8x256xbf16>, vector<8x256xbf16>, vector<8x256xbf16>, vector<8x256xbf16> -> vector<8x1024xbf16>
    %c0_97 = arith.constant 0 : index
    %c0_98 = arith.constant 0 : index
    %130 = vector.load %arg14[%c0_97, %c0_98] : memref<1024x128xbf16, #tpu.memory_space<vmem>>, vector<1024x128xbf16>
    %cst_99 = arith.constant dense<0.000000e+00> : vector<8x128xf32>
    %131 = tpu.matmul %129, %130, %cst_99 {dimension_numbers = #tpu.dot_dimension_numbers<[1], [0], [0], [1], [0, 0, 1, 1], [], []>} : vector<8x1024xbf16>, vector<1024x128xbf16>, vector<8x128xf32> -> vector<8x128xf32>
    %c0_100 = arith.constant 0 : index
    %c0_101 = arith.constant 0 : index
    %132 = vector.load %arg15[%c0_100, %c0_101] : memref<1x128xf32, #tpu.memory_space<vmem>>, vector<1x128xf32>
    %133 = vector.broadcast %132 : vector<1x128xf32> to vector<8x128xf32>
    %134 = arith.addf %131, %133 : vector<8x128xf32>
    %c0_102 = arith.constant 0 : index
    %c0_103 = arith.constant 0 : index
    %135 = vector.load %arg16[%c0_102, %c0_103] : memref<8x128xf32, #tpu.memory_space<vmem>>, vector<8x128xf32>
    tpu.vector_store %arg16[%c0_102, %c0_103], %134 {strides = array<i32>} : memref<8x128xf32, #tpu.memory_space<vmem>>, vector<8x128xf32>,
    return
  }
}

</mosaic_0001>

<llo_original>
// kernel: encoder_forward.1
$region0: #{encoder_forward.1}
  #allocation0 [shape = 'u32[]', space=smem, size = 0x4, offset = 0x4, fixed_abs, tag = 'smem constant byte address 0x4 - core index']
  #allocation1 [shape = 'u32[72,128]{1,0:T(1,128)}', space=vmem, size = 0x9000, scoped, tag = 'internal scratch']
  %s0 = inlined_call_operand.vmem [shape: bf16[64,128], index: 0, kind: input, shape index: {}]
  %s1 = inlined_call_operand.vmem [shape: bf16[4,32,64], index: 1, kind: input, shape index: {}]
  %s2 = inlined_call_operand.vmem [shape: bf16[512,256], index: 2, kind: input, shape index: {}]
  %s3 = inlined_call_operand.vmem [shape: f32[256,16], index: 3, kind: input, shape index: {}]
  %s4 = inlined_call_operand.vmem [shape: f32[16,256], index: 4, kind: input, shape index: {}]
  %s5 = inlined_call_operand.vmem [shape: f32[1,16], index: 5, kind: input, shape index: {}]
  %s6 = inlined_call_operand.vmem [shape: f32[1,16], index: 6, kind: input, shape index: {}]
  %s7 = inlined_call_operand.vmem [shape: bf16[4,16,32], index: 7, kind: input, shape index: {}]
  %s8 = inlined_call_operand.vmem [shape: bf16[1024,256], index: 8, kind: input, shape index: {}]
  %s9 = inlined_call_operand.vmem [shape: f32[256,32], index: 9, kind: input, shape index: {}]
  %s10 = inlined_call_operand.vmem [shape: f32[32,256], index: 10, kind: input, shape index: {}]
  %s11 = inlined_call_operand.vmem [shape: f32[1,32], index: 11, kind: input, shape index: {}]
  %s12 = inlined_call_operand.vmem [shape: f32[1,32], index: 12, kind: input, shape index: {}]
  %s13 = inlined_call_operand.vmem [shape: bf16[4,8,16], index: 13, kind: input, shape index: {}]
  %s14 = inlined_call_operand.vmem [shape: bf16[1024,128], index: 14, kind: input, shape index: {}]
  %s15 = inlined_call_operand.vmem [shape: f32[1,128], index: 15, kind: input, shape index: {}]
  %s16 = inlined_call_operand.vmem [shape: f32[8,128], index: 16, kind: output, shape index: {}]
  %s17 = sld [smem:[#allocation0]]
  $region74: #{encoder_forward.1} parent=0
    _
  %s19 = ssub.s32 1, %s17
  %s20 = scalar_select 0, %s19, %s17
  // Predicated region
  $region2: #{encoder_forward.1} parent=0 // pred_check
    _
  $region3: #{encoder_forward.1} parent=0 // pred_check_branch
    %22 = sbr.rel (0) target = $region5
  $region4: #{encoder_forward.1} parent=0 // pred_region
    _
  $region5: #{encoder_forward.1} parent=0 // pred_fallthru
    _
  // Predicated region
  $region6: #{encoder_forward.1} parent=0 // pred_check
    _
  $region7: #{encoder_forward.1} parent=0 // pred_check_branch
    %24 = sbr.rel (0) target = $region9
  $region8: #{encoder_forward.1} parent=0 // pred_region
    _
  $region9: #{encoder_forward.1} parent=0 // pred_fallthru
    _
  // Predicated region
  $region10: #{encoder_forward.1} parent=0 // pred_check
    _
  $region11: #{encoder_forward.1} parent=0 // pred_check_branch
    %26 = sbr.rel (0) target = $region13
  $region12: #{encoder_forward.1} parent=0 // pred_region
    _
  $region13: #{encoder_forward.1} parent=0 // pred_fallthru
    _
  // Predicated region
  $region14: #{encoder_forward.1} parent=0 // pred_check
    _
  $region15: #{encoder_forward.1} parent=0 // pred_check_branch
    %28 = sbr.rel (0) target = $region17
  $region16: #{encoder_forward.1} parent=0 // pred_region
    _
  $region17: #{encoder_forward.1} parent=0 // pred_fallthru
    _
  // Predicated region
  $region18: #{encoder_forward.1} parent=0 // pred_check
    _
  $region19: #{encoder_forward.1} parent=0 // pred_check_branch
    %30 = sbr.rel (0) target = $region21
  $region20: #{encoder_forward.1} parent=0 // pred_region
    _
  $region21: #{encoder_forward.1} parent=0 // pred_fallthru
    _
  // Predicated region
  $region22: #{encoder_forward.1} parent=0 // pred_check
    _
  $region23: #{encoder_forward.1} parent=0 // pred_check_branch
    %32 = sbr.rel (0) target = $region25
  $region24: #{encoder_forward.1} parent=0 // pred_region
    _
  $region25: #{encoder_forward.1} parent=0 // pred_fallthru
    _
  // Predicated region
  $region26: #{encoder_forward.1} parent=0 // pred_check
    _
  $region27: #{encoder_forward.1} parent=0 // pred_check_branch
    %34 = sbr.rel (0) target = $region29
  $region28: #{encoder_forward.1} parent=0 // pred_region
    _
  $region29: #{encoder_forward.1} parent=0 // pred_fallthru
    _
  // Predicated region
  $region30: #{encoder_forward.1} parent=0 // pred_check
    _
  $region31: #{encoder_forward.1} parent=0 // pred_check_branch
    %36 = sbr.rel (0) target = $region33
  $region32: #{encoder_forward.1} parent=0 // pred_region
    _
  $region33: #{encoder_forward.1} parent=0 // pred_fallthru
    _
  // Predicated region
  $region34: #{encoder_forward.1} parent=0 // pred_check
    _
  $region35: #{encoder_forward.1} parent=0 // pred_check_branch
    %38 = sbr.rel (0) target = $region37
  $region36: #{encoder_forward.1} parent=0 // pred_region
    _
  $region37: #{encoder_forward.1} parent=0 // pred_fallthru
    _
  // Predicated region
  $region38: #{encoder_forward.1} parent=0 // pred_check
    _
  $region39: #{encoder_forward.1} parent=0 // pred_check_branch
    %40 = sbr.rel (0) target = $region41
  $region40: #{encoder_forward.1} parent=0 // pred_region
    _
  $region41: #{encoder_forward.1} parent=0 // pred_fallthru
    _
  // Predicated region
  $region42: #{encoder_forward.1} parent=0 // pred_check
    _
  $region43: #{encoder_forward.1} parent=0 // pred_check_branch
    %42 = sbr.rel (0) target = $region45
  $region44: #{encoder_forward.1} parent=0 // pred_region
    _
  $region45: #{encoder_forward.1} parent=0 // pred_fallthru
    _
  // Predicated region
  $region46: #{encoder_forward.1} parent=0 // pred_check
    _
  $region47: #{encoder_forward.1} parent=0 // pred_check_branch
    %44 = sbr.rel (0) target = $region49
  $region48: #{encoder_forward.1} parent=0 // pred_region
    _
  $region49: #{encoder_forward.1} parent=0 // pred_fallthru
    _
  // Predicated region
  $region50: #{encoder_forward.1} parent=0 // pred_check
    _
  $region51: #{encoder_forward.1} parent=0 // pred_check_branch
    %46 = sbr.rel (0) target = $region53
  $region52: #{encoder_forward.1} parent=0 // pred_region
    _
  $region53: #{encoder_forward.1} parent=0 // pred_fallthru
    _
  // Predicated region
  $region54: #{encoder_forward.1} parent=0 // pred_check
    _
  $region55: #{encoder_forward.1} parent=0 // pred_check_branch
    %48 = sbr.rel (0) target = $region57
  $region56: #{encoder_forward.1} parent=0 // pred_region
    _
  $region57: #{encoder_forward.1} parent=0 // pred_fallthru
    _
  // Predicated region
  $region58: #{encoder_forward.1} parent=0 // pred_check
    _
  $region59: #{encoder_forward.1} parent=0 // pred_check_branch
    %50 = sbr.rel (0) target = $region61
  $region60: #{encoder_forward.1} parent=0 // pred_region
    _
  $region61: #{encoder_forward.1} parent=0 // pred_fallthru
    _
  // Predicated region
  $region62: #{encoder_forward.1} parent=0 // pred_check
    _
  $region63: #{encoder_forward.1} parent=0 // pred_check_branch
    %52 = sbr.rel (0) target = $region65
  $region64: #{encoder_forward.1} parent=0 // pred_region
    _
  $region65: #{encoder_forward.1} parent=0 // pred_fallthru
    _
  %v54 = vld [vmem:[%s0] sm:$0xf]
  %v55 = vld [vmem:[%s0 + $0x4] sm:$0xf]
  %v56 = vld [vmem:[%s0 + $0x8] sm:$0xf]
  %v57 = vld [vmem:[%s0 + $0xc] sm:$0xf]
  %v58 = vld [vmem:[%s0 + $0x10] sm:$0xf]
  %v59 = vld [vmem:[%s0 + $0x14] sm:$0xf]
  %v60 = vld [vmem:[%s0 + $0x18] sm:$0xf]
  %v61 = vld [vmem:[%s0 + $0x1c] sm:$0xf]
  %v62 = vld [vmem:[%s1] sm:$0xf]
  %v63 = vld [vmem:[%s1 + $0x4] sm:$0xf]
  %v64 = vld [vmem:[%s1 + $0x8] sm:$0xf]
  %v65 = vld [vmem:[%s1 + $0xc] sm:$0xf]
  %v70 = vunpack.c.l.b16 %v62
  %v71 = vunpack.c.l.b16 %v63
  %v72 = vunpack.c.l.b16 %v64
  %v73 = vunpack.c.l.b16 %v65
  %v74 = vpack.c.b16 %v71, %v70
  %v75 = vpack.c.b16 %v73, %v72
  %v84 = vunpack.c.l.b16 %v54
  %v85 = vunpack.c.l.b16 %v55
  %v86 = vunpack.c.l.b16 %v56
  %v87 = vunpack.c.l.b16 %v57
  %v88 = vunpack.c.l.b16 %v58
  %v89 = vunpack.c.l.b16 %v59
  %v90 = vunpack.c.l.b16 %v60
  %v91 = vunpack.c.l.b16 %v61
  %v92 = vpack.c.b16 %v85, %v84
  %v93 = vpack.c.b16 %v87, %v86
  %v94 = vpack.c.b16 %v89, %v88
  %v95 = vpack.c.b16 %v91, %v90
  %vm100 = vcmask 523264
  %v102 = vsel %vm100, %v74, 0
  %v105 = vsel %vm100, %v75, 0
  %107 = vmatpush.bf16.msra.mxu0 0
  %108 = vmatpush.bf16.msra.mxu0 0
  %109 = vmatpush.bf16.msra.mxu0 0
  %110 = vmatpush.bf16.msra.mxu0 0
  %111 = vmatpush.bf16.msra.mxu0 %v95
  %112 = vmatpush.bf16.msra.mxu0 %v94
  %113 = vmatpush.bf16.msra.mxu0 %v93
  %114 = vmatpush.bf16.msra.mxu0 %v92
  %115 = vmatmul.bf16.gmra.mxu0 %v102
  %v116 = vpop.f32.mrf.mxu0
  %v117 = vadd.f32 0.0, %v116
  %v118 = vpop.f32.mrf.mxu0
  %v119 = vadd.f32 0.0, %v118
  %120 = vmatmul.bf16.gmra.mxu0 %v105
  %v121 = vpop.f32.mrf.mxu0
  %v122 = vadd.f32 0.0, %v121
  %v123 = vpop.f32.mrf.mxu0
  %v124 = vadd.f32 0.0, %v123
  %125 = vdwg.mxu0
  %v126 = vpack.c.bf16 %v117, %v117
  %v127 = vpack.c.bf16 %v119, %v119
  %v128 = vpack.c.bf16 %v122, %v122
  %v129 = vpack.c.bf16 %v124, %v124
  %s130 = scalar_lea.vmem %s1, 16
  %v131 = vld [vmem:[%s130] sm:$0xf]
  %v132 = vld [vmem:[%s130 + $0x4] sm:$0xf]
  %v133 = vld [vmem:[%s130 + $0x8] sm:$0xf]
  %v134 = vld [vmem:[%s130 + $0xc] sm:$0xf]
  %v139 = vunpack.c.l.b16 %v131
  %v140 = vunpack.c.l.b16 %v132
  %v141 = vunpack.c.l.b16 %v133
  %v142 = vunpack.c.l.b16 %v134
  %v143 = vpack.c.b16 %v140, %v139
  %v144 = vpack.c.b16 %v142, %v141
  %v146 = vsel %vm100, %v143, 0
  %v149 = vsel %vm100, %v144, 0
  %151 = vmatpush.bf16.msra.mxu0 0
  %152 = vmatpush.bf16.msra.mxu0 0
  %153 = vmatpush.bf16.msra.mxu0 0
  %154 = vmatpush.bf16.msra.mxu0 0
  %155 = vmatpush.bf16.msra.mxu0 %v95
  %156 = vmatpush.bf16.msra.mxu0 %v94
  %157 = vmatpush.bf16.msra.mxu0 %v93
  %158 = vmatpush.bf16.msra.mxu0 %v92
  %159 = vmatmul.bf16.gmra.mxu0 %v146
  %v160 = vpop.f32.mrf.mxu0
  %v161 = vadd.f32 0.0, %v160
  %v162 = vpop.f32.mrf.mxu0
  %v163 = vadd.f32 0.0, %v162
  %164 = vmatmul.bf16.gmra.mxu0 %v149
  %v165 = vpop.f32.mrf.mxu0
  %v166 = vadd.f32 0.0, %v165
  %v167 = vpop.f32.mrf.mxu0
  %v168 = vadd.f32 0.0, %v167
  %169 = vdwg.mxu0
  %v170 = vpack.c.bf16 %v161, %v161
  %v171 = vpack.c.bf16 %v163, %v163
  %v172 = vpack.c.bf16 %v166, %v166
  %v173 = vpack.c.bf16 %v168, %v168
  %s174 = scalar_lea.vmem %s1, 32
  %v175 = vld [vmem:[%s174] sm:$0xf]
  %v176 = vld [vmem:[%s174 + $0x4] sm:$0xf]
  %v177 = vld [vmem:[%s174 + $0x8] sm:$0xf]
  %v178 = vld [vmem:[%s174 + $0xc] sm:$0xf]
  %v183 = vunpack.c.l.b16 %v175
  %v184 = vunpack.c.l.b16 %v176
  %v185 = vunpack.c.l.b16 %v177
  %v186 = vunpack.c.l.b16 %v178
  %v187 = vpack.c.b16 %v184, %v183
  %v188 = vpack.c.b16 %v186, %v185
  %v190 = vsel %vm100, %v187, 0
  %v193 = vsel %vm100, %v188, 0
  %195 = vmatpush.bf16.msra.mxu0 0
  %196 = vmatpush.bf16.msra.mxu0 0
  %197 = vmatpush.bf16.msra.mxu0 0
  %198 = vmatpush.bf16.msra.mxu0 0
  %199 = vmatpush.bf16.msra.mxu0 %v95
  %200 = vmatpush.bf16.msra.mxu0 %v94
  %201 = vmatpush.bf16.msra.mxu0 %v93
  %202 = vmatpush.bf16.msra.mxu0 %v92
  %203 = vmatmul.bf16.gmra.mxu0 %v190
  %v204 = vpop.f32.mrf.mxu0
  %v205 = vadd.f32 0.0, %v204
  %v206 = vpop.f32.mrf.mxu0
  %v207 = vadd.f32 0.0, %v206
  %208 = vmatmul.bf16.gmra.mxu0 %v193
  %v209 = vpop.f32.mrf.mxu0
  %v210 = vadd.f32 0.0, %v209
  %v211 = vpop.f32.mrf.mxu0
  %v212 = vadd.f32 0.0, %v211
  %213 = vdwg.mxu0
  %v214 = vpack.c.bf16 %v205, %v205
  %v215 = vpack.c.bf16 %v207, %v207
  %v216 = vpack.c.bf16 %v210, %v210
  %v217 = vpack.c.bf16 %v212, %v212
  %s218 = scalar_lea.vmem %s1, 48
  %v219 = vld [vmem:[%s218] sm:$0xf]
  %v220 = vld [vmem:[%s218 + $0x4] sm:$0xf]
  %v221 = vld [vmem:[%s218 + $0x8] sm:$0xf]
  %v222 = vld [vmem:[%s218 + $0xc] sm:$0xf]
  %v227 = vunpack.c.l.b16 %v219
  %v228 = vunpack.c.l.b16 %v220
  %v229 = vunpack.c.l.b16 %v221
  %v230 = vunpack.c.l.b16 %v222
  %v231 = vpack.c.b16 %v228, %v227
  %v232 = vpack.c.b16 %v230, %v229
  %v234 = vsel %vm100, %v231, 0
  %v237 = vsel %vm100, %v232, 0
  %239 = vmatpush.bf16.msra.mxu0 0
  %240 = vmatpush.bf16.msra.mxu0 0
  %241 = vmatpush.bf16.msra.mxu0 0
  %242 = vmatpush.bf16.msra.mxu0 0
  %243 = vmatpush.bf16.msra.mxu0 %v95
  %244 = vmatpush.bf16.msra.mxu0 %v94
  %245 = vmatpush.bf16.msra.mxu0 %v93
  %246 = vmatpush.bf16.msra.mxu0 %v92
  %247 = vmatmul.bf16.gmra.mxu0 %v234
  %v248 = vpop.f32.mrf.mxu0
  %v249 = vadd.f32 0.0, %v248
  %v250 = vpop.f32.mrf.mxu0
  %v251 = vadd.f32 0.0, %v250
  %252 = vmatmul.bf16.gmra.mxu0 %v237
  %v253 = vpop.f32.mrf.mxu0
  %v254 = vadd.f32 0.0, %v253
  %v255 = vpop.f32.mrf.mxu0
  %v256 = vadd.f32 0.0, %v255
  %257 = vdwg.mxu0
  %v258 = vpack.c.bf16 %v249, %v249
  %v259 = vpack.c.bf16 %v251, %v251
  %v260 = vpack.c.bf16 %v254, %v254
  %v261 = vpack.c.bf16 %v256, %v256
  %v266 = vunpack.c.l.b16 %v126
  %v267 = vunpack.c.l.b16 %v127
  %v268 = vunpack.c.l.b16 %v128
  %v269 = vunpack.c.l.b16 %v129
  %v270 = vpack.c.b16 %v267, %v266
  %v271 = vpack.c.b16 %v269, %v268
  %v278 = vunpack.c.l.b16 %v170
  %v279 = vunpack.c.l.b16 %v171
  %v280 = vunpack.c.l.b16 %v172
  %v281 = vunpack.c.l.b16 %v173
  %v282 = vpack.c.b16 %v279, %v278
  %v283 = vpack.c.b16 %v281, %v280
  %v290 = vunpack.c.l.b16 %v214
  %v291 = vunpack.c.l.b16 %v215
  %v292 = vunpack.c.l.b16 %v216
  %v293 = vunpack.c.l.b16 %v217
  %v294 = vpack.c.b16 %v291, %v290
  %v295 = vpack.c.b16 %v293, %v292
  %v302 = vunpack.c.l.b16 %v258
  %v303 = vunpack.c.l.b16 %v259
  %v304 = vunpack.c.l.b16 %v260
  %v305 = vunpack.c.l.b16 %v261
  %v306 = vpack.c.b16 %v303, %v302
  %v307 = vpack.c.b16 %v305, %v304
  %v310 = vld [vmem:[%s2] sm:$0xff]
  %v311 = vld [vmem:[%s2 + $0x8] sm:$0xff]
  %v312 = vld [vmem:[%s2 + $0x10] sm:$0xff]
  %v313 = vld [vmem:[%s2 + $0x18] sm:$0xff]
  %v314 = vld [vmem:[%s2 + $0x20] sm:$0xff]
  %v315 = vld [vmem:[%s2 + $0x28] sm:$0xff]
  %v316 = vld [vmem:[%s2 + $0x30] sm:$0xff]
  %v317 = vld [vmem:[%s2 + $0x38] sm:$0xff]
  %v318 = vld [vmem:[%s2 + $0x40] sm:$0xff]
  %v319 = vld [vmem:[%s2 + $0x48] sm:$0xff]
  %v320 = vld [vmem:[%s2 + $0x50] sm:$0xff]
  %v321 = vld [vmem:[%s2 + $0x58] sm:$0xff]
  %v322 = vld [vmem:[%s2 + $0x60] sm:$0xff]
  %v323 = vld [vmem:[%s2 + $0x68] sm:$0xff]
  %v324 = vld [vmem:[%s2 + $0x70] sm:$0xff]
  %v325 = vld [vmem:[%s2 + $0x78] sm:$0xff]
  %v326 = vld [vmem:[%s2 + $0x80] sm:$0xff]
  %v327 = vld [vmem:[%s2 + $0x88] sm:$0xff]
  %v328 = vld [vmem:[%s2 + $0x90] sm:$0xff]
  %v329 = vld [vmem:[%s2 + $0x98] sm:$0xff]
  %v330 = vld [vmem:[%s2 + $0xa0] sm:$0xff]
  %v331 = vld [vmem:[%s2 + $0xa8] sm:$0xff]
  %v332 = vld [vmem:[%s2 + $0xb0] sm:$0xff]
  %v333 = vld [vmem:[%s2 + $0xb8] sm:$0xff]
  %v334 = vld [vmem:[%s2 + $0xc0] sm:$0xff]
  %v335 = vld [vmem:[%s2 + $0xc8] sm:$0xff]
  %v336 = vld [vmem:[%s2 + $0xd0] sm:$0xff]
  %v337 = vld [vmem:[%s2 + $0xd8] sm:$0xff]
  %v338 = vld [vmem:[%s2 + $0xe0] sm:$0xff]
  %v339 = vld [vmem:[%s2 + $0xe8] sm:$0xff]
  %v340 = vld [vmem:[%s2 + $0xf0] sm:$0xff]
  %v341 = vld [vmem:[%s2 + $0xf8] sm:$0xff]
  %v342 = vld [vmem:[%s2 + $0x100] sm:$0xff]
  %v343 = vld [vmem:[%s2 + $0x108] sm:$0xff]
  %v344 = vld [vmem:[%s2 + $0x110] sm:$0xff]
  %v345 = vld [vmem:[%s2 + $0x118] sm:$0xff]
  %v346 = vld [vmem:[%s2 + $0x120] sm:$0xff]
  %v347 = vld [vmem:[%s2 + $0x128] sm:$0xff]
  %v348 = vld [vmem:[%s2 + $0x130] sm:$0xff]
  %v349 = vld [vmem:[%s2 + $0x138] sm:$0xff]
  %v350 = vld [vmem:[%s2 + $0x140] sm:$0xff]
  %v351 = vld [vmem:[%s2 + $0x148] sm:$0xff]
  %v352 = vld [vmem:[%s2 + $0x150] sm:$0xff]
  %v353 = vld [vmem:[%s2 + $0x158] sm:$0xff]
  %v354 = vld [vmem:[%s2 + $0x160] sm:$0xff]
  %v355 = vld [vmem:[%s2 + $0x168] sm:$0xff]
  %v356 = vld [vmem:[%s2 + $0x170] sm:$0xff]
  %v357 = vld [vmem:[%s2 + $0x178] sm:$0xff]
  %v358 = vld [vmem:[%s2 + $0x180] sm:$0xff]
  %v359 = vld [vmem:[%s2 + $0x188] sm:$0xff]
  %v360 = vld [vmem:[%s2 + $0x190] sm:$0xff]
  %v361 = vld [vmem:[%s2 + $0x198] sm:$0xff]
  %v362 = vld [vmem:[%s2 + $0x1a0] sm:$0xff]
  %v363 = vld [vmem:[%s2 + $0x1a8] sm:$0xff]
  %v364 = vld [vmem:[%s2 + $0x1b0] sm:$0xff]
  %v365 = vld [vmem:[%s2 + $0x1b8] sm:$0xff]
  %v366 = vld [vmem:[%s2 + $0x1c0] sm:$0xff]
  %v367 = vld [vmem:[%s2 + $0x1c8] sm:$0xff]
  %v368 = vld [vmem:[%s2 + $0x1d0] sm:$0xff]
  %v369 = vld [vmem:[%s2 + $0x1d8] sm:$0xff]
  %v370 = vld [vmem:[%s2 + $0x1e0] sm:$0xff]
  %v371 = vld [vmem:[%s2 + $0x1e8] sm:$0xff]
  %v372 = vld [vmem:[%s2 + $0x1f0] sm:$0xff]
  %v373 = vld [vmem:[%s2 + $0x1f8] sm:$0xff]
  %v438 = vunpack.c.l.b16 %v310
  %v439 = vunpack.c.h.b16 %v310
  %v440 = vunpack.c.l.b16 %v311
  %v441 = vunpack.c.h.b16 %v311
  %v442 = vunpack.c.l.b16 %v312
  %v443 = vunpack.c.h.b16 %v312
  %v444 = vunpack.c.l.b16 %v313
  %v445 = vunpack.c.h.b16 %v313
  %v446 = vunpack.c.l.b16 %v314
  %v447 = vunpack.c.h.b16 %v314
  %v448 = vunpack.c.l.b16 %v315
  %v449 = vunpack.c.h.b16 %v315
  %v450 = vunpack.c.l.b16 %v316
  %v451 = vunpack.c.h.b16 %v316
  %v452 = vunpack.c.l.b16 %v317
  %v453 = vunpack.c.h.b16 %v317
  %v454 = vunpack.c.l.b16 %v318
  %v455 = vunpack.c.h.b16 %v318
  %v456 = vunpack.c.l.b16 %v319
  %v457 = vunpack.c.h.b16 %v319
  %v458 = vunpack.c.l.b16 %v320
  %v459 = vunpack.c.h.b16 %v320
  %v460 = vunpack.c.l.b16 %v321
  %v461 = vunpack.c.h.b16 %v321
  %v462 = vunpack.c.l.b16 %v322
  %v463 = vunpack.c.h.b16 %v322
  %v464 = vunpack.c.l.b16 %v323
  %v465 = vunpack.c.h.b16 %v323
  %v466 = vunpack.c.l.b16 %v324
  %v467 = vunpack.c.h.b16 %v324
  %v468 = vunpack.c.l.b16 %v325
  %v469 = vunpack.c.h.b16 %v325
  %v470 = vunpack.c.l.b16 %v326
  %v471 = vunpack.c.h.b16 %v326
  %v472 = vunpack.c.l.b16 %v327
  %v473 = vunpack.c.h.b16 %v327
  %v474 = vunpack.c.l.b16 %v328
  %v475 = vunpack.c.h.b16 %v328
  %v476 = vunpack.c.l.b16 %v329
  %v477 = vunpack.c.h.b16 %v329
  %v478 = vunpack.c.l.b16 %v330
  %v479 = vunpack.c.h.b16 %v330
  %v480 = vunpack.c.l.b16 %v331
  %v481 = vunpack.c.h.b16 %v331
  %v482 = vunpack.c.l.b16 %v332
  %v483 = vunpack.c.h.b16 %v332
  %v484 = vunpack.c.l.b16 %v333
  %v485 = vunpack.c.h.b16 %v333
  %v486 = vunpack.c.l.b16 %v334
  %v487 = vunpack.c.h.b16 %v334
  %v488 = vunpack.c.l.b16 %v335
  %v489 = vunpack.c.h.b16 %v335
  %v490 = vunpack.c.l.b16 %v336
  %v491 = vunpack.c.h.b16 %v336
  %v492 = vunpack.c.l.b16 %v337
  %v493 = vunpack.c.h.b16 %v337
  %v494 = vunpack.c.l.b16 %v338
  %v495 = vunpack.c.h.b16 %v338
  %v496 = vunpack.c.l.b16 %v339
  %v497 = vunpack.c.h.b16 %v339
  %v498 = vunpack.c.l.b16 %v340
  %v499 = vunpack.c.h.b16 %v340
  %v500 = vunpack.c.l.b16 %v341
  %v501 = vunpack.c.h.b16 %v341
  %v502 = vunpack.c.l.b16 %v342
  %v503 = vunpack.c.h.b16 %v342
  %v504 = vunpack.c.l.b16 %v343
  %v505 = vunpack.c.h.b16 %v343
  %v506 = vunpack.c.l.b16 %v344
  %v507 = vunpack.c.h.b16 %v344
  %v508 = vunpack.c.l.b16 %v345
  %v509 = vunpack.c.h.b16 %v345
  %v510 = vunpack.c.l.b16 %v346
  %v511 = vunpack.c.h.b16 %v346
  %v512 = vunpack.c.l.b16 %v347
  %v513 = vunpack.c.h.b16 %v347
  %v514 = vunpack.c.l.b16 %v348
  %v515 = vunpack.c.h.b16 %v348
  %v516 = vunpack.c.l.b16 %v349
  %v517 = vunpack.c.h.b16 %v349
  %v518 = vunpack.c.l.b16 %v350
  %v519 = vunpack.c.h.b16 %v350
  %v520 = vunpack.c.l.b16 %v351
  %v521 = vunpack.c.h.b16 %v351
  %v522 = vunpack.c.l.b16 %v352
  %v523 = vunpack.c.h.b16 %v352
  %v524 = vunpack.c.l.b16 %v353
  %v525 = vunpack.c.h.b16 %v353
  %v526 = vunpack.c.l.b16 %v354
  %v527 = vunpack.c.h.b16 %v354
  %v528 = vunpack.c.l.b16 %v355
  %v529 = vunpack.c.h.b16 %v355
  %v530 = vunpack.c.l.b16 %v356
  %v531 = vunpack.c.h.b16 %v356
  %v532 = vunpack.c.l.b16 %v357
  %v533 = vunpack.c.h.b16 %v357
  %v534 = vunpack.c.l.b16 %v358
  %v535 = vunpack.c.h.b16 %v358
  %v536 = vunpack.c.l.b16 %v359
  %v537 = vunpack.c.h.b16 %v359
  %v538 = vunpack.c.l.b16 %v360
  %v539 = vunpack.c.h.b16 %v360
  %v540 = vunpack.c.l.b16 %v361
  %v541 = vunpack.c.h.b16 %v361
  %v542 = vunpack.c.l.b16 %v362
  %v543 = vunpack.c.h.b16 %v362
  %v544 = vunpack.c.l.b16 %v363
  %v545 = vunpack.c.h.b16 %v363
  %v546 = vunpack.c.l.b16 %v364
  %v547 = vunpack.c.h.b16 %v364
  %v548 = vunpack.c.l.b16 %v365
  %v549 = vunpack.c.h.b16 %v365
  %v550 = vunpack.c.l.b16 %v366
  %v551 = vunpack.c.h.b16 %v366
  %v552 = vunpack.c.l.b16 %v367
  %v553 = vunpack.c.h.b16 %v367
  %v554 = vunpack.c.l.b16 %v368
  %v555 = vunpack.c.h.b16 %v368
  %v556 = vunpack.c.l.b16 %v369
  %v557 = vunpack.c.h.b16 %v369
  %v558 = vunpack.c.l.b16 %v370
  %v559 = vunpack.c.h.b16 %v370
  %v560 = vunpack.c.l.b16 %v371
  %v561 = vunpack.c.h.b16 %v371
  %v562 = vunpack.c.l.b16 %v372
  %v563 = vunpack.c.h.b16 %v372
  %v564 = vunpack.c.l.b16 %v373
  %v565 = vunpack.c.h.b16 %v373
  %v566 = vpack.c.b16 %v440, %v438
  %v567 = vpack.c.b16 %v441, %v439
  %v568 = vpack.c.b16 %v444, %v442
  %v569 = vpack.c.b16 %v445, %v443
  %v570 = vpack.c.b16 %v448, %v446
  %v571 = vpack.c.b16 %v449, %v447
  %v572 = vpack.c.b16 %v452, %v450
  %v573 = vpack.c.b16 %v453, %v451
  %v574 = vpack.c.b16 %v456, %v454
  %v575 = vpack.c.b16 %v457, %v455
  %v576 = vpack.c.b16 %v460, %v458
  %v577 = vpack.c.b16 %v461, %v459
  %v578 = vpack.c.b16 %v464, %v462
  %v579 = vpack.c.b16 %v465, %v463
  %v580 = vpack.c.b16 %v468, %v466
  %v581 = vpack.c.b16 %v469, %v467
  %v582 = vpack.c.b16 %v472, %v470
  %v583 = vpack.c.b16 %v473, %v471
  %v584 = vpack.c.b16 %v476, %v474
  %v585 = vpack.c.b16 %v477, %v475
  %v586 = vpack.c.b16 %v480, %v478
  %v587 = vpack.c.b16 %v481, %v479
  %v588 = vpack.c.b16 %v484, %v482
  %v589 = vpack.c.b16 %v485, %v483
  %v590 = vpack.c.b16 %v488, %v486
  %v591 = vpack.c.b16 %v489, %v487
  %v592 = vpack.c.b16 %v492, %v490
  %v593 = vpack.c.b16 %v493, %v491
  %v594 = vpack.c.b16 %v496, %v494
  %v595 = vpack.c.b16 %v497, %v495
  %v596 = vpack.c.b16 %v500, %v498
  %v597 = vpack.c.b16 %v501, %v499
  %v598 = vpack.c.b16 %v504, %v502
  %v599 = vpack.c.b16 %v505, %v503
  %v600 = vpack.c.b16 %v508, %v506
  %v601 = vpack.c.b16 %v509, %v507
  %v602 = vpack.c.b16 %v512, %v510
  %v603 = vpack.c.b16 %v513, %v511
  %v604 = vpack.c.b16 %v516, %v514
  %v605 = vpack.c.b16 %v517, %v515
  %v606 = vpack.c.b16 %v520, %v518
  %v607 = vpack.c.b16 %v521, %v519
  %v608 = vpack.c.b16 %v524, %v522
  %v609 = vpack.c.b16 %v525, %v523
  %v610 = vpack.c.b16 %v528, %v526
  %v611 = vpack.c.b16 %v529, %v527
  %v612 = vpack.c.b16 %v532, %v530
  %v613 = vpack.c.b16 %v533, %v531
  %v614 = vpack.c.b16 %v536, %v534
  %v615 = vpack.c.b16 %v537, %v535
  %v616 = vpack.c.b16 %v540, %v538
  %v617 = vpack.c.b16 %v541, %v539
  %v618 = vpack.c.b16 %v544, %v542
  %v619 = vpack.c.b16 %v545, %v543
  %v620 = vpack.c.b16 %v548, %v546
  %v621 = vpack.c.b16 %v549, %v547
  %v622 = vpack.c.b16 %v552, %v550
  %v623 = vpack.c.b16 %v553, %v551
  %v624 = vpack.c.b16 %v556, %v554
  %v625 = vpack.c.b16 %v557, %v555
  %v626 = vpack.c.b16 %v560, %v558
  %v627 = vpack.c.b16 %v561, %v559
  %v628 = vpack.c.b16 %v564, %v562
  %v629 = vpack.c.b16 %v565, %v563
  %694 = vmatpush.bf16.msra.mxu0 %v580
  %695 = vmatpush.bf16.msra.mxu0 %v578
  %696 = vmatpush.bf16.msra.mxu0 %v576
  %697 = vmatpush.bf16.msra.mxu0 %v574
  %698 = vmatpush.bf16.msra.mxu0 %v572
  %699 = vmatpush.bf16.msra.mxu0 %v570
  %700 = vmatpush.bf16.msra.mxu0 %v568
  %701 = vmatpush.bf16.msra.mxu0 %v566
  %702 = vmatmul.bf16.gmra.mxu0 %v270
  %v703 = vpop.f32.mrf.mxu0
  %v704 = vadd.f32 0.0, %v703
  %v705 = vpop.f32.mrf.mxu0
  %v706 = vadd.f32 0.0, %v705
  %707 = vmatmul.bf16.gmra.mxu0 %v271
  %v708 = vpop.f32.mrf.mxu0
  %v709 = vadd.f32 0.0, %v708
  %v710 = vpop.f32.mrf.mxu0
  %v711 = vadd.f32 0.0, %v710
  %712 = vdwg.mxu0
  %713 = vmatpush.bf16.msra.mxu0 %v596
  %714 = vmatpush.bf16.msra.mxu0 %v594
  %715 = vmatpush.bf16.msra.mxu0 %v592
  %716 = vmatpush.bf16.msra.mxu0 %v590
  %717 = vmatpush.bf16.msra.mxu0 %v588
  %718 = vmatpush.bf16.msra.mxu0 %v586
  %719 = vmatpush.bf16.msra.mxu0 %v584
  %720 = vmatpush.bf16.msra.mxu0 %v582
  %721 = vmatmul.bf16.gmra.mxu0 %v282
  %v722 = vpop.f32.mrf.mxu0
  %v723 = vadd.f32 %v704, %v722
  %v724 = vpop.f32.mrf.mxu0
  %v725 = vadd.f32 %v706, %v724
  %726 = vmatmul.bf16.gmra.mxu0 %v283
  %v727 = vpop.f32.mrf.mxu0
  %v728 = vadd.f32 %v709, %v727
  %v729 = vpop.f32.mrf.mxu0
  %v730 = vadd.f32 %v711, %v729
  %731 = vdwg.mxu0
  %732 = vmatpush.bf16.msra.mxu0 %v612
  %733 = vmatpush.bf16.msra.mxu0 %v610
  %734 = vmatpush.bf16.msra.mxu0 %v608
  %735 = vmatpush.bf16.msra.mxu0 %v606
  %736 = vmatpush.bf16.msra.mxu0 %v604
  %737 = vmatpush.bf16.msra.mxu0 %v602
  %738 = vmatpush.bf16.msra.mxu0 %v600
  %739 = vmatpush.bf16.msra.mxu0 %v598
  %740 = vmatmul.bf16.gmra.mxu0 %v294
  %v741 = vpop.f32.mrf.mxu0
  %v742 = vadd.f32 %v723, %v741
  %v743 = vpop.f32.mrf.mxu0
  %v744 = vadd.f32 %v725, %v743
  %745 = vmatmul.bf16.gmra.mxu0 %v295
  %v746 = vpop.f32.mrf.mxu0
  %v747 = vadd.f32 %v728, %v746
  %v748 = vpop.f32.mrf.mxu0
  %v749 = vadd.f32 %v730, %v748
  %750 = vdwg.mxu0
  %751 = vmatpush.bf16.msra.mxu0 %v628
  %752 = vmatpush.bf16.msra.mxu0 %v626
  %753 = vmatpush.bf16.msra.mxu0 %v624
  %754 = vmatpush.bf16.msra.mxu0 %v622
  %755 = vmatpush.bf16.msra.mxu0 %v620
  %756 = vmatpush.bf16.msra.mxu0 %v618
  %757 = vmatpush.bf16.msra.mxu0 %v616
  %758 = vmatpush.bf16.msra.mxu0 %v614
  %759 = vmatmul.bf16.gmra.mxu0 %v306
  %v760 = vpop.f32.mrf.mxu0
  %v761 = vadd.f32 %v742, %v760
  %v762 = vpop.f32.mrf.mxu0
  %v763 = vadd.f32 %v744, %v762
  %764 = vmatmul.bf16.gmra.mxu0 %v307
  %v765 = vpop.f32.mrf.mxu0
  %v766 = vadd.f32 %v747, %v765
  %v767 = vpop.f32.mrf.mxu0
  %v768 = vadd.f32 %v749, %v767
  %769 = vdwg.mxu0
  %770 = vmatpush.bf16.msra.mxu0 %v581
  %771 = vmatpush.bf16.msra.mxu0 %v579
  %772 = vmatpush.bf16.msra.mxu0 %v577
  %773 = vmatpush.bf16.msra.mxu0 %v575
  %774 = vmatpush.bf16.msra.mxu0 %v573
  %775 = vmatpush.bf16.msra.mxu0 %v571
  %776 = vmatpush.bf16.msra.mxu0 %v569
  %777 = vmatpush.bf16.msra.mxu0 %v567
  %778 = vmatmul.bf16.gmra.mxu0 %v270
  %v779 = vpop.f32.mrf.mxu0
  %v780 = vadd.f32 0.0, %v779
  %v781 = vpop.f32.mrf.mxu0
  %v782 = vadd.f32 0.0, %v781
  %783 = vmatmul.bf16.gmra.mxu0 %v271
  %v784 = vpop.f32.mrf.mxu0
  %v785 = vadd.f32 0.0, %v784
  %v786 = vpop.f32.mrf.mxu0
  %v787 = vadd.f32 0.0, %v786
  %788 = vdwg.mxu0
  %789 = vmatpush.bf16.msra.mxu0 %v597
  %790 = vmatpush.bf16.msra.mxu0 %v595
  %791 = vmatpush.bf16.msra.mxu0 %v593
  %792 = vmatpush.bf16.msra.mxu0 %v591
  %793 = vmatpush.bf16.msra.mxu0 %v589
  %794 = vmatpush.bf16.msra.mxu0 %v587
  %795 = vmatpush.bf16.msra.mxu0 %v585
  %796 = vmatpush.bf16.msra.mxu0 %v583
  %797 = vmatmul.bf16.gmra.mxu0 %v282
  %v798 = vpop.f32.mrf.mxu0
  %v799 = vadd.f32 %v780, %v798
  %v800 = vpop.f32.mrf.mxu0
  %v801 = vadd.f32 %v782, %v800
  %802 = vmatmul.bf16.gmra.mxu0 %v283
  %v803 = vpop.f32.mrf.mxu0
  %v804 = vadd.f32 %v785, %v803
  %v805 = vpop.f32.mrf.mxu0
  %v806 = vadd.f32 %v787, %v805
  %807 = vdwg.mxu0
  %808 = vmatpush.bf16.msra.mxu0 %v613
  %809 = vmatpush.bf16.msra.mxu0 %v611
  %810 = vmatpush.bf16.msra.mxu0 %v609
  %811 = vmatpush.bf16.msra.mxu0 %v607
  %812 = vmatpush.bf16.msra.mxu0 %v605
  %813 = vmatpush.bf16.msra.mxu0 %v603
  %814 = vmatpush.bf16.msra.mxu0 %v601
  %815 = vmatpush.bf16.msra.mxu0 %v599
  %816 = vmatmul.bf16.gmra.mxu0 %v294
  %v817 = vpop.f32.mrf.mxu0
  %v818 = vadd.f32 %v799, %v817
  %v819 = vpop.f32.mrf.mxu0
  %v820 = vadd.f32 %v801, %v819
  %821 = vmatmul.bf16.gmra.mxu0 %v295
  %v822 = vpop.f32.mrf.mxu0
  %v823 = vadd.f32 %v804, %v822
  %v824 = vpop.f32.mrf.mxu0
  %v825 = vadd.f32 %v806, %v824
  %826 = vdwg.mxu0
  %827 = vmatpush.bf16.msra.mxu0 %v629
  %828 = vmatpush.bf16.msra.mxu0 %v627
  %829 = vmatpush.bf16.msra.mxu0 %v625
  %830 = vmatpush.bf16.msra.mxu0 %v623
  %831 = vmatpush.bf16.msra.mxu0 %v621
  %832 = vmatpush.bf16.msra.mxu0 %v619
  %833 = vmatpush.bf16.msra.mxu0 %v617
  %834 = vmatpush.bf16.msra.mxu0 %v615
  %835 = vmatmul.bf16.gmra.mxu0 %v306
  %v836 = vpop.f32.mrf.mxu0
  %v837 = vadd.f32 %v818, %v836
  %v838 = vpop.f32.mrf.mxu0
  %v839 = vadd.f32 %v820, %v838
  %840 = vmatmul.bf16.gmra.mxu0 %v307
  %v841 = vpop.f32.mrf.mxu0
  %v842 = vadd.f32 %v823, %v841
  %v843 = vpop.f32.mrf.mxu0
  %v844 = vadd.f32 %v825, %v843
  %845 = vdwg.mxu0
  %v846 = vadd.f32 %v761, %v763
  %v847 = vadd.f32 %v846, %v766
  %v848 = vadd.f32 %v847, %v768
  %v849 = vrot.slane %v848, 4
  %v850 = vadd.f32 %v848, %v849
  %v851 = vrot.slane %v850, 2
  %v852 = vadd.f32 %v850, %v851
  %v853 = vrot.slane %v852, 1
  %v854 = vadd.f32 %v852, %v853
  %v855 = vadd.f32 %v837, %v839
  %v856 = vadd.f32 %v855, %v842
  %v857 = vadd.f32 %v856, %v844
  %v858 = vrot.slane %v857, 4
  %v859 = vadd.f32 %v857, %v858
  %v860 = vrot.slane %v859, 2
  %v861 = vadd.f32 %v859, %v860
  %v862 = vrot.slane %v861, 1
  %v863 = vadd.f32 %v861, %v862
  %v864 = vmul.f32 %v761, %v761
  %v865 = vmul.f32 %v837, %v837
  %v866 = vmul.f32 %v763, %v763
  %v867 = vmul.f32 %v839, %v839
  %v868 = vmul.f32 %v766, %v766
  %v869 = vmul.f32 %v842, %v842
  %v870 = vmul.f32 %v768, %v768
  %v871 = vmul.f32 %v844, %v844
  %v872 = vadd.f32 %v864, %v866
  %v873 = vadd.f32 %v872, %v868
  %v874 = vadd.f32 %v873, %v870
  %v875 = vrot.slane %v874, 4
  %v876 = vadd.f32 %v874, %v875
  %v877 = vrot.slane %v876, 2
  %v878 = vadd.f32 %v876, %v877
  %v879 = vrot.slane %v878, 1
  %v880 = vadd.f32 %v878, %v879
  %v881 = vadd.f32 %v865, %v867
  %v882 = vadd.f32 %v881, %v869
  %v883 = vadd.f32 %v882, %v871
  %v884 = vrot.slane %v883, 4
  %v885 = vadd.f32 %v883, %v884
  %v886 = vrot.slane %v885, 2
  %v887 = vadd.f32 %v885, %v886
  %v888 = vrot.slane %v887, 1
  %v889 = vadd.f32 %v887, %v888
  %v890 = vld [vmem:[%s3] sm:$0xff]
  %v891 = vld [vmem:[%s3 + $0x8] sm:$0xff]
  %v892 = vld [vmem:[%s3 + $0x10] sm:$0xff]
  %v893 = vld [vmem:[%s3 + $0x18] sm:$0xff]
  %v894 = vld [vmem:[%s3 + $0x20] sm:$0xff]
  %v895 = vld [vmem:[%s3 + $0x28] sm:$0xff]
  %v896 = vld [vmem:[%s3 + $0x30] sm:$0xff]
  %v897 = vld [vmem:[%s3 + $0x38] sm:$0xff]
  %v898 = vld [vmem:[%s3 + $0x40] sm:$0xff]
  %v899 = vld [vmem:[%s3 + $0x48] sm:$0xff]
  %v900 = vld [vmem:[%s3 + $0x50] sm:$0xff]
  %v901 = vld [vmem:[%s3 + $0x58] sm:$0xff]
  %v902 = vld [vmem:[%s3 + $0x60] sm:$0xff]
  %v903 = vld [vmem:[%s3 + $0x68] sm:$0xff]
  %v904 = vld [vmem:[%s3 + $0x70] sm:$0xff]
  %v905 = vld [vmem:[%s3 + $0x78] sm:$0xff]
  %v906 = vld [vmem:[%s3 + $0x80] sm:$0xff]
  %v907 = vld [vmem:[%s3 + $0x88] sm:$0xff]
  %v908 = vld [vmem:[%s3 + $0x90] sm:$0xff]
  %v909 = vld [vmem:[%s3 + $0x98] sm:$0xff]
  %v910 = vld [vmem:[%s3 + $0xa0] sm:$0xff]
  %v911 = vld [vmem:[%s3 + $0xa8] sm:$0xff]
  %v912 = vld [vmem:[%s3 + $0xb0] sm:$0xff]
  %v913 = vld [vmem:[%s3 + $0xb8] sm:$0xff]
  %v914 = vld [vmem:[%s3 + $0xc0] sm:$0xff]
  %v915 = vld [vmem:[%s3 + $0xc8] sm:$0xff]
  %v916 = vld [vmem:[%s3 + $0xd0] sm:$0xff]
  %v917 = vld [vmem:[%s3 + $0xd8] sm:$0xff]
  %v918 = vld [vmem:[%s3 + $0xe0] sm:$0xff]
  %v919 = vld [vmem:[%s3 + $0xe8] sm:$0xff]
  %v920 = vld [vmem:[%s3 + $0xf0] sm:$0xff]
  %v921 = vld [vmem:[%s3 + $0xf8] sm:$0xff]
  %922 = vmatpush.msra.mxu0 %v905
  %923 = vmatpush.msra.mxu0 %v904
  %924 = vmatpush.msra.mxu0 %v903
  %925 = vmatpush.msra.mxu0 %v902
  %926 = vmatpush.msra.mxu0 %v901
  %927 = vmatpush.msra.mxu0 %v900
  %928 = vmatpush.msra.mxu0 %v899
  %929 = vmatpush.msra.mxu0 %v898
  %930 = vmatpush.msra.mxu0 %v897
  %931 = vmatpush.msra.mxu0 %v896
  %932 = vmatpush.msra.mxu0 %v895
  %933 = vmatpush.msra.mxu0 %v894
  %934 = vmatpush.msra.mxu0 %v893
  %935 = vmatpush.msra.mxu0 %v892
  %936 = vmatpush.msra.mxu0 %v891
  %937 = vmatpush.msra.mxu0 %v890
  %938 = vmatmul.f32.gmra.mxu0 %v854
  %v939 = vpop.f32.mrf.mxu0
  %v940 = vadd.f32 0.0, %v939
  %941 = vdwg.mxu0
  %942 = vmatpush.msra.mxu0 %v921
  %943 = vmatpush.msra.mxu0 %v920
  %944 = vmatpush.msra.mxu0 %v919
  %945 = vmatpush.msra.mxu0 %v918
  %946 = vmatpush.msra.mxu0 %v917
  %947 = vmatpush.msra.mxu0 %v916
  %948 = vmatpush.msra.mxu0 %v915
  %949 = vmatpush.msra.mxu0 %v914
  %950 = vmatpush.msra.mxu0 %v913
  %951 = vmatpush.msra.mxu0 %v912
  %952 = vmatpush.msra.mxu0 %v911
  %953 = vmatpush.msra.mxu0 %v910
  %954 = vmatpush.msra.mxu0 %v909
  %955 = vmatpush.msra.mxu0 %v908
  %956 = vmatpush.msra.mxu0 %v907
  %957 = vmatpush.msra.mxu0 %v906
  %958 = vmatmul.f32.gmra.mxu0 %v863
  %v959 = vpop.f32.mrf.mxu0
  %v960 = vadd.f32 %v940, %v959
  %961 = vdwg.mxu0
  %v962 = vmul.f32 %v960, 0.0022222223
  %963 = vmatpush.msra.mxu0 %v905
  %964 = vmatpush.msra.mxu0 %v904
  %965 = vmatpush.msra.mxu0 %v903
  %966 = vmatpush.msra.mxu0 %v902
  %967 = vmatpush.msra.mxu0 %v901
  %968 = vmatpush.msra.mxu0 %v900
  %969 = vmatpush.msra.mxu0 %v899
  %970 = vmatpush.msra.mxu0 %v898
  %971 = vmatpush.msra.mxu0 %v897
  %972 = vmatpush.msra.mxu0 %v896
  %973 = vmatpush.msra.mxu0 %v895
  %974 = vmatpush.msra.mxu0 %v894
  %975 = vmatpush.msra.mxu0 %v893
  %976 = vmatpush.msra.mxu0 %v892
  %977 = vmatpush.msra.mxu0 %v891
  %978 = vmatpush.msra.mxu0 %v890
  %979 = vmatmul.f32.gmra.mxu0 %v880
  %v980 = vpop.f32.mrf.mxu0
  %v981 = vadd.f32 0.0, %v980
  %982 = vdwg.mxu0
  %983 = vmatpush.msra.mxu0 %v921
  %984 = vmatpush.msra.mxu0 %v920
  %985 = vmatpush.msra.mxu0 %v919
  %986 = vmatpush.msra.mxu0 %v918
  %987 = vmatpush.msra.mxu0 %v917
  %988 = vmatpush.msra.mxu0 %v916
  %989 = vmatpush.msra.mxu0 %v915
  %990 = vmatpush.msra.mxu0 %v914
  %991 = vmatpush.msra.mxu0 %v913
  %992 = vmatpush.msra.mxu0 %v912
  %993 = vmatpush.msra.mxu0 %v911
  %994 = vmatpush.msra.mxu0 %v910
  %995 = vmatpush.msra.mxu0 %v909
  %996 = vmatpush.msra.mxu0 %v908
  %997 = vmatpush.msra.mxu0 %v907
  %998 = vmatpush.msra.mxu0 %v906
  %999 = vmatmul.f32.gmra.mxu0 %v889
  %v1000 = vpop.f32.mrf.mxu0
  %v1001 = vadd.f32 %v981, %v1000
  %1002 = vdwg.mxu0
  %v1003 = vmul.f32 %v1001, 0.0022222223
  %v1004 = vmul.f32 %v962, %v962
  %v1005 = vsub.f32 %v1003, %v1004
  %v1006 = vld [vmem:[%s5] sm:$0x1]
  %v1007 = vadd.f32 %v1005, 1e-05
  %v1008 = vrsqrt.pop %v1007
  %v1009 = vmul.f32 %v1008, %v1007
  %v1010 = vmul.f32 %v1009, %v1008
  %v1011 = vmul.f32 0.5, %v1010
  %v1012 = vsub.f32 1.5, %v1011
  %v1013 = vmul.f32 %v1008, %v1012
  %vm1014 = vweird.f32 %v1007
  %vm1015 = vweird.f32 %v1008
  %vm1016 = vmor %vm1014, %vm1015
  %v1017 = vsel %vm1016, %v1008, %v1013
  %v1018 = vmul.f32 %v1006, %v1017
  %v1019 = vld [vmem:[%s6] sm:$0x1]
  %v1020 = vmul.f32 %v962, %v1018
  %v1021 = vsub.f32 %v1019, %v1020
  %v1022 = vld [vmem:[%s4] sm:$0xff]
  %v1023 = vld [vmem:[%s4 + $0x8] sm:$0xff]
  %v1024 = vld [vmem:[%s4 + $0x10] sm:$0xff]
  %v1025 = vld [vmem:[%s4 + $0x18] sm:$0xff]
  %vm1026 = vcmask 130048
  %v1028 = vsel %vm1026, %v1018, 0
  %1030 = vmatpush.msra.mxu0 0.0
  %1031 = vmatpush.msra.mxu0 0.0
  %1032 = vmatpush.msra.mxu0 0.0
  %1033 = vmatpush.msra.mxu0 0.0
  %1034 = vmatpush.msra.mxu0 0.0
  %1035 = vmatpush.msra.mxu0 0.0
  %1036 = vmatpush.msra.mxu0 0.0
  %1037 = vmatpush.msra.mxu0 0.0
  %1038 = vmatpush.msra.mxu0 0.0
  %1039 = vmatpush.msra.mxu0 0.0
  %1040 = vmatpush.msra.mxu0 0.0
  %1041 = vmatpush.msra.mxu0 0.0
  %1042 = vmatpush.msra.mxu0 0.0
  %1043 = vmatpush.msra.mxu0 0.0
  %1044 = vmatpush.msra.mxu0 %v1024
  %1045 = vmatpush.msra.mxu0 %v1022
  %1046 = vmatmul.f32.gmra.mxu0 %v1028
  %v1047 = vpop.f32.mrf.mxu0
  %v1048 = vadd.f32 0.0, %v1047
  %1049 = vdwg.mxu0
  %1050 = vmatpush.msra.mxu0 0.0
  %1051 = vmatpush.msra.mxu0 0.0
  %1052 = vmatpush.msra.mxu0 0.0
  %1053 = vmatpush.msra.mxu0 0.0
  %1054 = vmatpush.msra.mxu0 0.0
  %1055 = vmatpush.msra.mxu0 0.0
  %1056 = vmatpush.msra.mxu0 0.0
  %1057 = vmatpush.msra.mxu0 0.0
  %1058 = vmatpush.msra.mxu0 0.0
  %1059 = vmatpush.msra.mxu0 0.0
  %1060 = vmatpush.msra.mxu0 0.0
  %1061 = vmatpush.msra.mxu0 0.0
  %1062 = vmatpush.msra.mxu0 0.0
  %1063 = vmatpush.msra.mxu0 0.0
  %1064 = vmatpush.msra.mxu0 %v1025
  %1065 = vmatpush.msra.mxu0 %v1023
  %1066 = vmatmul.f32.gmra.mxu0 %v1028
  %v1067 = vpop.f32.mrf.mxu0
  %v1068 = vadd.f32 0.0, %v1067
  %1069 = vdwg.mxu0
  %v1071 = vsel %vm1026, %v1021, 0
  %1073 = vmatpush.msra.mxu0 0.0
  %1074 = vmatpush.msra.mxu0 0.0
  %1075 = vmatpush.msra.mxu0 0.0
  %1076 = vmatpush.msra.mxu0 0.0
  %1077 = vmatpush.msra.mxu0 0.0
  %1078 = vmatpush.msra.mxu0 0.0
  %1079 = vmatpush.msra.mxu0 0.0
  %1080 = vmatpush.msra.mxu0 0.0
  %1081 = vmatpush.msra.mxu0 0.0
  %1082 = vmatpush.msra.mxu0 0.0
  %1083 = vmatpush.msra.mxu0 0.0
  %1084 = vmatpush.msra.mxu0 0.0
  %1085 = vmatpush.msra.mxu0 0.0
  %1086 = vmatpush.msra.mxu0 0.0
  %1087 = vmatpush.msra.mxu0 %v1024
  %1088 = vmatpush.msra.mxu0 %v1022
  %1089 = vmatmul.f32.gmra.mxu0 %v1071
  %v1090 = vpop.f32.mrf.mxu0
  %v1091 = vadd.f32 0.0, %v1090
  %1092 = vdwg.mxu0
  %1093 = vmatpush.msra.mxu0 0.0
  %1094 = vmatpush.msra.mxu0 0.0
  %1095 = vmatpush.msra.mxu0 0.0
  %1096 = vmatpush.msra.mxu0 0.0
  %1097 = vmatpush.msra.mxu0 0.0
  %1098 = vmatpush.msra.mxu0 0.0
  %1099 = vmatpush.msra.mxu0 0.0
  %1100 = vmatpush.msra.mxu0 0.0
  %1101 = vmatpush.msra.mxu0 0.0
  %1102 = vmatpush.msra.mxu0 0.0
  %1103 = vmatpush.msra.mxu0 0.0
  %1104 = vmatpush.msra.mxu0 0.0
  %1105 = vmatpush.msra.mxu0 0.0
  %1106 = vmatpush.msra.mxu0 0.0
  %1107 = vmatpush.msra.mxu0 %v1025
  %1108 = vmatpush.msra.mxu0 %v1023
  %1109 = vmatmul.f32.gmra.mxu0 %v1071
  %v1110 = vpop.f32.mrf.mxu0
  %v1111 = vadd.f32 0.0, %v1110
  %1112 = vdwg.mxu0
  %v1113 = vperm.slane %v1048, 0
  %v1114 = vperm.slane %v1068, 0
  %v1115 = vmul.f32 %v761, %v1113
  %v1116 = vmul.f32 %v837, %v1114
  %v1117 = vmul.f32 %v763, %v1113
  %v1118 = vmul.f32 %v839, %v1114
  %v1119 = vmul.f32 %v766, %v1113
  %v1120 = vmul.f32 %v842, %v1114
  %v1121 = vmul.f32 %v768, %v1113
  %v1122 = vmul.f32 %v844, %v1114
  %v1123 = vperm.slane %v1091, 0
  %v1124 = vperm.slane %v1111, 0
  %v1125 = vadd.f32 %v1115, %v1123
  %v1126 = vadd.f32 %v1116, %v1124
  %v1127 = vadd.f32 %v1117, %v1123
  %v1128 = vadd.f32 %v1118, %v1124
  %v1129 = vadd.f32 %v1119, %v1123
  %v1130 = vadd.f32 %v1120, %v1124
  %v1131 = vadd.f32 %v1121, %v1123
  %v1132 = vadd.f32 %v1122, %v1124
  %vm1133 = vcmp.gt.f32.partialorder %v1125, 0.0
  %vm1134 = vcmp.gt.f32.partialorder %v1126, 0.0
  %vm1135 = vcmp.gt.f32.partialorder %v1127, 0.0
  %vm1136 = vcmp.gt.f32.partialorder %v1128, 0.0
  %vm1137 = vcmp.gt.f32.partialorder %v1129, 0.0
  %vm1138 = vcmp.gt.f32.partialorder %v1130, 0.0
  %vm1139 = vcmp.gt.f32.partialorder %v1131, 0.0
  %vm1140 = vcmp.gt.f32.partialorder %v1132, 0.0
  %v1141 = vmul.f32 %v1125, 0.2
  %v1142 = vmul.f32 %v1126, 0.2
  %v1143 = vmul.f32 %v1127, 0.2
  %v1144 = vmul.f32 %v1128, 0.2
  %v1145 = vmul.f32 %v1129, 0.2
  %v1146 = vmul.f32 %v1130, 0.2
  %v1147 = vmul.f32 %v1131, 0.2
  %v1148 = vmul.f32 %v1132, 0.2
  %v1149 = vsel %vm1133, %v1125, %v1141
  %v1150 = vsel %vm1134, %v1126, %v1142
  %v1151 = vsel %vm1135, %v1127, %v1143
  %v1152 = vsel %vm1136, %v1128, %v1144
  %v1153 = vsel %vm1137, %v1129, %v1145
  %v1154 = vsel %vm1138, %v1130, %v1146
  %v1155 = vsel %vm1139, %v1131, %v1147
  %v1156 = vsel %vm1140, %v1132, %v1148
  %v1157 = vpack.c.bf16 %v1151, %v1149
  %v1158 = vpack.c.bf16 %v1152, %v1150
  %v1159 = vpack.c.bf16 %v1155, %v1153
  %v1160 = vpack.c.bf16 %v1156, %v1154
  %v1161 = vld [vmem:[%s7] sm:$0xf]
  %v1162 = vld [vmem:[%s7 + $0x4] sm:$0xf]
  %v1165 = vunpack.c.l.b16 %v1161
  %v1166 = vunpack.c.l.b16 %v1162
  %v1167 = vpack.c.b16 %v1166, %v1165
  %vm1168 = vcmask 261120
  %v1170 = vsel %vm1168, %v1167, 0
  %1172 = vmatpush.bf16.msra.mxu0 0
  %1173 = vmatpush.bf16.msra.mxu0 0
  %1174 = vmatpush.bf16.msra.mxu0 0
  %1175 = vmatpush.bf16.msra.mxu0 0
  %1176 = vmatpush.bf16.msra.mxu0 0
  %1177 = vmatpush.bf16.msra.mxu0 0
  %1178 = vmatpush.bf16.msra.mxu0 %v1159
  %1179 = vmatpush.bf16.msra.mxu0 %v1157
  %1180 = vmatmul.bf16.gmra.mxu0 %v1170
  %v1181 = vpop.f32.mrf.mxu0
  %v1182 = vadd.f32 0.0, %v1181
  %v1183 = vpop.f32.mrf.mxu0
  %v1184 = vadd.f32 0.0, %v1183
  %1185 = vdwg.mxu0
  %1186 = vmatpush.bf16.msra.mxu0 0
  %1187 = vmatpush.bf16.msra.mxu0 0
  %1188 = vmatpush.bf16.msra.mxu0 0
  %1189 = vmatpush.bf16.msra.mxu0 0
  %1190 = vmatpush.bf16.msra.mxu0 0
  %1191 = vmatpush.bf16.msra.mxu0 0
  %1192 = vmatpush.bf16.msra.mxu0 %v1160
  %1193 = vmatpush.bf16.msra.mxu0 %v1158
  %1194 = vmatmul.bf16.gmra.mxu0 %v1170
  %v1195 = vpop.f32.mrf.mxu0
  %v1196 = vadd.f32 0.0, %v1195
  %v1197 = vpop.f32.mrf.mxu0
  %v1198 = vadd.f32 0.0, %v1197
  %1199 = vdwg.mxu0
  %v1200 = vpack.c.bf16 %v1196, %v1182
  %v1201 = vpack.c.bf16 %v1198, %v1184
  %s1202 = scalar_lea.vmem %s7, 8
  %v1203 = vld [vmem:[%s1202] sm:$0xf]
  %v1204 = vld [vmem:[%s1202 + $0x4] sm:$0xf]
  %v1207 = vunpack.c.l.b16 %v1203
  %v1208 = vunpack.c.l.b16 %v1204
  %v1209 = vpack.c.b16 %v1208, %v1207
  %v1211 = vsel %vm1168, %v1209, 0
  %1213 = vmatpush.bf16.msra.mxu0 0
  %1214 = vmatpush.bf16.msra.mxu0 0
  %1215 = vmatpush.bf16.msra.mxu0 0
  %1216 = vmatpush.bf16.msra.mxu0 0
  %1217 = vmatpush.bf16.msra.mxu0 0
  %1218 = vmatpush.bf16.msra.mxu0 0
  %1219 = vmatpush.bf16.msra.mxu0 %v1159
  %1220 = vmatpush.bf16.msra.mxu0 %v1157
  %1221 = vmatmul.bf16.gmra.mxu0 %v1211
  %v1222 = vpop.f32.mrf.mxu0
  %v1223 = vadd.f32 0.0, %v1222
  %v1224 = vpop.f32.mrf.mxu0
  %v1225 = vadd.f32 0.0, %v1224
  %1226 = vdwg.mxu0
  %1227 = vmatpush.bf16.msra.mxu0 0
  %1228 = vmatpush.bf16.msra.mxu0 0
  %1229 = vmatpush.bf16.msra.mxu0 0
  %1230 = vmatpush.bf16.msra.mxu0 0
  %1231 = vmatpush.bf16.msra.mxu0 0
  %1232 = vmatpush.bf16.msra.mxu0 0
  %1233 = vmatpush.bf16.msra.mxu0 %v1160
  %1234 = vmatpush.bf16.msra.mxu0 %v1158
  %1235 = vmatmul.bf16.gmra.mxu0 %v1211
  %v1236 = vpop.f32.mrf.mxu0
  %v1237 = vadd.f32 0.0, %v1236
  %v1238 = vpop.f32.mrf.mxu0
  %v1239 = vadd.f32 0.0, %v1238
  %1240 = vdwg.mxu0
  %v1241 = vpack.c.bf16 %v1237, %v1223
  %v1242 = vpack.c.bf16 %v1239, %v1225
  %s1243 = scalar_lea.vmem %s7, 16
  %v1244 = vld [vmem:[%s1243] sm:$0xf]
  %v1245 = vld [vmem:[%s1243 + $0x4] sm:$0xf]
  %v1248 = vunpack.c.l.b16 %v1244
  %v1249 = vunpack.c.l.b16 %v1245
  %v1250 = vpack.c.b16 %v1249, %v1248
  %v1252 = vsel %vm1168, %v1250, 0
  %1254 = vmatpush.bf16.msra.mxu0 0
  %1255 = vmatpush.bf16.msra.mxu0 0
  %1256 = vmatpush.bf16.msra.mxu0 0
  %1257 = vmatpush.bf16.msra.mxu0 0
  %1258 = vmatpush.bf16.msra.mxu0 0
  %1259 = vmatpush.bf16.msra.mxu0 0
  %1260 = vmatpush.bf16.msra.mxu0 %v1159
  %1261 = vmatpush.bf16.msra.mxu0 %v1157
  %1262 = vmatmul.bf16.gmra.mxu0 %v1252
  %v1263 = vpop.f32.mrf.mxu0
  %v1264 = vadd.f32 0.0, %v1263
  %v1265 = vpop.f32.mrf.mxu0
  %v1266 = vadd.f32 0.0, %v1265
  %1267 = vdwg.mxu0
  %1268 = vmatpush.bf16.msra.mxu0 0
  %1269 = vmatpush.bf16.msra.mxu0 0
  %1270 = vmatpush.bf16.msra.mxu0 0
  %1271 = vmatpush.bf16.msra.mxu0 0
  %1272 = vmatpush.bf16.msra.mxu0 0
  %1273 = vmatpush.bf16.msra.mxu0 0
  %1274 = vmatpush.bf16.msra.mxu0 %v1160
  %1275 = vmatpush.bf16.msra.mxu0 %v1158
  %1276 = vmatmul.bf16.gmra.mxu0 %v1252
  %v1277 = vpop.f32.mrf.mxu0
  %v1278 = vadd.f32 0.0, %v1277
  %v1279 = vpop.f32.mrf.mxu0
  %v1280 = vadd.f32 0.0, %v1279
  %1281 = vdwg.mxu0
  %v1282 = vpack.c.bf16 %v1278, %v1264
  %v1283 = vpack.c.bf16 %v1280, %v1266
  %s1284 = scalar_lea.vmem %s7, 24
  %v1285 = vld [vmem:[%s1284] sm:$0xf]
  %v1286 = vld [vmem:[%s1284 + $0x4] sm:$0xf]
  %v1289 = vunpack.c.l.b16 %v1285
  %v1290 = vunpack.c.l.b16 %v1286
  %v1291 = vpack.c.b16 %v1290, %v1289
  %v1293 = vsel %vm1168, %v1291, 0
  %1295 = vmatpush.bf16.msra.mxu0 0
  %1296 = vmatpush.bf16.msra.mxu0 0
  %1297 = vmatpush.bf16.msra.mxu0 0
  %1298 = vmatpush.bf16.msra.mxu0 0
  %1299 = vmatpush.bf16.msra.mxu0 0
  %1300 = vmatpush.bf16.msra.mxu0 0
  %1301 = vmatpush.bf16.msra.mxu0 %v1159
  %1302 = vmatpush.bf16.msra.mxu0 %v1157
  %1303 = vmatmul.bf16.gmra.mxu0 %v1293
  %v1304 = vpop.f32.mrf.mxu0
  %v1305 = vadd.f32 0.0, %v1304
  %v1306 = vpop.f32.mrf.mxu0
  %v1307 = vadd.f32 0.0, %v1306
  %1308 = vdwg.mxu0
  %1309 = vmatpush.bf16.msra.mxu0 0
  %1310 = vmatpush.bf16.msra.mxu0 0
  %1311 = vmatpush.bf16.msra.mxu0 0
  %1312 = vmatpush.bf16.msra.mxu0 0
  %1313 = vmatpush.bf16.msra.mxu0 0
  %1314 = vmatpush.bf16.msra.mxu0 0
  %1315 = vmatpush.bf16.msra.mxu0 %v1160
  %1316 = vmatpush.bf16.msra.mxu0 %v1158
  %1317 = vmatmul.bf16.gmra.mxu0 %v1293
  %v1318 = vpop.f32.mrf.mxu0
  %v1319 = vadd.f32 0.0, %v1318
  %v1320 = vpop.f32.mrf.mxu0
  %v1321 = vadd.f32 0.0, %v1320
  %1322 = vdwg.mxu0
  %v1323 = vpack.c.bf16 %v1319, %v1305
  %v1324 = vpack.c.bf16 %v1321, %v1307
  %v1327 = vunpack.c.l.b16 %v1200
  %v1328 = vunpack.c.h.b16 %v1200
  %v1329 = vunpack.c.l.b16 %v1201
  %v1330 = vunpack.c.h.b16 %v1201
  %v1331 = vpack.c.b16 %v1329, %v1327
  %v1332 = vpack.c.b16 %v1330, %v1328
  %v1337 = vunpack.c.l.b16 %v1241
  %v1338 = vunpack.c.h.b16 %v1241
  %v1339 = vunpack.c.l.b16 %v1242
  %v1340 = vunpack.c.h.b16 %v1242
  %v1341 = vpack.c.b16 %v1339, %v1337
  %v1342 = vpack.c.b16 %v1340, %v1338
  %v1347 = vunpack.c.l.b16 %v1282
  %v1348 = vunpack.c.h.b16 %v1282
  %v1349 = vunpack.c.l.b16 %v1283
  %v1350 = vunpack.c.h.b16 %v1283
  %v1351 = vpack.c.b16 %v1349, %v1347
  %v1352 = vpack.c.b16 %v1350, %v1348
  %v1357 = vunpack.c.l.b16 %v1323
  %v1358 = vunpack.c.h.b16 %v1323
  %v1359 = vunpack.c.l.b16 %v1324
  %v1360 = vunpack.c.h.b16 %v1324
  %v1361 = vpack.c.b16 %v1359, %v1357
  %v1362 = vpack.c.b16 %v1360, %v1358
  %v1365 = vld [vmem:[%s8] sm:$0xff]
  %v1366 = vld [vmem:[%s8 + $0x8] sm:$0xff]
  %v1367 = vld [vmem:[%s8 + $0x10] sm:$0xff]
  %v1368 = vld [vmem:[%s8 + $0x18] sm:$0xff]
  %v1369 = vld [vmem:[%s8 + $0x20] sm:$0xff]
  %v1370 = vld [vmem:[%s8 + $0x28] sm:$0xff]
  %v1371 = vld [vmem:[%s8 + $0x30] sm:$0xff]
  %v1372 = vld [vmem:[%s8 + $0x38] sm:$0xff]
  %v1373 = vld [vmem:[%s8 + $0x40] sm:$0xff]
  %v1374 = vld [vmem:[%s8 + $0x48] sm:$0xff]
  %v1375 = vld [vmem:[%s8 + $0x50] sm:$0xff]
  %v1376 = vld [vmem:[%s8 + $0x58] sm:$0xff]
  %v1377 = vld [vmem:[%s8 + $0x60] sm:$0xff]
  %v1378 = vld [vmem:[%s8 + $0x68] sm:$0xff]
  %v1379 = vld [vmem:[%s8 + $0x70] sm:$0xff]
  %v1380 = vld [vmem:[%s8 + $0x78] sm:$0xff]
  %v1381 = vld [vmem:[%s8 + $0x80] sm:$0xff]
  %v1382 = vld [vmem:[%s8 + $0x88] sm:$0xff]
  %v1383 = vld [vmem:[%s8 + $0x90] sm:$0xff]
  %v1384 = vld [vmem:[%s8 + $0x98] sm:$0xff]
  %v1385 = vld [vmem:[%s8 + $0xa0] sm:$0xff]
  %v1386 = vld [vmem:[%s8 + $0xa8] sm:$0xff]
  %v1387 = vld [vmem:[%s8 + $0xb0] sm:$0xff]
  %v1388 = vld [vmem:[%s8 + $0xb8] sm:$0xff]
  %v1389 = vld [vmem:[%s8 + $0xc0] sm:$0xff]
  %v1390 = vld [vmem:[%s8 + $0xc8] sm:$0xff]
  %v1391 = vld [vmem:[%s8 + $0xd0] sm:$0xff]
  %v1392 = vld [vmem:[%s8 + $0xd8] sm:$0xff]
  %v1393 = vld [vmem:[%s8 + $0xe0] sm:$0xff]
  %v1394 = vld [vmem:[%s8 + $0xe8] sm:$0xff]
  %v1395 = vld [vmem:[%s8 + $0xf0] sm:$0xff]
  %v1396 = vld [vmem:[%s8 + $0xf8] sm:$0xff]
  %v1397 = vld [vmem:[%s8 + $0x100] sm:$0xff]
  %v1398 = vld [vmem:[%s8 + $0x108] sm:$0xff]
  %v1399 = vld [vmem:[%s8 + $0x110] sm:$0xff]
  %v1400 = vld [vmem:[%s8 + $0x118] sm:$0xff]
  %v1401 = vld [vmem:[%s8 + $0x120] sm:$0xff]
  %v1402 = vld [vmem:[%s8 + $0x128] sm:$0xff]
  %v1403 = vld [vmem:[%s8 + $0x130] sm:$0xff]
  %v1404 = vld [vmem:[%s8 + $0x138] sm:$0xff]
  %v1405 = vld [vmem:[%s8 + $0x140] sm:$0xff]
  %v1406 = vld [vmem:[%s8 + $0x148] sm:$0xff]
  %v1407 = vld [vmem:[%s8 + $0x150] sm:$0xff]
  %v1408 = vld [vmem:[%s8 + $0x158] sm:$0xff]
  %v1409 = vld [vmem:[%s8 + $0x160] sm:$0xff]
  %v1410 = vld [vmem:[%s8 + $0x168] sm:$0xff]
  %v1411 = vld [vmem:[%s8 + $0x170] sm:$0xff]
  %v1412 = vld [vmem:[%s8 + $0x178] sm:$0xff]
  %v1413 = vld [vmem:[%s8 + $0x180] sm:$0xff]
  %v1414 = vld [vmem:[%s8 + $0x188] sm:$0xff]
  %v1415 = vld [vmem:[%s8 + $0x190] sm:$0xff]
  %v1416 = vld [vmem:[%s8 + $0x198] sm:$0xff]
  %v1417 = vld [vmem:[%s8 + $0x1a0] sm:$0xff]
  %v1418 = vld [vmem:[%s8 + $0x1a8] sm:$0xff]
  %v1419 = vld [vmem:[%s8 + $0x1b0] sm:$0xff]
  %v1420 = vld [vmem:[%s8 + $0x1b8] sm:$0xff]
  %v1421 = vld [vmem:[%s8 + $0x1c0] sm:$0xff]
  %v1422 = vld [vmem:[%s8 + $0x1c8] sm:$0xff]
  %v1423 = vld [vmem:[%s8 + $0x1d0] sm:$0xff]
  %v1424 = vld [vmem:[%s8 + $0x1d8] sm:$0xff]
  %v1425 = vld [vmem:[%s8 + $0x1e0] sm:$0xff]
  %v1426 = vld [vmem:[%s8 + $0x1e8] sm:$0xff]
  %v1427 = vld [vmem:[%s8 + $0x1f0] sm:$0xff]
  %v1428 = vld [vmem:[%s8 + $0x1f8] sm:$0xff]
  %v1429 = vld [vmem:[%s8 + $0x200] sm:$0xff]
  %v1430 = vld [vmem:[%s8 + $0x208] sm:$0xff]
  %v1431 = vld [vmem:[%s8 + $0x210] sm:$0xff]
  %v1432 = vld [vmem:[%s8 + $0x218] sm:$0xff]
  %v1433 = vld [vmem:[%s8 + $0x220] sm:$0xff]
  %v1434 = vld [vmem:[%s8 + $0x228] sm:$0xff]
  %v1435 = vld [vmem:[%s8 + $0x230] sm:$0xff]
  %v1436 = vld [vmem:[%s8 + $0x238] sm:$0xff]
  %v1437 = vld [vmem:[%s8 + $0x240] sm:$0xff]
  %v1438 = vld [vmem:[%s8 + $0x248] sm:$0xff]
  %v1439 = vld [vmem:[%s8 + $0x250] sm:$0xff]
  %v1440 = vld [vmem:[%s8 + $0x258] sm:$0xff]
  %v1441 = vld [vmem:[%s8 + $0x260] sm:$0xff]
  %v1442 = vld [vmem:[%s8 + $0x268] sm:$0xff]
  %v1443 = vld [vmem:[%s8 + $0x270] sm:$0xff]
  %v1444 = vld [vmem:[%s8 + $0x278] sm:$0xff]
  %v1445 = vld [vmem:[%s8 + $0x280] sm:$0xff]
  %v1446 = vld [vmem:[%s8 + $0x288] sm:$0xff]
  %v1447 = vld [vmem:[%s8 + $0x290] sm:$0xff]
  %v1448 = vld [vmem:[%s8 + $0x298] sm:$0xff]
  %v1449 = vld [vmem:[%s8 + $0x2a0] sm:$0xff]
  %v1450 = vld [vmem:[%s8 + $0x2a8] sm:$0xff]
  %v1451 = vld [vmem:[%s8 + $0x2b0] sm:$0xff]
  %v1452 = vld [vmem:[%s8 + $0x2b8] sm:$0xff]
  %v1453 = vld [vmem:[%s8 + $0x2c0] sm:$0xff]
  %v1454 = vld [vmem:[%s8 + $0x2c8] sm:$0xff]
  %v1455 = vld [vmem:[%s8 + $0x2d0] sm:$0xff]
  %v1456 = vld [vmem:[%s8 + $0x2d8] sm:$0xff]
  %v1457 = vld [vmem:[%s8 + $0x2e0] sm:$0xff]
  %v1458 = vld [vmem:[%s8 + $0x2e8] sm:$0xff]
  %v1459 = vld [vmem:[%s8 + $0x2f0] sm:$0xff]
  %v1460 = vld [vmem:[%s8 + $0x2f8] sm:$0xff]
  %v1461 = vld [vmem:[%s8 + $0x300] sm:$0xff]
  %v1462 = vld [vmem:[%s8 + $0x308] sm:$0xff]
  %v1463 = vld [vmem:[%s8 + $0x310] sm:$0xff]
  %v1464 = vld [vmem:[%s8 + $0x318] sm:$0xff]
  %v1465 = vld [vmem:[%s8 + $0x320] sm:$0xff]
  %v1466 = vld [vmem:[%s8 + $0x328] sm:$0xff]
  %v1467 = vld [vmem:[%s8 + $0x330] sm:$0xff]
  %v1468 = vld [vmem:[%s8 + $0x338] sm:$0xff]
  %v1469 = vld [vmem:[%s8 + $0x340] sm:$0xff]
  %v1470 = vld [vmem:[%s8 + $0x348] sm:$0xff]
  %v1471 = vld [vmem:[%s8 + $0x350] sm:$0xff]
  %v1472 = vld [vmem:[%s8 + $0x358] sm:$0xff]
  %v1473 = vld [vmem:[%s8 + $0x360] sm:$0xff]
  %v1474 = vld [vmem:[%s8 + $0x368] sm:$0xff]
  %v1475 = vld [vmem:[%s8 + $0x370] sm:$0xff]
  %v1476 = vld [vmem:[%s8 + $0x378] sm:$0xff]
  %v1477 = vld [vmem:[%s8 + $0x380] sm:$0xff]
  %v1478 = vld [vmem:[%s8 + $0x388] sm:$0xff]
  %v1479 = vld [vmem:[%s8 + $0x390] sm:$0xff]
  %v1480 = vld [vmem:[%s8 + $0x398] sm:$0xff]
  %v1481 = vld [vmem:[%s8 + $0x3a0] sm:$0xff]
  %v1482 = vld [vmem:[%s8 + $0x3a8] sm:$0xff]
  %v1483 = vld [vmem:[%s8 + $0x3b0] sm:$0xff]
  %v1484 = vld [vmem:[%s8 + $0x3b8] sm:$0xff]
  %v1485 = vld [vmem:[%s8 + $0x3c0] sm:$0xff]
  %v1486 = vld [vmem:[%s8 + $0x3c8] sm:$0xff]
  %v1487 = vld [vmem:[%s8 + $0x3d0] sm:$0xff]
  %v1488 = vld [vmem:[%s8 + $0x3d8] sm:$0xff]
  %v1489 = vld [vmem:[%s8 + $0x3e0] sm:$0xff]
  %v1490 = vld [vmem:[%s8 + $0x3e8] sm:$0xff]
  %v1491 = vld [vmem:[%s8 + $0x3f0] sm:$0xff]
  %v1492 = vld [vmem:[%s8 + $0x3f8] sm:$0xff]
  %v1621 = vunpack.c.l.b16 %v1365
  %v1622 = vunpack.c.h.b16 %v1365
  %v1623 = vunpack.c.l.b16 %v1366
  %v1624 = vunpack.c.h.b16 %v1366
  %v1625 = vunpack.c.l.b16 %v1367
  %v1626 = vunpack.c.h.b16 %v1367
  %v1627 = vunpack.c.l.b16 %v1368
  %v1628 = vunpack.c.h.b16 %v1368
  %v1629 = vunpack.c.l.b16 %v1369
  %v1630 = vunpack.c.h.b16 %v1369
  %v1631 = vunpack.c.l.b16 %v1370
  %v1632 = vunpack.c.h.b16 %v1370
  %v1633 = vunpack.c.l.b16 %v1371
  %v1634 = vunpack.c.h.b16 %v1371
  %v1635 = vunpack.c.l.b16 %v1372
  %v1636 = vunpack.c.h.b16 %v1372
  %v1637 = vunpack.c.l.b16 %v1373
  %v1638 = vunpack.c.h.b16 %v1373
  %v1639 = vunpack.c.l.b16 %v1374
  %v1640 = vunpack.c.h.b16 %v1374
  %v1641 = vunpack.c.l.b16 %v1375
  %v1642 = vunpack.c.h.b16 %v1375
  %v1643 = vunpack.c.l.b16 %v1376
  %v1644 = vunpack.c.h.b16 %v1376
  %v1645 = vunpack.c.l.b16 %v1377
  %v1646 = vunpack.c.h.b16 %v1377
  %v1647 = vunpack.c.l.b16 %v1378
  %v1648 = vunpack.c.h.b16 %v1378
  %v1649 = vunpack.c.l.b16 %v1379
  %v1650 = vunpack.c.h.b16 %v1379
  %v1651 = vunpack.c.l.b16 %v1380
  %v1652 = vunpack.c.h.b16 %v1380
  %v1653 = vunpack.c.l.b16 %v1381
  %v1654 = vunpack.c.h.b16 %v1381
  %v1655 = vunpack.c.l.b16 %v1382
  %v1656 = vunpack.c.h.b16 %v1382
  %v1657 = vunpack.c.l.b16 %v1383
  %v1658 = vunpack.c.h.b16 %v1383
  %v1659 = vunpack.c.l.b16 %v1384
  %v1660 = vunpack.c.h.b16 %v1384
  %v1661 = vunpack.c.l.b16 %v1385
  %v1662 = vunpack.c.h.b16 %v1385
  %v1663 = vunpack.c.l.b16 %v1386
  %v1664 = vunpack.c.h.b16 %v1386
  %v1665 = vunpack.c.l.b16 %v1387
  %v1666 = vunpack.c.h.b16 %v1387
  %v1667 = vunpack.c.l.b16 %v1388
  %v1668 = vunpack.c.h.b16 %v1388
  %v1669 = vunpack.c.l.b16 %v1389
  %v1670 = vunpack.c.h.b16 %v1389
  %v1671 = vunpack.c.l.b16 %v1390
  %v1672 = vunpack.c.h.b16 %v1390
  %v1673 = vunpack.c.l.b16 %v1391
  %v1674 = vunpack.c.h.b16 %v1391
  %v1675 = vunpack.c.l.b16 %v1392
  %v1676 = vunpack.c.h.b16 %v1392
  %v1677 = vunpack.c.l.b16 %v1393
  %v1678 = vunpack.c.h.b16 %v1393
  %v1679 = vunpack.c.l.b16 %v1394
  %v1680 = vunpack.c.h.b16 %v1394
  %v1681 = vunpack.c.l.b16 %v1395
  %v1682 = vunpack.c.h.b16 %v1395
  %v1683 = vunpack.c.l.b16 %v1396
  %v1684 = vunpack.c.h.b16 %v1396
  %v1685 = vunpack.c.l.b16 %v1397
  %v1686 = vunpack.c.h.b16 %v1397
  %v1687 = vunpack.c.l.b16 %v1398
  %v1688 = vunpack.c.h.b16 %v1398
  %v1689 = vunpack.c.l.b16 %v1399
  %v1690 = vunpack.c.h.b16 %v1399
  %v1691 = vunpack.c.l.b16 %v1400
  %v1692 = vunpack.c.h.b16 %v1400
  %v1693 = vunpack.c.l.b16 %v1401
  %v1694 = vunpack.c.h.b16 %v1401
  %v1695 = vunpack.c.l.b16 %v1402
  %v1696 = vunpack.c.h.b16 %v1402
  %v1697 = vunpack.c.l.b16 %v1403
  %v1698 = vunpack.c.h.b16 %v1403
  %v1699 = vunpack.c.l.b16 %v1404
  %v1700 = vunpack.c.h.b16 %v1404
  %v1701 = vunpack.c.l.b16 %v1405
  %v1702 = vunpack.c.h.b16 %v1405
  %v1703 = vunpack.c.l.b16 %v1406
  %v1704 = vunpack.c.h.b16 %v1406
  %v1705 = vunpack.c.l.b16 %v1407
  %v1706 = vunpack.c.h.b16 %v1407
  %v1707 = vunpack.c.l.b16 %v1408
  %v1708 = vunpack.c.h.b16 %v1408
  %v1709 = vunpack.c.l.b16 %v1409
  %v1710 = vunpack.c.h.b16 %v1409
  %v1711 = vunpack.c.l.b16 %v1410
  %v1712 = vunpack.c.h.b16 %v1410
  %v1713 = vunpack.c.l.b16 %v1411
  %v1714 = vunpack.c.h.b16 %v1411
  %v1715 = vunpack.c.l.b16 %v1412
  %v1716 = vunpack.c.h.b16 %v1412
  %v1717 = vunpack.c.l.b16 %v1413
  %v1718 = vunpack.c.h.b16 %v1413
  %v1719 = vunpack.c.l.b16 %v1414
  %v1720 = vunpack.c.h.b16 %v1414
  %v1721 = vunpack.c.l.b16 %v1415
  %v1722 = vunpack.c.h.b16 %v1415
  %v1723 = vunpack.c.l.b16 %v1416
  %v1724 = vunpack.c.h.b16 %v1416
  %v1725 = vunpack.c.l.b16 %v1417
  %v1726 = vunpack.c.h.b16 %v1417
  %v1727 = vunpack.c.l.b16 %v1418
  %v1728 = vunpack.c.h.b16 %v1418
  %v1729 = vunpack.c.l.b16 %v1419
  %v1730 = vunpack.c.h.b16 %v1419
  %v1731 = vunpack.c.l.b16 %v1420
  %v1732 = vunpack.c.h.b16 %v1420
  %v1733 = vunpack.c.l.b16 %v1421
  %v1734 = vunpack.c.h.b16 %v1421
  %v1735 = vunpack.c.l.b16 %v1422
  %v1736 = vunpack.c.h.b16 %v1422
  %v1737 = vunpack.c.l.b16 %v1423
  %v1738 = vunpack.c.h.b16 %v1423
  %v1739 = vunpack.c.l.b16 %v1424
  %v1740 = vunpack.c.h.b16 %v1424
  %v1741 = vunpack.c.l.b16 %v1425
  %v1742 = vunpack.c.h.b16 %v1425
  %v1743 = vunpack.c.l.b16 %v1426
  %v1744 = vunpack.c.h.b16 %v1426
  %v1745 = vunpack.c.l.b16 %v1427
  %v1746 = vunpack.c.h.b16 %v1427
  %v1747 = vunpack.c.l.b16 %v1428
  %v1748 = vunpack.c.h.b16 %v1428
  %v1749 = vunpack.c.l.b16 %v1429
  %v1750 = vunpack.c.h.b16 %v1429
  %v1751 = vunpack.c.l.b16 %v1430
  %v1752 = vunpack.c.h.b16 %v1430
  %v1753 = vunpack.c.l.b16 %v1431
  %v1754 = vunpack.c.h.b16 %v1431
  %v1755 = vunpack.c.l.b16 %v1432
  %v1756 = vunpack.c.h.b16 %v1432
  %v1757 = vunpack.c.l.b16 %v1433
  %v1758 = vunpack.c.h.b16 %v1433
  %v1759 = vunpack.c.l.b16 %v1434
  %v1760 = vunpack.c.h.b16 %v1434
  %v1761 = vunpack.c.l.b16 %v1435
  %v1762 = vunpack.c.h.b16 %v1435
  %v1763 = vunpack.c.l.b16 %v1436
  %v1764 = vunpack.c.h.b16 %v1436
  %v1765 = vunpack.c.l.b16 %v1437
  %v1766 = vunpack.c.h.b16 %v1437
  %v1767 = vunpack.c.l.b16 %v1438
  %v1768 = vunpack.c.h.b16 %v1438
  %v1769 = vunpack.c.l.b16 %v1439
  %v1770 = vunpack.c.h.b16 %v1439
  %v1771 = vunpack.c.l.b16 %v1440
  %v1772 = vunpack.c.h.b16 %v1440
  %v1773 = vunpack.c.l.b16 %v1441
  %v1774 = vunpack.c.h.b16 %v1441
  %v1775 = vunpack.c.l.b16 %v1442
  %v1776 = vunpack.c.h.b16 %v1442
  %v1777 = vunpack.c.l.b16 %v1443
  %v1778 = vunpack.c.h.b16 %v1443
  %v1779 = vunpack.c.l.b16 %v1444
  %v1780 = vunpack.c.h.b16 %v1444
  %v1781 = vunpack.c.l.b16 %v1445
  %v1782 = vunpack.c.h.b16 %v1445
  %v1783 = vunpack.c.l.b16 %v1446
  %v1784 = vunpack.c.h.b16 %v1446
  %v1785 = vunpack.c.l.b16 %v1447
  %v1786 = vunpack.c.h.b16 %v1447
  %v1787 = vunpack.c.l.b16 %v1448
  %v1788 = vunpack.c.h.b16 %v1448
  %v1789 = vunpack.c.l.b16 %v1449
  %v1790 = vunpack.c.h.b16 %v1449
  %v1791 = vunpack.c.l.b16 %v1450
  %v1792 = vunpack.c.h.b16 %v1450
  %v1793 = vunpack.c.l.b16 %v1451
  %v1794 = vunpack.c.h.b16 %v1451
  %v1795 = vunpack.c.l.b16 %v1452
  %v1796 = vunpack.c.h.b16 %v1452
  %v1797 = vunpack.c.l.b16 %v1453
  %v1798 = vunpack.c.h.b16 %v1453
  %v1799 = vunpack.c.l.b16 %v1454
  %v1800 = vunpack.c.h.b16 %v1454
  %v1801 = vunpack.c.l.b16 %v1455
  %v1802 = vunpack.c.h.b16 %v1455
  %v1803 = vunpack.c.l.b16 %v1456
  %v1804 = vunpack.c.h.b16 %v1456
  %v1805 = vunpack.c.l.b16 %v1457
  %v1806 = vunpack.c.h.b16 %v1457
  %v1807 = vunpack.c.l.b16 %v1458
  %v1808 = vunpack.c.h.b16 %v1458
  %v1809 = vunpack.c.l.b16 %v1459
  %v1810 = vunpack.c.h.b16 %v1459
  %v1811 = vunpack.c.l.b16 %v1460
  %v1812 = vunpack.c.h.b16 %v1460
  %v1813 = vunpack.c.l.b16 %v1461
  %v1814 = vunpack.c.h.b16 %v1461
  %v1815 = vunpack.c.l.b16 %v1462
  %v1816 = vunpack.c.h.b16 %v1462
  %v1817 = vunpack.c.l.b16 %v1463
  %v1818 = vunpack.c.h.b16 %v1463
  %v1819 = vunpack.c.l.b16 %v1464
  %v1820 = vunpack.c.h.b16 %v1464
  %v1821 = vunpack.c.l.b16 %v1465
  %v1822 = vunpack.c.h.b16 %v1465
  %v1823 = vunpack.c.l.b16 %v1466
  %v1824 = vunpack.c.h.b16 %v1466
  %v1825 = vunpack.c.l.b16 %v1467
  %v1826 = vunpack.c.h.b16 %v1467
  %v1827 = vunpack.c.l.b16 %v1468
  %v1828 = vunpack.c.h.b16 %v1468
  %v1829 = vunpack.c.l.b16 %v1469
  %v1830 = vunpack.c.h.b16 %v1469
  %v1831 = vunpack.c.l.b16 %v1470
  %v1832 = vunpack.c.h.b16 %v1470
  %v1833 = vunpack.c.l.b16 %v1471
  %v1834 = vunpack.c.h.b16 %v1471
  %v1835 = vunpack.c.l.b16 %v1472
  %v1836 = vunpack.c.h.b16 %v1472
  %v1837 = vunpack.c.l.b16 %v1473
  %v1838 = vunpack.c.h.b16 %v1473
  %v1839 = vunpack.c.l.b16 %v1474
  %v1840 = vunpack.c.h.b16 %v1474
  %v1841 = vunpack.c.l.b16 %v1475
  %v1842 = vunpack.c.h.b16 %v1475
  %v1843 = vunpack.c.l.b16 %v1476
  %v1844 = vunpack.c.h.b16 %v1476
  %v1845 = vunpack.c.l.b16 %v1477
  %v1846 = vunpack.c.h.b16 %v1477
  %v1847 = vunpack.c.l.b16 %v1478
  %v1848 = vunpack.c.h.b16 %v1478
  %v1849 = vunpack.c.l.b16 %v1479
  %v1850 = vunpack.c.h.b16 %v1479
  %v1851 = vunpack.c.l.b16 %v1480
  %v1852 = vunpack.c.h.b16 %v1480
  %v1853 = vunpack.c.l.b16 %v1481
  %v1854 = vunpack.c.h.b16 %v1481
  %v1855 = vunpack.c.l.b16 %v1482
  %v1856 = vunpack.c.h.b16 %v1482
  %v1857 = vunpack.c.l.b16 %v1483
  %v1858 = vunpack.c.h.b16 %v1483
  %v1859 = vunpack.c.l.b16 %v1484
  %v1860 = vunpack.c.h.b16 %v1484
  %v1861 = vunpack.c.l.b16 %v1485
  %v1862 = vunpack.c.h.b16 %v1485
  %v1863 = vunpack.c.l.b16 %v1486
  %v1864 = vunpack.c.h.b16 %v1486
  %v1865 = vunpack.c.l.b16 %v1487
  %v1866 = vunpack.c.h.b16 %v1487
  %v1867 = vunpack.c.l.b16 %v1488
  %v1868 = vunpack.c.h.b16 %v1488
  %v1869 = vunpack.c.l.b16 %v1489
  %v1870 = vunpack.c.h.b16 %v1489
  %v1871 = vunpack.c.l.b16 %v1490
  %v1872 = vunpack.c.h.b16 %v1490
  %v1873 = vunpack.c.l.b16 %v1491
  %v1874 = vunpack.c.h.b16 %v1491
  %v1875 = vunpack.c.l.b16 %v1492
  %v1876 = vunpack.c.h.b16 %v1492
  %v1877 = vpack.c.b16 %v1623, %v1621
  %v1878 = vpack.c.b16 %v1624, %v1622
  %v1879 = vpack.c.b16 %v1627, %v1625
  %v1880 = vpack.c.b16 %v1628, %v1626
  %v1881 = vpack.c.b16 %v1631, %v1629
  %v1882 = vpack.c.b16 %v1632, %v1630
  %v1883 = vpack.c.b16 %v1635, %v1633
  %v1884 = vpack.c.b16 %v1636, %v1634
  %v1885 = vpack.c.b16 %v1639, %v1637
  %v1886 = vpack.c.b16 %v1640, %v1638
  %v1887 = vpack.c.b16 %v1643, %v1641
  %v1888 = vpack.c.b16 %v1644, %v1642
  %v1889 = vpack.c.b16 %v1647, %v1645
  %v1890 = vpack.c.b16 %v1648, %v1646
  %v1891 = vpack.c.b16 %v1651, %v1649
  %v1892 = vpack.c.b16 %v1652, %v1650
  %v1893 = vpack.c.b16 %v1655, %v1653
  %v1894 = vpack.c.b16 %v1656, %v1654
  %v1895 = vpack.c.b16 %v1659, %v1657
  %v1896 = vpack.c.b16 %v1660, %v1658
  %v1897 = vpack.c.b16 %v1663, %v1661
  %v1898 = vpack.c.b16 %v1664, %v1662
  %v1899 = vpack.c.b16 %v1667, %v1665
  %v1900 = vpack.c.b16 %v1668, %v1666
  %v1901 = vpack.c.b16 %v1671, %v1669
  %v1902 = vpack.c.b16 %v1672, %v1670
  %v1903 = vpack.c.b16 %v1675, %v1673
  %v1904 = vpack.c.b16 %v1676, %v1674
  %v1905 = vpack.c.b16 %v1679, %v1677
  %v1906 = vpack.c.b16 %v1680, %v1678
  %v1907 = vpack.c.b16 %v1683, %v1681
  %v1908 = vpack.c.b16 %v1684, %v1682
  %v1909 = vpack.c.b16 %v1687, %v1685
  %v1910 = vpack.c.b16 %v1688, %v1686
  %v1911 = vpack.c.b16 %v1691, %v1689
  %v1912 = vpack.c.b16 %v1692, %v1690
  %v1913 = vpack.c.b16 %v1695, %v1693
  %v1914 = vpack.c.b16 %v1696, %v1694
  %v1915 = vpack.c.b16 %v1699, %v1697
  %v1916 = vpack.c.b16 %v1700, %v1698
  %v1917 = vpack.c.b16 %v1703, %v1701
  %v1918 = vpack.c.b16 %v1704, %v1702
  %v1919 = vpack.c.b16 %v1707, %v1705
  %v1920 = vpack.c.b16 %v1708, %v1706
  %v1921 = vpack.c.b16 %v1711, %v1709
  %v1922 = vpack.c.b16 %v1712, %v1710
  %v1923 = vpack.c.b16 %v1715, %v1713
  %v1924 = vpack.c.b16 %v1716, %v1714
  %v1925 = vpack.c.b16 %v1719, %v1717
  %v1926 = vpack.c.b16 %v1720, %v1718
  %v1927 = vpack.c.b16 %v1723, %v1721
  %v1928 = vpack.c.b16 %v1724, %v1722
  %v1929 = vpack.c.b16 %v1727, %v1725
  %v1930 = vpack.c.b16 %v1728, %v1726
  %v1931 = vpack.c.b16 %v1731, %v1729
  %v1932 = vpack.c.b16 %v1732, %v1730
  %v1933 = vpack.c.b16 %v1735, %v1733
  %v1934 = vpack.c.b16 %v1736, %v1734
  %v1935 = vpack.c.b16 %v1739, %v1737
  %v1936 = vpack.c.b16 %v1740, %v1738
  %v1937 = vpack.c.b16 %v1743, %v1741
  %v1938 = vpack.c.b16 %v1744, %v1742
  %v1939 = vpack.c.b16 %v1747, %v1745
  %v1940 = vpack.c.b16 %v1748, %v1746
  %v1941 = vpack.c.b16 %v1751, %v1749
  %v1942 = vpack.c.b16 %v1752, %v1750
  %v1943 = vpack.c.b16 %v1755, %v1753
  %v1944 = vpack.c.b16 %v1756, %v1754
  %v1945 = vpack.c.b16 %v1759, %v1757
  %v1946 = vpack.c.b16 %v1760, %v1758
  %v1947 = vpack.c.b16 %v1763, %v1761
  %v1948 = vpack.c.b16 %v1764, %v1762
  %v1949 = vpack.c.b16 %v1767, %v1765
  %v1950 = vpack.c.b16 %v1768, %v1766
  %v1951 = vpack.c.b16 %v1771, %v1769
  %v1952 = vpack.c.b16 %v1772, %v1770
  %v1953 = vpack.c.b16 %v1775, %v1773
  %v1954 = vpack.c.b16 %v1776, %v1774
  %v1955 = vpack.c.b16 %v1779, %v1777
  %v1956 = vpack.c.b16 %v1780, %v1778
  %v1957 = vpack.c.b16 %v1783, %v1781
  %v1958 = vpack.c.b16 %v1784, %v1782
  %v1959 = vpack.c.b16 %v1787, %v1785
  %v1960 = vpack.c.b16 %v1788, %v1786
  %v1961 = vpack.c.b16 %v1791, %v1789
  %v1962 = vpack.c.b16 %v1792, %v1790
  %v1963 = vpack.c.b16 %v1795, %v1793
  %v1964 = vpack.c.b16 %v1796, %v1794
  %v1965 = vpack.c.b16 %v1799, %v1797
  %v1966 = vpack.c.b16 %v1800, %v1798
  %v1967 = vpack.c.b16 %v1803, %v1801
  %v1968 = vpack.c.b16 %v1804, %v1802
  %v1969 = vpack.c.b16 %v1807, %v1805
  %v1970 = vpack.c.b16 %v1808, %v1806
  %v1971 = vpack.c.b16 %v1811, %v1809
  %v1972 = vpack.c.b16 %v1812, %v1810
  %v1973 = vpack.c.b16 %v1815, %v1813
  %v1974 = vpack.c.b16 %v1816, %v1814
  %v1975 = vpack.c.b16 %v1819, %v1817
  %v1976 = vpack.c.b16 %v1820, %v1818
  %v1977 = vpack.c.b16 %v1823, %v1821
  %v1978 = vpack.c.b16 %v1824, %v1822
  %v1979 = vpack.c.b16 %v1827, %v1825
  %v1980 = vpack.c.b16 %v1828, %v1826
  %v1981 = vpack.c.b16 %v1831, %v1829
  %v1982 = vpack.c.b16 %v1832, %v1830
  %v1983 = vpack.c.b16 %v1835, %v1833
  %v1984 = vpack.c.b16 %v1836, %v1834
  %v1985 = vpack.c.b16 %v1839, %v1837
  %v1986 = vpack.c.b16 %v1840, %v1838
  %v1987 = vpack.c.b16 %v1843, %v1841
  %v1988 = vpack.c.b16 %v1844, %v1842
  %v1989 = vpack.c.b16 %v1847, %v1845
  %v1990 = vpack.c.b16 %v1848, %v1846
  %v1991 = vpack.c.b16 %v1851, %v1849
  %v1992 = vpack.c.b16 %v1852, %v1850
  %v1993 = vpack.c.b16 %v1855, %v1853
  %v1994 = vpack.c.b16 %v1856, %v1854
  %v1995 = vpack.c.b16 %v1859, %v1857
  %v1996 = vpack.c.b16 %v1860, %v1858
  %v1997 = vpack.c.b16 %v1863, %v1861
  %v1998 = vpack.c.b16 %v1864, %v1862
  %v1999 = vpack.c.b16 %v1867, %v1865
  %v2000 = vpack.c.b16 %v1868, %v1866
  %v2001 = vpack.c.b16 %v1871, %v1869
  %v2002 = vpack.c.b16 %v1872, %v1870
  %v2003 = vpack.c.b16 %v1875, %v1873
  %v2004 = vpack.c.b16 %v1876, %v1874
  %2133 = vmatpush.bf16.msra.mxu0 %v1891
  %2134 = vmatpush.bf16.msra.mxu0 %v1889
  %2135 = vmatpush.bf16.msra.mxu0 %v1887
  %2136 = vmatpush.bf16.msra.mxu0 %v1885
  %2137 = vmatpush.bf16.msra.mxu0 %v1883
  %2138 = vmatpush.bf16.msra.mxu0 %v1881
  %2139 = vmatpush.bf16.msra.mxu0 %v1879
  %2140 = vmatpush.bf16.msra.mxu0 %v1877
  %2141 = vmatmul.bf16.gmra.mxu0 %v1331
  %v2142 = vpop.f32.mrf.mxu0
  %v2143 = vadd.f32 0.0, %v2142
  %v2144 = vpop.f32.mrf.mxu0
  %v2145 = vadd.f32 0.0, %v2144
  %2146 = vdwg.mxu0
  %2147 = vmatpush.bf16.msra.mxu0 %v1907
  %2148 = vmatpush.bf16.msra.mxu0 %v1905
  %2149 = vmatpush.bf16.msra.mxu0 %v1903
  %2150 = vmatpush.bf16.msra.mxu0 %v1901
  %2151 = vmatpush.bf16.msra.mxu0 %v1899
  %2152 = vmatpush.bf16.msra.mxu0 %v1897
  %2153 = vmatpush.bf16.msra.mxu0 %v1895
  %2154 = vmatpush.bf16.msra.mxu0 %v1893
  %2155 = vmatmul.bf16.gmra.mxu0 %v1332
  %v2156 = vpop.f32.mrf.mxu0
  %v2157 = vadd.f32 %v2143, %v2156
  %v2158 = vpop.f32.mrf.mxu0
  %v2159 = vadd.f32 %v2145, %v2158
  %2160 = vdwg.mxu0
  %2161 = vmatpush.bf16.msra.mxu0 %v1923
  %2162 = vmatpush.bf16.msra.mxu0 %v1921
  %2163 = vmatpush.bf16.msra.mxu0 %v1919
  %2164 = vmatpush.bf16.msra.mxu0 %v1917
  %2165 = vmatpush.bf16.msra.mxu0 %v1915
  %2166 = vmatpush.bf16.msra.mxu0 %v1913
  %2167 = vmatpush.bf16.msra.mxu0 %v1911
  %2168 = vmatpush.bf16.msra.mxu0 %v1909
  %2169 = vmatmul.bf16.gmra.mxu0 %v1341
  %v2170 = vpop.f32.mrf.mxu0
  %v2171 = vadd.f32 %v2157, %v2170
  %v2172 = vpop.f32.mrf.mxu0
  %v2173 = vadd.f32 %v2159, %v2172
  %2174 = vdwg.mxu0
  %2175 = vmatpush.bf16.msra.mxu0 %v1939
  %2176 = vmatpush.bf16.msra.mxu0 %v1937
  %2177 = vmatpush.bf16.msra.mxu0 %v1935
  %2178 = vmatpush.bf16.msra.mxu0 %v1933
  %2179 = vmatpush.bf16.msra.mxu0 %v1931
  %2180 = vmatpush.bf16.msra.mxu0 %v1929
  %2181 = vmatpush.bf16.msra.mxu0 %v1927
  %2182 = vmatpush.bf16.msra.mxu0 %v1925
  %2183 = vmatmul.bf16.gmra.mxu0 %v1342
  %v2184 = vpop.f32.mrf.mxu0
  %v2185 = vadd.f32 %v2171, %v2184
  %v2186 = vpop.f32.mrf.mxu0
  %v2187 = vadd.f32 %v2173, %v2186
  %2188 = vdwg.mxu0
  %2189 = vmatpush.bf16.msra.mxu0 %v1955
  %2190 = vmatpush.bf16.msra.mxu0 %v1953
  %2191 = vmatpush.bf16.msra.mxu0 %v1951
  %2192 = vmatpush.bf16.msra.mxu0 %v1949
  %2193 = vmatpush.bf16.msra.mxu0 %v1947
  %2194 = vmatpush.bf16.msra.mxu0 %v1945
  %2195 = vmatpush.bf16.msra.mxu0 %v1943
  %2196 = vmatpush.bf16.msra.mxu0 %v1941
  %2197 = vmatmul.bf16.gmra.mxu0 %v1351
  %v2198 = vpop.f32.mrf.mxu0
  %v2199 = vadd.f32 %v2185, %v2198
  %v2200 = vpop.f32.mrf.mxu0
  %v2201 = vadd.f32 %v2187, %v2200
  %2202 = vdwg.mxu0
  %2203 = vmatpush.bf16.msra.mxu0 %v1971
  %2204 = vmatpush.bf16.msra.mxu0 %v1969
  %2205 = vmatpush.bf16.msra.mxu0 %v1967
  %2206 = vmatpush.bf16.msra.mxu0 %v1965
  %2207 = vmatpush.bf16.msra.mxu0 %v1963
  %2208 = vmatpush.bf16.msra.mxu0 %v1961
  %2209 = vmatpush.bf16.msra.mxu0 %v1959
  %2210 = vmatpush.bf16.msra.mxu0 %v1957
  %2211 = vmatmul.bf16.gmra.mxu0 %v1352
  %v2212 = vpop.f32.mrf.mxu0
  %v2213 = vadd.f32 %v2199, %v2212
  %v2214 = vpop.f32.mrf.mxu0
  %v2215 = vadd.f32 %v2201, %v2214
  %2216 = vdwg.mxu0
  %2217 = vmatpush.bf16.msra.mxu0 %v1987
  %2218 = vmatpush.bf16.msra.mxu0 %v1985
  %2219 = vmatpush.bf16.msra.mxu0 %v1983
  %2220 = vmatpush.bf16.msra.mxu0 %v1981
  %2221 = vmatpush.bf16.msra.mxu0 %v1979
  %2222 = vmatpush.bf16.msra.mxu0 %v1977
  %2223 = vmatpush.bf16.msra.mxu0 %v1975
  %2224 = vmatpush.bf16.msra.mxu0 %v1973
  %2225 = vmatmul.bf16.gmra.mxu0 %v1361
  %v2226 = vpop.f32.mrf.mxu0
  %v2227 = vadd.f32 %v2213, %v2226
  %v2228 = vpop.f32.mrf.mxu0
  %v2229 = vadd.f32 %v2215, %v2228
  %2230 = vdwg.mxu0
  %2231 = vmatpush.bf16.msra.mxu0 %v2003
  %2232 = vmatpush.bf16.msra.mxu0 %v2001
  %2233 = vmatpush.bf16.msra.mxu0 %v1999
  %2234 = vmatpush.bf16.msra.mxu0 %v1997
  %2235 = vmatpush.bf16.msra.mxu0 %v1995
  %2236 = vmatpush.bf16.msra.mxu0 %v1993
  %2237 = vmatpush.bf16.msra.mxu0 %v1991
  %2238 = vmatpush.bf16.msra.mxu0 %v1989
  %2239 = vmatmul.bf16.gmra.mxu0 %v1362
  %v2240 = vpop.f32.mrf.mxu0
  %v2241 = vadd.f32 %v2227, %v2240
  %v2242 = vpop.f32.mrf.mxu0
  %v2243 = vadd.f32 %v2229, %v2242
  %2244 = vdwg.mxu0
  %2245 = vmatpush.bf16.msra.mxu0 %v1892
  %2246 = vmatpush.bf16.msra.mxu0 %v1890
  %2247 = vmatpush.bf16.msra.mxu0 %v1888
  %2248 = vmatpush.bf16.msra.mxu0 %v1886
  %2249 = vmatpush.bf16.msra.mxu0 %v1884
  %2250 = vmatpush.bf16.msra.mxu0 %v1882
  %2251 = vmatpush.bf16.msra.mxu0 %v1880
  %2252 = vmatpush.bf16.msra.mxu0 %v1878
  %2253 = vmatmul.bf16.gmra.mxu0 %v1331
  %v2254 = vpop.f32.mrf.mxu0
  %v2255 = vadd.f32 0.0, %v2254
  %v2256 = vpop.f32.mrf.mxu0
  %v2257 = vadd.f32 0.0, %v2256
  %2258 = vdwg.mxu0
  %2259 = vmatpush.bf16.msra.mxu0 %v1908
  %2260 = vmatpush.bf16.msra.mxu0 %v1906
  %2261 = vmatpush.bf16.msra.mxu0 %v1904
  %2262 = vmatpush.bf16.msra.mxu0 %v1902
  %2263 = vmatpush.bf16.msra.mxu0 %v1900
  %2264 = vmatpush.bf16.msra.mxu0 %v1898
  %2265 = vmatpush.bf16.msra.mxu0 %v1896
  %2266 = vmatpush.bf16.msra.mxu0 %v1894
  %2267 = vmatmul.bf16.gmra.mxu0 %v1332
  %v2268 = vpop.f32.mrf.mxu0
  %v2269 = vadd.f32 %v2255, %v2268
  %v2270 = vpop.f32.mrf.mxu0
  %v2271 = vadd.f32 %v2257, %v2270
  %2272 = vdwg.mxu0
  %2273 = vmatpush.bf16.msra.mxu0 %v1924
  %2274 = vmatpush.bf16.msra.mxu0 %v1922
  %2275 = vmatpush.bf16.msra.mxu0 %v1920
  %2276 = vmatpush.bf16.msra.mxu0 %v1918
  %2277 = vmatpush.bf16.msra.mxu0 %v1916
  %2278 = vmatpush.bf16.msra.mxu0 %v1914
  %2279 = vmatpush.bf16.msra.mxu0 %v1912
  %2280 = vmatpush.bf16.msra.mxu0 %v1910
  %2281 = vmatmul.bf16.gmra.mxu0 %v1341
  %v2282 = vpop.f32.mrf.mxu0
  %v2283 = vadd.f32 %v2269, %v2282
  %v2284 = vpop.f32.mrf.mxu0
  %v2285 = vadd.f32 %v2271, %v2284
  %2286 = vdwg.mxu0
  %2287 = vmatpush.bf16.msra.mxu0 %v1940
  %2288 = vmatpush.bf16.msra.mxu0 %v1938
  %2289 = vmatpush.bf16.msra.mxu0 %v1936
  %2290 = vmatpush.bf16.msra.mxu0 %v1934
  %2291 = vmatpush.bf16.msra.mxu0 %v1932
  %2292 = vmatpush.bf16.msra.mxu0 %v1930
  %2293 = vmatpush.bf16.msra.mxu0 %v1928
  %2294 = vmatpush.bf16.msra.mxu0 %v1926
  %2295 = vmatmul.bf16.gmra.mxu0 %v1342
  %v2296 = vpop.f32.mrf.mxu0
  %v2297 = vadd.f32 %v2283, %v2296
  %v2298 = vpop.f32.mrf.mxu0
  %v2299 = vadd.f32 %v2285, %v2298
  %2300 = vdwg.mxu0
  %2301 = vmatpush.bf16.msra.mxu0 %v1956
  %2302 = vmatpush.bf16.msra.mxu0 %v1954
  %2303 = vmatpush.bf16.msra.mxu0 %v1952
  %2304 = vmatpush.bf16.msra.mxu0 %v1950
  %2305 = vmatpush.bf16.msra.mxu0 %v1948
  %2306 = vmatpush.bf16.msra.mxu0 %v1946
  %2307 = vmatpush.bf16.msra.mxu0 %v1944
  %2308 = vmatpush.bf16.msra.mxu0 %v1942
  %2309 = vmatmul.bf16.gmra.mxu0 %v1351
  %v2310 = vpop.f32.mrf.mxu0
  %v2311 = vadd.f32 %v2297, %v2310
  %v2312 = vpop.f32.mrf.mxu0
  %v2313 = vadd.f32 %v2299, %v2312
  %2314 = vdwg.mxu0
  %2315 = vmatpush.bf16.msra.mxu0 %v1972
  %2316 = vmatpush.bf16.msra.mxu0 %v1970
  %2317 = vmatpush.bf16.msra.mxu0 %v1968
  %2318 = vmatpush.bf16.msra.mxu0 %v1966
  %2319 = vmatpush.bf16.msra.mxu0 %v1964
  %2320 = vmatpush.bf16.msra.mxu0 %v1962
  %2321 = vmatpush.bf16.msra.mxu0 %v1960
  %2322 = vmatpush.bf16.msra.mxu0 %v1958
  %2323 = vmatmul.bf16.gmra.mxu0 %v1352
  %v2324 = vpop.f32.mrf.mxu0
  %v2325 = vadd.f32 %v2311, %v2324
  %v2326 = vpop.f32.mrf.mxu0
  %v2327 = vadd.f32 %v2313, %v2326
  %2328 = vdwg.mxu0
  %2329 = vmatpush.bf16.msra.mxu0 %v1988
  %2330 = vmatpush.bf16.msra.mxu0 %v1986
  %2331 = vmatpush.bf16.msra.mxu0 %v1984
  %2332 = vmatpush.bf16.msra.mxu0 %v1982
  %2333 = vmatpush.bf16.msra.mxu0 %v1980
  %2334 = vmatpush.bf16.msra.mxu0 %v1978
  %2335 = vmatpush.bf16.msra.mxu0 %v1976
  %2336 = vmatpush.bf16.msra.mxu0 %v1974
  %2337 = vmatmul.bf16.gmra.mxu0 %v1361
  %v2338 = vpop.f32.mrf.mxu0
  %v2339 = vadd.f32 %v2325, %v2338
  %v2340 = vpop.f32.mrf.mxu0
  %v2341 = vadd.f32 %v2327, %v2340
  %2342 = vdwg.mxu0
  %2343 = vmatpush.bf16.msra.mxu0 %v2004
  %2344 = vmatpush.bf16.msra.mxu0 %v2002
  %2345 = vmatpush.bf16.msra.mxu0 %v2000
  %2346 = vmatpush.bf16.msra.mxu0 %v1998
  %2347 = vmatpush.bf16.msra.mxu0 %v1996
  %2348 = vmatpush.bf16.msra.mxu0 %v1994
  %2349 = vmatpush.bf16.msra.mxu0 %v1992
  %2350 = vmatpush.bf16.msra.mxu0 %v1990
  %2351 = vmatmul.bf16.gmra.mxu0 %v1362
  %v2352 = vpop.f32.mrf.mxu0
  %v2353 = vadd.f32 %v2339, %v2352
  %v2354 = vpop.f32.mrf.mxu0
  %v2355 = vadd.f32 %v2341, %v2354
  %2356 = vdwg.mxu0
  %v2357 = vadd.f32 %v2241, %v2243
  %v2358 = vrot.slane %v2357, 4
  %v2359 = vadd.f32 %v2357, %v2358
  %v2360 = vrot.slane %v2359, 2
  %v2361 = vadd.f32 %v2359, %v2360
  %v2362 = vrot.slane %v2361, 1
  %v2363 = vadd.f32 %v2361, %v2362
  %v2364 = vadd.f32 %v2353, %v2355
  %v2365 = vrot.slane %v2364, 4
  %v2366 = vadd.f32 %v2364, %v2365
  %v2367 = vrot.slane %v2366, 2
  %v2368 = vadd.f32 %v2366, %v2367
  %v2369 = vrot.slane %v2368, 1
  %v2370 = vadd.f32 %v2368, %v2369
  %v2371 = vmul.f32 %v2241, %v2241
  %v2372 = vmul.f32 %v2353, %v2353
  %v2373 = vmul.f32 %v2243, %v2243
  %v2374 = vmul.f32 %v2355, %v2355
  %v2375 = vadd.f32 %v2371, %v2373
  %v2376 = vrot.slane %v2375, 4
  %v2377 = vadd.f32 %v2375, %v2376
  %v2378 = vrot.slane %v2377, 2
  %v2379 = vadd.f32 %v2377, %v2378
  %v2380 = vrot.slane %v2379, 1
  %v2381 = vadd.f32 %v2379, %v2380
  %v2382 = vadd.f32 %v2372, %v2374
  %v2383 = vrot.slane %v2382, 4
  %v2384 = vadd.f32 %v2382, %v2383
  %v2385 = vrot.slane %v2384, 2
  %v2386 = vadd.f32 %v2384, %v2385
  %v2387 = vrot.slane %v2386, 1
  %v2388 = vadd.f32 %v2386, %v2387
  %v2389 = vld [vmem:[%s9] sm:$0xff]
  %v2390 = vld [vmem:[%s9 + $0x8] sm:$0xff]
  %v2391 = vld [vmem:[%s9 + $0x10] sm:$0xff]
  %v2392 = vld [vmem:[%s9 + $0x18] sm:$0xff]
  %v2393 = vld [vmem:[%s9 + $0x20] sm:$0xff]
  %v2394 = vld [vmem:[%s9 + $0x28] sm:$0xff]
  %v2395 = vld [vmem:[%s9 + $0x30] sm:$0xff]
  %v2396 = vld [vmem:[%s9 + $0x38] sm:$0xff]
  %v2397 = vld [vmem:[%s9 + $0x40] sm:$0xff]
  %v2398 = vld [vmem:[%s9 + $0x48] sm:$0xff]
  %v2399 = vld [vmem:[%s9 + $0x50] sm:$0xff]
  %v2400 = vld [vmem:[%s9 + $0x58] sm:$0xff]
  %v2401 = vld [vmem:[%s9 + $0x60] sm:$0xff]
  %v2402 = vld [vmem:[%s9 + $0x68] sm:$0xff]
  %v2403 = vld [vmem:[%s9 + $0x70] sm:$0xff]
  %v2404 = vld [vmem:[%s9 + $0x78] sm:$0xff]
  %v2405 = vld [vmem:[%s9 + $0x80] sm:$0xff]
  %v2406 = vld [vmem:[%s9 + $0x88] sm:$0xff]
  %v2407 = vld [vmem:[%s9 + $0x90] sm:$0xff]
  %v2408 = vld [vmem:[%s9 + $0x98] sm:$0xff]
  %v2409 = vld [vmem:[%s9 + $0xa0] sm:$0xff]
  %v2410 = vld [vmem:[%s9 + $0xa8] sm:$0xff]
  %v2411 = vld [vmem:[%s9 + $0xb0] sm:$0xff]
  %v2412 = vld [vmem:[%s9 + $0xb8] sm:$0xff]
  %v2413 = vld [vmem:[%s9 + $0xc0] sm:$0xff]
  %v2414 = vld [vmem:[%s9 + $0xc8] sm:$0xff]
  %v2415 = vld [vmem:[%s9 + $0xd0] sm:$0xff]
  %v2416 = vld [vmem:[%s9 + $0xd8] sm:$0xff]
  %v2417 = vld [vmem:[%s9 + $0xe0] sm:$0xff]
  %v2418 = vld [vmem:[%s9 + $0xe8] sm:$0xff]
  %v2419 = vld [vmem:[%s9 + $0xf0] sm:$0xff]
  %v2420 = vld [vmem:[%s9 + $0xf8] sm:$0xff]
  %2421 = vmatpush.msra.mxu0 %v2404
  %2422 = vmatpush.msra.mxu0 %v2403
  %2423 = vmatpush.msra.mxu0 %v2402
  %2424 = vmatpush.msra.mxu0 %v2401
  %2425 = vmatpush.msra.mxu0 %v2400
  %2426 = vmatpush.msra.mxu0 %v2399
  %2427 = vmatpush.msra.mxu0 %v2398
  %2428 = vmatpush.msra.mxu0 %v2397
  %2429 = vmatpush.msra.mxu0 %v2396
  %2430 = vmatpush.msra.mxu0 %v2395
  %2431 = vmatpush.msra.mxu0 %v2394
  %2432 = vmatpush.msra.mxu0 %v2393
  %2433 = vmatpush.msra.mxu0 %v2392
  %2434 = vmatpush.msra.mxu0 %v2391
  %2435 = vmatpush.msra.mxu0 %v2390
  %2436 = vmatpush.msra.mxu0 %v2389
  %2437 = vmatmul.f32.gmra.mxu0 %v2363
  %v2438 = vpop.f32.mrf.mxu0
  %v2439 = vadd.f32 0.0, %v2438
  %2440 = vdwg.mxu0
  %2441 = vmatpush.msra.mxu0 %v2420
  %2442 = vmatpush.msra.mxu0 %v2419
  %2443 = vmatpush.msra.mxu0 %v2418
  %2444 = vmatpush.msra.mxu0 %v2417
  %2445 = vmatpush.msra.mxu0 %v2416
  %2446 = vmatpush.msra.mxu0 %v2415
  %2447 = vmatpush.msra.mxu0 %v2414
  %2448 = vmatpush.msra.mxu0 %v2413
  %2449 = vmatpush.msra.mxu0 %v2412
  %2450 = vmatpush.msra.mxu0 %v2411
  %2451 = vmatpush.msra.mxu0 %v2410
  %2452 = vmatpush.msra.mxu0 %v2409
  %2453 = vmatpush.msra.mxu0 %v2408
  %2454 = vmatpush.msra.mxu0 %v2407
  %2455 = vmatpush.msra.mxu0 %v2406
  %2456 = vmatpush.msra.mxu0 %v2405
  %2457 = vmatmul.f32.gmra.mxu0 %v2370
  %v2458 = vpop.f32.mrf.mxu0
  %v2459 = vadd.f32 %v2439, %v2458
  %2460 = vdwg.mxu0
  %v2461 = vmul.f32 %v2459, 0.013888889
  %2462 = vmatpush.msra.mxu0 %v2404
  %2463 = vmatpush.msra.mxu0 %v2403
  %2464 = vmatpush.msra.mxu0 %v2402
  %2465 = vmatpush.msra.mxu0 %v2401
  %2466 = vmatpush.msra.mxu0 %v2400
  %2467 = vmatpush.msra.mxu0 %v2399
  %2468 = vmatpush.msra.mxu0 %v2398
  %2469 = vmatpush.msra.mxu0 %v2397
  %2470 = vmatpush.msra.mxu0 %v2396
  %2471 = vmatpush.msra.mxu0 %v2395
  %2472 = vmatpush.msra.mxu0 %v2394
  %2473 = vmatpush.msra.mxu0 %v2393
  %2474 = vmatpush.msra.mxu0 %v2392
  %2475 = vmatpush.msra.mxu0 %v2391
  %2476 = vmatpush.msra.mxu0 %v2390
  %2477 = vmatpush.msra.mxu0 %v2389
  %2478 = vmatmul.f32.gmra.mxu0 %v2381
  %v2479 = vpop.f32.mrf.mxu0
  %v2480 = vadd.f32 0.0, %v2479
  %2481 = vdwg.mxu0
  %2482 = vmatpush.msra.mxu0 %v2420
  %2483 = vmatpush.msra.mxu0 %v2419
  %2484 = vmatpush.msra.mxu0 %v2418
  %2485 = vmatpush.msra.mxu0 %v2417
  %2486 = vmatpush.msra.mxu0 %v2416
  %2487 = vmatpush.msra.mxu0 %v2415
  %2488 = vmatpush.msra.mxu0 %v2414
  %2489 = vmatpush.msra.mxu0 %v2413
  %2490 = vmatpush.msra.mxu0 %v2412
  %2491 = vmatpush.msra.mxu0 %v2411
  %2492 = vmatpush.msra.mxu0 %v2410
  %2493 = vmatpush.msra.mxu0 %v2409
  %2494 = vmatpush.msra.mxu0 %v2408
  %2495 = vmatpush.msra.mxu0 %v2407
  %2496 = vmatpush.msra.mxu0 %v2406
  %2497 = vmatpush.msra.mxu0 %v2405
  %2498 = vmatmul.f32.gmra.mxu0 %v2388
  %v2499 = vpop.f32.mrf.mxu0
  %v2500 = vadd.f32 %v2480, %v2499
  %2501 = vdwg.mxu0
  %v2502 = vmul.f32 %v2500, 0.013888889
  %v2503 = vmul.f32 %v2461, %v2461
  %v2504 = vsub.f32 %v2502, %v2503
  %v2505 = vld [vmem:[%s11] sm:$0x1]
  %v2506 = vadd.f32 %v2504, 1e-05
  %v2507 = vrsqrt.pop %v2506
  %v2508 = vmul.f32 %v2507, %v2506
  %v2509 = vmul.f32 %v2508, %v2507
  %v2510 = vmul.f32 0.5, %v2509
  %v2511 = vsub.f32 1.5, %v2510
  %v2512 = vmul.f32 %v2507, %v2511
  %vm2513 = vweird.f32 %v2506
  %vm2514 = vweird.f32 %v2507
  %vm2515 = vmor %vm2513, %vm2514
  %v2516 = vsel %vm2515, %v2507, %v2512
  %v2517 = vmul.f32 %v2505, %v2516
  %v2518 = vld [vmem:[%s12] sm:$0x1]
  %v2519 = vmul.f32 %v2461, %v2517
  %v2520 = vsub.f32 %v2518, %v2519
  %v2521 = vld [vmem:[%s10] sm:$0xff]
  %v2522 = vld [vmem:[%s10 + $0x8] sm:$0xff]
  %v2523 = vld [vmem:[%s10 + $0x10] sm:$0xff]
  %v2524 = vld [vmem:[%s10 + $0x18] sm:$0xff]
  %v2525 = vld [vmem:[%s10 + $0x20] sm:$0xff]
  %v2526 = vld [vmem:[%s10 + $0x28] sm:$0xff]
  %v2527 = vld [vmem:[%s10 + $0x30] sm:$0xff]
  %v2528 = vld [vmem:[%s10 + $0x38] sm:$0xff]
  %v2530 = vsel %vm1168, %v2517, 0
  %2532 = vmatpush.msra.mxu0 0.0
  %2533 = vmatpush.msra.mxu0 0.0
  %2534 = vmatpush.msra.mxu0 0.0
  %2535 = vmatpush.msra.mxu0 0.0
  %2536 = vmatpush.msra.mxu0 0.0
  %2537 = vmatpush.msra.mxu0 0.0
  %2538 = vmatpush.msra.mxu0 0.0
  %2539 = vmatpush.msra.mxu0 0.0
  %2540 = vmatpush.msra.mxu0 0.0
  %2541 = vmatpush.msra.mxu0 0.0
  %2542 = vmatpush.msra.mxu0 0.0
  %2543 = vmatpush.msra.mxu0 0.0
  %2544 = vmatpush.msra.mxu0 %v2527
  %2545 = vmatpush.msra.mxu0 %v2525
  %2546 = vmatpush.msra.mxu0 %v2523
  %2547 = vmatpush.msra.mxu0 %v2521
  %2548 = vmatmul.f32.gmra.mxu0 %v2530
  %v2549 = vpop.f32.mrf.mxu0
  %v2550 = vadd.f32 0.0, %v2549
  %2551 = vdwg.mxu0
  %2552 = vmatpush.msra.mxu0 0.0
  %2553 = vmatpush.msra.mxu0 0.0
  %2554 = vmatpush.msra.mxu0 0.0
  %2555 = vmatpush.msra.mxu0 0.0
  %2556 = vmatpush.msra.mxu0 0.0
  %2557 = vmatpush.msra.mxu0 0.0
  %2558 = vmatpush.msra.mxu0 0.0
  %2559 = vmatpush.msra.mxu0 0.0
  %2560 = vmatpush.msra.mxu0 0.0
  %2561 = vmatpush.msra.mxu0 0.0
  %2562 = vmatpush.msra.mxu0 0.0
  %2563 = vmatpush.msra.mxu0 0.0
  %2564 = vmatpush.msra.mxu0 %v2528
  %2565 = vmatpush.msra.mxu0 %v2526
  %2566 = vmatpush.msra.mxu0 %v2524
  %2567 = vmatpush.msra.mxu0 %v2522
  %2568 = vmatmul.f32.gmra.mxu0 %v2530
  %v2569 = vpop.f32.mrf.mxu0
  %v2570 = vadd.f32 0.0, %v2569
  %2571 = vdwg.mxu0
  %v2573 = vsel %vm1168, %v2520, 0
  %2575 = vmatpush.msra.mxu0 0.0
  %2576 = vmatpush.msra.mxu0 0.0
  %2577 = vmatpush.msra.mxu0 0.0
  %2578 = vmatpush.msra.mxu0 0.0
  %2579 = vmatpush.msra.mxu0 0.0
  %2580 = vmatpush.msra.mxu0 0.0
  %2581 = vmatpush.msra.mxu0 0.0
  %2582 = vmatpush.msra.mxu0 0.0
  %2583 = vmatpush.msra.mxu0 0.0
  %2584 = vmatpush.msra.mxu0 0.0
  %2585 = vmatpush.msra.mxu0 0.0
  %2586 = vmatpush.msra.mxu0 0.0
  %2587 = vmatpush.msra.mxu0 %v2527
  %2588 = vmatpush.msra.mxu0 %v2525
  %2589 = vmatpush.msra.mxu0 %v2523
  %2590 = vmatpush.msra.mxu0 %v2521
  %2591 = vmatmul.f32.gmra.mxu0 %v2573
  %v2592 = vpop.f32.mrf.mxu0
  %v2593 = vadd.f32 0.0, %v2592
  %2594 = vdwg.mxu0
  %2595 = vmatpush.msra.mxu0 0.0
  %2596 = vmatpush.msra.mxu0 0.0
  %2597 = vmatpush.msra.mxu0 0.0
  %2598 = vmatpush.msra.mxu0 0.0
  %2599 = vmatpush.msra.mxu0 0.0
  %2600 = vmatpush.msra.mxu0 0.0
  %2601 = vmatpush.msra.mxu0 0.0
  %2602 = vmatpush.msra.mxu0 0.0
  %2603 = vmatpush.msra.mxu0 0.0
  %2604 = vmatpush.msra.mxu0 0.0
  %2605 = vmatpush.msra.mxu0 0.0
  %2606 = vmatpush.msra.mxu0 0.0
  %2607 = vmatpush.msra.mxu0 %v2528
  %2608 = vmatpush.msra.mxu0 %v2526
  %2609 = vmatpush.msra.mxu0 %v2524
  %2610 = vmatpush.msra.mxu0 %v2522
  %2611 = vmatmul.f32.gmra.mxu0 %v2573
  %v2612 = vpop.f32.mrf.mxu0
  %v2613 = vadd.f32 0.0, %v2612
  %2614 = vdwg.mxu0
  %v2615 = vperm.slane %v2550, 0
  %v2616 = vperm.slane %v2570, 0
  %v2617 = vmul.f32 %v2241, %v2615
  %v2618 = vmul.f32 %v2353, %v2616
  %v2619 = vmul.f32 %v2243, %v2615
  %v2620 = vmul.f32 %v2355, %v2616
  %v2621 = vperm.slane %v2593, 0
  %v2622 = vperm.slane %v2613, 0
  %v2623 = vadd.f32 %v2617, %v2621
  %v2624 = vadd.f32 %v2618, %v2622
  %v2625 = vadd.f32 %v2619, %v2621
  %v2626 = vadd.f32 %v2620, %v2622
  %vm2627 = vcmp.gt.f32.partialorder %v2623, 0.0
  %vm2628 = vcmp.gt.f32.partialorder %v2624, 0.0
  %vm2629 = vcmp.gt.f32.partialorder %v2625, 0.0
  %vm2630 = vcmp.gt.f32.partialorder %v2626, 0.0
  %v2631 = vmul.f32 %v2623, 0.2
  %v2632 = vmul.f32 %v2624, 0.2
  %v2633 = vmul.f32 %v2625, 0.2
  %v2634 = vmul.f32 %v2626, 0.2
  %v2635 = vsel %vm2627, %v2623, %v2631
  %v2636 = vsel %vm2628, %v2624, %v2632
  %v2637 = vsel %vm2629, %v2625, %v2633
  %v2638 = vsel %vm2630, %v2626, %v2634
  %v2639 = vpack.c.bf16 %v2637, %v2635
  %v2640 = vpack.c.bf16 %v2638, %v2636
  %v2641 = vld [vmem:[%s13] sm:$0xf]
  %v2643 = vsel %vm1026, %v2641, 0
  %2645 = vmatpush.bf16.msra.mxu0 0
  %2646 = vmatpush.bf16.msra.mxu0 0
  %2647 = vmatpush.bf16.msra.mxu0 0
  %2648 = vmatpush.bf16.msra.mxu0 0
  %2649 = vmatpush.bf16.msra.mxu0 0
  %2650 = vmatpush.bf16.msra.mxu0 0
  %2651 = vmatpush.bf16.msra.mxu0 0
  %2652 = vmatpush.bf16.msra.mxu0 %v2639
  %2653 = vmatmul.bf16.gmra.mxu0 %v2643
  %v2654 = vpop.f32.mrf.mxu0
  %v2655 = vadd.f32 0.0, %v2654
  %v2656 = vpop.f32.mrf.mxu0
  %2657 = vdwg.mxu0
  %2658 = vmatpush.bf16.msra.mxu0 0
  %2659 = vmatpush.bf16.msra.mxu0 0
  %2660 = vmatpush.bf16.msra.mxu0 0
  %2661 = vmatpush.bf16.msra.mxu0 0
  %2662 = vmatpush.bf16.msra.mxu0 0
  %2663 = vmatpush.bf16.msra.mxu0 0
  %2664 = vmatpush.bf16.msra.mxu0 0
  %2665 = vmatpush.bf16.msra.mxu0 %v2640
  %2666 = vmatmul.bf16.gmra.mxu0 %v2643
  %v2667 = vpop.f32.mrf.mxu0
  %v2668 = vadd.f32 0.0, %v2667
  %v2669 = vpop.f32.mrf.mxu0
  %2670 = vdwg.mxu0
  %v2671 = vpack.c.bf16 %v2668, %v2655
  %s2672 = scalar_lea.vmem %s13, 4
  %v2673 = vld [vmem:[%s2672] sm:$0xf]
  %v2675 = vsel %vm1026, %v2673, 0
  %2677 = vmatpush.bf16.msra.mxu0 0
  %2678 = vmatpush.bf16.msra.mxu0 0
  %2679 = vmatpush.bf16.msra.mxu0 0
  %2680 = vmatpush.bf16.msra.mxu0 0
  %2681 = vmatpush.bf16.msra.mxu0 0
  %2682 = vmatpush.bf16.msra.mxu0 0
  %2683 = vmatpush.bf16.msra.mxu0 0
  %2684 = vmatpush.bf16.msra.mxu0 %v2639
  %2685 = vmatmul.bf16.gmra.mxu0 %v2675
  %v2686 = vpop.f32.mrf.mxu0
  %v2687 = vadd.f32 0.0, %v2686
  %v2688 = vpop.f32.mrf.mxu0
  %2689 = vdwg.mxu0
  %2690 = vmatpush.bf16.msra.mxu0 0
  %2691 = vmatpush.bf16.msra.mxu0 0
  %2692 = vmatpush.bf16.msra.mxu0 0
  %2693 = vmatpush.bf16.msra.mxu0 0
  %2694 = vmatpush.bf16.msra.mxu0 0
  %2695 = vmatpush.bf16.msra.mxu0 0
  %2696 = vmatpush.bf16.msra.mxu0 0
  %2697 = vmatpush.bf16.msra.mxu0 %v2640
  %2698 = vmatmul.bf16.gmra.mxu0 %v2675
  %v2699 = vpop.f32.mrf.mxu0
  %v2700 = vadd.f32 0.0, %v2699
  %v2701 = vpop.f32.mrf.mxu0
  %2702 = vdwg.mxu0
  %v2703 = vpack.c.bf16 %v2700, %v2687
  %s2704 = scalar_lea.vmem %s13, 8
  %v2705 = vld [vmem:[%s2704] sm:$0xf]
  %v2707 = vsel %vm1026, %v2705, 0
  %2709 = vmatpush.bf16.msra.mxu0 0
  %2710 = vmatpush.bf16.msra.mxu0 0
  %2711 = vmatpush.bf16.msra.mxu0 0
  %2712 = vmatpush.bf16.msra.mxu0 0
  %2713 = vmatpush.bf16.msra.mxu0 0
  %2714 = vmatpush.bf16.msra.mxu0 0
  %2715 = vmatpush.bf16.msra.mxu0 0
  %2716 = vmatpush.bf16.msra.mxu0 %v2639
  %2717 = vmatmul.bf16.gmra.mxu0 %v2707
  %v2718 = vpop.f32.mrf.mxu0
  %v2719 = vadd.f32 0.0, %v2718
  %v2720 = vpop.f32.mrf.mxu0
  %2721 = vdwg.mxu0
  %2722 = vmatpush.bf16.msra.mxu0 0
  %2723 = vmatpush.bf16.msra.mxu0 0
  %2724 = vmatpush.bf16.msra.mxu0 0
  %2725 = vmatpush.bf16.msra.mxu0 0
  %2726 = vmatpush.bf16.msra.mxu0 0
  %2727 = vmatpush.bf16.msra.mxu0 0
  %2728 = vmatpush.bf16.msra.mxu0 0
  %2729 = vmatpush.bf16.msra.mxu0 %v2640
  %2730 = vmatmul.bf16.gmra.mxu0 %v2707
  %v2731 = vpop.f32.mrf.mxu0
  %v2732 = vadd.f32 0.0, %v2731
  %v2733 = vpop.f32.mrf.mxu0
  %2734 = vdwg.mxu0
  %v2735 = vpack.c.bf16 %v2732, %v2719
  %s2736 = scalar_lea.vmem %s13, 12
  %v2737 = vld [vmem:[%s2736] sm:$0xf]
  %v2739 = vsel %vm1026, %v2737, 0
  %2741 = vmatpush.bf16.msra.mxu0 0
  %2742 = vmatpush.bf16.msra.mxu0 0
  %2743 = vmatpush.bf16.msra.mxu0 0
  %2744 = vmatpush.bf16.msra.mxu0 0
  %2745 = vmatpush.bf16.msra.mxu0 0
  %2746 = vmatpush.bf16.msra.mxu0 0
  %2747 = vmatpush.bf16.msra.mxu0 0
  %2748 = vmatpush.bf16.msra.mxu0 %v2639
  %2749 = vmatmul.bf16.gmra.mxu0 %v2739
  %v2750 = vpop.f32.mrf.mxu0
  %v2751 = vadd.f32 0.0, %v2750
  %v2752 = vpop.f32.mrf.mxu0
  %2753 = vdwg.mxu0
  %2754 = vmatpush.bf16.msra.mxu0 0
  %2755 = vmatpush.bf16.msra.mxu0 0
  %2756 = vmatpush.bf16.msra.mxu0 0
  %2757 = vmatpush.bf16.msra.mxu0 0
  %2758 = vmatpush.bf16.msra.mxu0 0
  %2759 = vmatpush.bf16.msra.mxu0 0
  %2760 = vmatpush.bf16.msra.mxu0 0
  %2761 = vmatpush.bf16.msra.mxu0 %v2640
  %2762 = vmatmul.bf16.gmra.mxu0 %v2739
  %v2763 = vpop.f32.mrf.mxu0
  %v2764 = vadd.f32 0.0, %v2763
  %v2765 = vpop.f32.mrf.mxu0
  %2766 = vdwg.mxu0
  %v2767 = vpack.c.bf16 %v2764, %v2751
  %v2769 = vunpack.c.l.b16 %v2671
  %v2770 = vunpack.c.h.b16 %v2671
  %v2771 = vpack.c.b16 %v2769, %v2769
  %v2772 = vpack.c.b16 %v2770, %v2770
  %v2776 = vunpack.c.l.b16 %v2703
  %v2777 = vunpack.c.h.b16 %v2703
  %v2778 = vpack.c.b16 %v2776, %v2776
  %v2779 = vpack.c.b16 %v2777, %v2777
  %v2783 = vunpack.c.l.b16 %v2735
  %v2784 = vunpack.c.h.b16 %v2735
  %v2785 = vpack.c.b16 %v2783, %v2783
  %v2786 = vpack.c.b16 %v2784, %v2784
  %v2790 = vunpack.c.l.b16 %v2767
  %v2791 = vunpack.c.h.b16 %v2767
  %v2792 = vpack.c.b16 %v2790, %v2790
  %v2793 = vpack.c.b16 %v2791, %v2791
  %v2796 = vld [vmem:[%s14] sm:$0xf]
  %v2797 = vld [vmem:[%s14 + $0x4] sm:$0xf]
  %v2798 = vld [vmem:[%s14 + $0x8] sm:$0xf]
  %v2799 = vld [vmem:[%s14 + $0xc] sm:$0xf]
  %v2800 = vld [vmem:[%s14 + $0x10] sm:$0xf]
  %v2801 = vld [vmem:[%s14 + $0x14] sm:$0xf]
  %v2802 = vld [vmem:[%s14 + $0x18] sm:$0xf]
  %v2803 = vld [vmem:[%s14 + $0x1c] sm:$0xf]
  %v2804 = vld [vmem:[%s14 + $0x20] sm:$0xf]
  %v2805 = vld [vmem:[%s14 + $0x24] sm:$0xf]
  %v2806 = vld [vmem:[%s14 + $0x28] sm:$0xf]
  %v2807 = vld [vmem:[%s14 + $0x2c] sm:$0xf]
  %v2808 = vld [vmem:[%s14 + $0x30] sm:$0xf]
  %v2809 = vld [vmem:[%s14 + $0x34] sm:$0xf]
  %v2810 = vld [vmem:[%s14 + $0x38] sm:$0xf]
  %v2811 = vld [vmem:[%s14 + $0x3c] sm:$0xf]
  %v2812 = vld [vmem:[%s14 + $0x40] sm:$0xf]
  %v2813 = vld [vmem:[%s14 + $0x44] sm:$0xf]
  %v2814 = vld [vmem:[%s14 + $0x48] sm:$0xf]
  %v2815 = vld [vmem:[%s14 + $0x4c] sm:$0xf]
  %v2816 = vld [vmem:[%s14 + $0x50] sm:$0xf]
  %v2817 = vld [vmem:[%s14 + $0x54] sm:$0xf]
  %v2818 = vld [vmem:[%s14 + $0x58] sm:$0xf]
  %v2819 = vld [vmem:[%s14 + $0x5c] sm:$0xf]
  %v2820 = vld [vmem:[%s14 + $0x60] sm:$0xf]
  %v2821 = vld [vmem:[%s14 + $0x64] sm:$0xf]
  %v2822 = vld [vmem:[%s14 + $0x68] sm:$0xf]
  %v2823 = vld [vmem:[%s14 + $0x6c] sm:$0xf]
  %v2824 = vld [vmem:[%s14 + $0x70] sm:$0xf]
  %v2825 = vld [vmem:[%s14 + $0x74] sm:$0xf]
  %v2826 = vld [vmem:[%s14 + $0x78] sm:$0xf]
  %v2827 = vld [vmem:[%s14 + $0x7c] sm:$0xf]
  %v2828 = vld [vmem:[%s14 + $0x80] sm:$0xf]
  %v2829 = vld [vmem:[%s14 + $0x84] sm:$0xf]
  %v2830 = vld [vmem:[%s14 + $0x88] sm:$0xf]
  %v2831 = vld [vmem:[%s14 + $0x8c] sm:$0xf]
  %v2832 = vld [vmem:[%s14 + $0x90] sm:$0xf]
  %v2833 = vld [vmem:[%s14 + $0x94] sm:$0xf]
  %v2834 = vld [vmem:[%s14 + $0x98] sm:$0xf]
  %v2835 = vld [vmem:[%s14 + $0x9c] sm:$0xf]
  %v2836 = vld [vmem:[%s14 + $0xa0] sm:$0xf]
  %v2837 = vld [vmem:[%s14 + $0xa4] sm:$0xf]
  %v2838 = vld [vmem:[%s14 + $0xa8] sm:$0xf]
  %v2839 = vld [vmem:[%s14 + $0xac] sm:$0xf]
  %v2840 = vld [vmem:[%s14 + $0xb0] sm:$0xf]
  %v2841 = vld [vmem:[%s14 + $0xb4] sm:$0xf]
  %v2842 = vld [vmem:[%s14 + $0xb8] sm:$0xf]
  %v2843 = vld [vmem:[%s14 + $0xbc] sm:$0xf]
  %v2844 = vld [vmem:[%s14 + $0xc0] sm:$0xf]
  %v2845 = vld [vmem:[%s14 + $0xc4] sm:$0xf]
  %v2846 = vld [vmem:[%s14 + $0xc8] sm:$0xf]
  %v2847 = vld [vmem:[%s14 + $0xcc] sm:$0xf]
  %v2848 = vld [vmem:[%s14 + $0xd0] sm:$0xf]
  %v2849 = vld [vmem:[%s14 + $0xd4] sm:$0xf]
  %v2850 = vld [vmem:[%s14 + $0xd8] sm:$0xf]
  %v2851 = vld [vmem:[%s14 + $0xdc] sm:$0xf]
  %v2852 = vld [vmem:[%s14 + $0xe0] sm:$0xf]
  %v2853 = vld [vmem:[%s14 + $0xe4] sm:$0xf]
  %v2854 = vld [vmem:[%s14 + $0xe8] sm:$0xf]
  %v2855 = vld [vmem:[%s14 + $0xec] sm:$0xf]
  %v2856 = vld [vmem:[%s14 + $0xf0] sm:$0xf]
  %v2857 = vld [vmem:[%s14 + $0xf4] sm:$0xf]
  %v2858 = vld [vmem:[%s14 + $0xf8] sm:$0xf]
  %v2859 = vld [vmem:[%s14 + $0xfc] sm:$0xf]
  %v2860 = vld [vmem:[%s14 + $0x100] sm:$0xf]
  %v2861 = vld [vmem:[%s14 + $0x104] sm:$0xf]
  %v2862 = vld [vmem:[%s14 + $0x108] sm:$0xf]
  %v2863 = vld [vmem:[%s14 + $0x10c] sm:$0xf]
  %v2864 = vld [vmem:[%s14 + $0x110] sm:$0xf]
  %v2865 = vld [vmem:[%s14 + $0x114] sm:$0xf]
  %v2866 = vld [vmem:[%s14 + $0x118] sm:$0xf]
  %v2867 = vld [vmem:[%s14 + $0x11c] sm:$0xf]
  %v2868 = vld [vmem:[%s14 + $0x120] sm:$0xf]
  %v2869 = vld [vmem:[%s14 + $0x124] sm:$0xf]
  %v2870 = vld [vmem:[%s14 + $0x128] sm:$0xf]
  %v2871 = vld [vmem:[%s14 + $0x12c] sm:$0xf]
  %v2872 = vld [vmem:[%s14 + $0x130] sm:$0xf]
  %v2873 = vld [vmem:[%s14 + $0x134] sm:$0xf]
  %v2874 = vld [vmem:[%s14 + $0x138] sm:$0xf]
  %v2875 = vld [vmem:[%s14 + $0x13c] sm:$0xf]
  %v2876 = vld [vmem:[%s14 + $0x140] sm:$0xf]
  %v2877 = vld [vmem:[%s14 + $0x144] sm:$0xf]
  %v2878 = vld [vmem:[%s14 + $0x148] sm:$0xf]
  %v2879 = vld [vmem:[%s14 + $0x14c] sm:$0xf]
  %v2880 = vld [vmem:[%s14 + $0x150] sm:$0xf]
  %v2881 = vld [vmem:[%s14 + $0x154] sm:$0xf]
  %v2882 = vld [vmem:[%s14 + $0x158] sm:$0xf]
  %v2883 = vld [vmem:[%s14 + $0x15c] sm:$0xf]
  %v2884 = vld [vmem:[%s14 + $0x160] sm:$0xf]
  %v2885 = vld [vmem:[%s14 + $0x164] sm:$0xf]
  %v2886 = vld [vmem:[%s14 + $0x168] sm:$0xf]
  %v2887 = vld [vmem:[%s14 + $0x16c] sm:$0xf]
  %v2888 = vld [vmem:[%s14 + $0x170] sm:$0xf]
  %v2889 = vld [vmem:[%s14 + $0x174] sm:$0xf]
  %v2890 = vld [vmem:[%s14 + $0x178] sm:$0xf]
  %v2891 = vld [vmem:[%s14 + $0x17c] sm:$0xf]
  %v2892 = vld [vmem:[%s14 + $0x180] sm:$0xf]
  %v2893 = vld [vmem:[%s14 + $0x184] sm:$0xf]
  %v2894 = vld [vmem:[%s14 + $0x188] sm:$0xf]
  %v2895 = vld [vmem:[%s14 + $0x18c] sm:$0xf]
  %v2896 = vld [vmem:[%s14 + $0x190] sm:$0xf]
  %v2897 = vld [vmem:[%s14 + $0x194] sm:$0xf]
  %v2898 = vld [vmem:[%s14 + $0x198] sm:$0xf]
  %v2899 = vld [vmem:[%s14 + $0x19c] sm:$0xf]
  %v2900 = vld [vmem:[%s14 + $0x1a0] sm:$0xf]
  %v2901 = vld [vmem:[%s14 + $0x1a4] sm:$0xf]
  %v2902 = vld [vmem:[%s14 + $0x1a8] sm:$0xf]
  %v2903 = vld [vmem:[%s14 + $0x1ac] sm:$0xf]
  %v2904 = vld [vmem:[%s14 + $0x1b0] sm:$0xf]
  %v2905 = vld [vmem:[%s14 + $0x1b4] sm:$0xf]
  %v2906 = vld [vmem:[%s14 + $0x1b8] sm:$0xf]
  %v2907 = vld [vmem:[%s14 + $0x1bc] sm:$0xf]
  %v2908 = vld [vmem:[%s14 + $0x1c0] sm:$0xf]
  %v2909 = vld [vmem:[%s14 + $0x1c4] sm:$0xf]
  %v2910 = vld [vmem:[%s14 + $0x1c8] sm:$0xf]
  %v2911 = vld [vmem:[%s14 + $0x1cc] sm:$0xf]
  %v2912 = vld [vmem:[%s14 + $0x1d0] sm:$0xf]
  %v2913 = vld [vmem:[%s14 + $0x1d4] sm:$0xf]
  %v2914 = vld [vmem:[%s14 + $0x1d8] sm:$0xf]
  %v2915 = vld [vmem:[%s14 + $0x1dc] sm:$0xf]
  %v2916 = vld [vmem:[%s14 + $0x1e0] sm:$0xf]
  %v2917 = vld [vmem:[%s14 + $0x1e4] sm:$0xf]
  %v2918 = vld [vmem:[%s14 + $0x1e8] sm:$0xf]
  %v2919 = vld [vmem:[%s14 + $0x1ec] sm:$0xf]
  %v2920 = vld [vmem:[%s14 + $0x1f0] sm:$0xf]
  %v2921 = vld [vmem:[%s14 + $0x1f4] sm:$0xf]
  %v2922 = vld [vmem:[%s14 + $0x1f8] sm:$0xf]
  %v2923 = vld [vmem:[%s14 + $0x1fc] sm:$0xf]
  %v2924 = vld [vmem:[%s15] sm:$0x1]
  %v2926 = vperm.slane %v2924, 0
  %v3056 = vunpack.c.l.b16 %v2796
  %v3057 = vunpack.c.l.b16 %v2797
  %v3058 = vunpack.c.l.b16 %v2798
  %v3059 = vunpack.c.l.b16 %v2799
  %v3060 = vunpack.c.l.b16 %v2800
  %v3061 = vunpack.c.l.b16 %v2801
  %v3062 = vunpack.c.l.b16 %v2802
  %v3063 = vunpack.c.l.b16 %v2803
  %v3064 = vunpack.c.l.b16 %v2804
  %v3065 = vunpack.c.l.b16 %v2805
  %v3066 = vunpack.c.l.b16 %v2806
  %v3067 = vunpack.c.l.b16 %v2807
  %v3068 = vunpack.c.l.b16 %v2808
  %v3069 = vunpack.c.l.b16 %v2809
  %v3070 = vunpack.c.l.b16 %v2810
  %v3071 = vunpack.c.l.b16 %v2811
  %v3072 = vunpack.c.l.b16 %v2812
  %v3073 = vunpack.c.l.b16 %v2813
  %v3074 = vunpack.c.l.b16 %v2814
  %v3075 = vunpack.c.l.b16 %v2815
  %v3076 = vunpack.c.l.b16 %v2816
  %v3077 = vunpack.c.l.b16 %v2817
  %v3078 = vunpack.c.l.b16 %v2818
  %v3079 = vunpack.c.l.b16 %v2819
  %v3080 = vunpack.c.l.b16 %v2820
  %v3081 = vunpack.c.l.b16 %v2821
  %v3082 = vunpack.c.l.b16 %v2822
  %v3083 = vunpack.c.l.b16 %v2823
  %v3084 = vunpack.c.l.b16 %v2824
  %v3085 = vunpack.c.l.b16 %v2825
  %v3086 = vunpack.c.l.b16 %v2826
  %v3087 = vunpack.c.l.b16 %v2827
  %v3088 = vunpack.c.l.b16 %v2828
  %v3089 = vunpack.c.l.b16 %v2829
  %v3090 = vunpack.c.l.b16 %v2830
  %v3091 = vunpack.c.l.b16 %v2831
  %v3092 = vunpack.c.l.b16 %v2832
  %v3093 = vunpack.c.l.b16 %v2833
  %v3094 = vunpack.c.l.b16 %v2834
  %v3095 = vunpack.c.l.b16 %v2835
  %v3096 = vunpack.c.l.b16 %v2836
  %v3097 = vunpack.c.l.b16 %v2837
  %v3098 = vunpack.c.l.b16 %v2838
  %v3099 = vunpack.c.l.b16 %v2839
  %v3100 = vunpack.c.l.b16 %v2840
  %v3101 = vunpack.c.l.b16 %v2841
  %v3102 = vunpack.c.l.b16 %v2842
  %v3103 = vunpack.c.l.b16 %v2843
  %v3104 = vunpack.c.l.b16 %v2844
  %v3105 = vunpack.c.l.b16 %v2845
  %v3106 = vunpack.c.l.b16 %v2846
  %v3107 = vunpack.c.l.b16 %v2847
  %v3108 = vunpack.c.l.b16 %v2848
  %v3109 = vunpack.c.l.b16 %v2849
  %v3110 = vunpack.c.l.b16 %v2850
  %v3111 = vunpack.c.l.b16 %v2851
  %v3112 = vunpack.c.l.b16 %v2852
  %v3113 = vunpack.c.l.b16 %v2853
  %v3114 = vunpack.c.l.b16 %v2854
  %v3115 = vunpack.c.l.b16 %v2855
  %v3116 = vunpack.c.l.b16 %v2856
  %v3117 = vunpack.c.l.b16 %v2857
  %v3118 = vunpack.c.l.b16 %v2858
  %v3119 = vunpack.c.l.b16 %v2859
  %v3120 = vunpack.c.l.b16 %v2860
  %v3121 = vunpack.c.l.b16 %v2861
  %v3122 = vunpack.c.l.b16 %v2862
  %v3123 = vunpack.c.l.b16 %v2863
  %v3124 = vunpack.c.l.b16 %v2864
  %v3125 = vunpack.c.l.b16 %v2865
  %v3126 = vunpack.c.l.b16 %v2866
  %v3127 = vunpack.c.l.b16 %v2867
  %v3128 = vunpack.c.l.b16 %v2868
  %v3129 = vunpack.c.l.b16 %v2869
  %v3130 = vunpack.c.l.b16 %v2870
  %v3131 = vunpack.c.l.b16 %v2871
  %v3132 = vunpack.c.l.b16 %v2872
  %v3133 = vunpack.c.l.b16 %v2873
  %v3134 = vunpack.c.l.b16 %v2874
  %v3135 = vunpack.c.l.b16 %v2875
  %v3136 = vunpack.c.l.b16 %v2876
  %v3137 = vunpack.c.l.b16 %v2877
  %v3138 = vunpack.c.l.b16 %v2878
  %v3139 = vunpack.c.l.b16 %v2879
  %v3140 = vunpack.c.l.b16 %v2880
  %v3141 = vunpack.c.l.b16 %v2881
  %v3142 = vunpack.c.l.b16 %v2882
  %v3143 = vunpack.c.l.b16 %v2883
  %v3144 = vunpack.c.l.b16 %v2884
  %v3145 = vunpack.c.l.b16 %v2885
  %v3146 = vunpack.c.l.b16 %v2886
  %v3147 = vunpack.c.l.b16 %v2887
  %v3148 = vunpack.c.l.b16 %v2888
  %v3149 = vunpack.c.l.b16 %v2889
  %v3150 = vunpack.c.l.b16 %v2890
  %v3151 = vunpack.c.l.b16 %v2891
  %v3152 = vunpack.c.l.b16 %v2892
  %v3153 = vunpack.c.l.b16 %v2893
  %v3154 = vunpack.c.l.b16 %v2894
  %v3155 = vunpack.c.l.b16 %v2895
  %v3156 = vunpack.c.l.b16 %v2896
  %v3157 = vunpack.c.l.b16 %v2897
  %v3158 = vunpack.c.l.b16 %v2898
  %v3159 = vunpack.c.l.b16 %v2899
  %v3160 = vunpack.c.l.b16 %v2900
  %v3161 = vunpack.c.l.b16 %v2901
  %v3162 = vunpack.c.l.b16 %v2902
  %v3163 = vunpack.c.l.b16 %v2903
  %v3164 = vunpack.c.l.b16 %v2904
  %v3165 = vunpack.c.l.b16 %v2905
  %v3166 = vunpack.c.l.b16 %v2906
  %v3167 = vunpack.c.l.b16 %v2907
  %v3168 = vunpack.c.l.b16 %v2908
  %v3169 = vunpack.c.l.b16 %v2909
  %v3170 = vunpack.c.l.b16 %v2910
  %v3171 = vunpack.c.l.b16 %v2911
  %v3172 = vunpack.c.l.b16 %v2912
  %v3173 = vunpack.c.l.b16 %v2913
  %v3174 = vunpack.c.l.b16 %v2914
  %v3175 = vunpack.c.l.b16 %v2915
  %v3176 = vunpack.c.l.b16 %v2916
  %v3177 = vunpack.c.l.b16 %v2917
  %v3178 = vunpack.c.l.b16 %v2918
  %v3179 = vunpack.c.l.b16 %v2919
  %v3180 = vunpack.c.l.b16 %v2920
  %v3181 = vunpack.c.l.b16 %v2921
  %v3182 = vunpack.c.l.b16 %v2922
  %v3183 = vunpack.c.l.b16 %v2923
  %v3184 = vpack.c.b16 %v3057, %v3056
  %v3185 = vpack.c.b16 %v3059, %v3058
  %v3186 = vpack.c.b16 %v3061, %v3060
  %v3187 = vpack.c.b16 %v3063, %v3062
  %v3188 = vpack.c.b16 %v3065, %v3064
  %v3189 = vpack.c.b16 %v3067, %v3066
  %v3190 = vpack.c.b16 %v3069, %v3068
  %v3191 = vpack.c.b16 %v3071, %v3070
  %v3192 = vpack.c.b16 %v3073, %v3072
  %v3193 = vpack.c.b16 %v3075, %v3074
  %v3194 = vpack.c.b16 %v3077, %v3076
  %v3195 = vpack.c.b16 %v3079, %v3078
  %v3196 = vpack.c.b16 %v3081, %v3080
  %v3197 = vpack.c.b16 %v3083, %v3082
  %v3198 = vpack.c.b16 %v3085, %v3084
  %v3199 = vpack.c.b16 %v3087, %v3086
  %v3200 = vpack.c.b16 %v3089, %v3088
  %v3201 = vpack.c.b16 %v3091, %v3090
  %v3202 = vpack.c.b16 %v3093, %v3092
  %v3203 = vpack.c.b16 %v3095, %v3094
  %v3204 = vpack.c.b16 %v3097, %v3096
  %v3205 = vpack.c.b16 %v3099, %v3098
  %v3206 = vpack.c.b16 %v3101, %v3100
  %v3207 = vpack.c.b16 %v3103, %v3102
  %v3208 = vpack.c.b16 %v3105, %v3104
  %v3209 = vpack.c.b16 %v3107, %v3106
  %v3210 = vpack.c.b16 %v3109, %v3108
  %v3211 = vpack.c.b16 %v3111, %v3110
  %v3212 = vpack.c.b16 %v3113, %v3112
  %v3213 = vpack.c.b16 %v3115, %v3114
  %v3214 = vpack.c.b16 %v3117, %v3116
  %v3215 = vpack.c.b16 %v3119, %v3118
  %v3216 = vpack.c.b16 %v3121, %v3120
  %v3217 = vpack.c.b16 %v3123, %v3122
  %v3218 = vpack.c.b16 %v3125, %v3124
  %v3219 = vpack.c.b16 %v3127, %v3126
  %v3220 = vpack.c.b16 %v3129, %v3128
  %v3221 = vpack.c.b16 %v3131, %v3130
  %v3222 = vpack.c.b16 %v3133, %v3132
  %v3223 = vpack.c.b16 %v3135, %v3134
  %v3224 = vpack.c.b16 %v3137, %v3136
  %v3225 = vpack.c.b16 %v3139, %v3138
  %v3226 = vpack.c.b16 %v3141, %v3140
  %v3227 = vpack.c.b16 %v3143, %v3142
  %v3228 = vpack.c.b16 %v3145, %v3144
  %v3229 = vpack.c.b16 %v3147, %v3146
  %v3230 = vpack.c.b16 %v3149, %v3148
  %v3231 = vpack.c.b16 %v3151, %v3150
  %v3232 = vpack.c.b16 %v3153, %v3152
  %v3233 = vpack.c.b16 %v3155, %v3154
  %v3234 = vpack.c.b16 %v3157, %v3156
  %v3235 = vpack.c.b16 %v3159, %v3158
  %v3236 = vpack.c.b16 %v3161, %v3160
  %v3237 = vpack.c.b16 %v3163, %v3162
  %v3238 = vpack.c.b16 %v3165, %v3164
  %v3239 = vpack.c.b16 %v3167, %v3166
  %v3240 = vpack.c.b16 %v3169, %v3168
  %v3241 = vpack.c.b16 %v3171, %v3170
  %v3242 = vpack.c.b16 %v3173, %v3172
  %v3243 = vpack.c.b16 %v3175, %v3174
  %v3244 = vpack.c.b16 %v3177, %v3176
  %v3245 = vpack.c.b16 %v3179, %v3178
  %v3246 = vpack.c.b16 %v3181, %v3180
  %v3247 = vpack.c.b16 %v3183, %v3182
  %3312 = vmatpush.bf16.msra.mxu0 %v3191
  %3313 = vmatpush.bf16.msra.mxu0 %v3190
  %3314 = vmatpush.bf16.msra.mxu0 %v3189
  %3315 = vmatpush.bf16.msra.mxu0 %v3188
  %3316 = vmatpush.bf16.msra.mxu0 %v3187
  %3317 = vmatpush.bf16.msra.mxu0 %v3186
  %3318 = vmatpush.bf16.msra.mxu0 %v3185
  %3319 = vmatpush.bf16.msra.mxu0 %v3184
  %3320 = vmatmul.bf16.gmra.mxu0 %v2771
  %v3321 = vpop.f32.mrf.mxu0
  %v3322 = vadd.f32 %v2926, %v3321
  %v3323 = vpop.f32.mrf.mxu0
  %3324 = vdwg.mxu0
  %3325 = vmatpush.bf16.msra.mxu0 %v3199
  %3326 = vmatpush.bf16.msra.mxu0 %v3198
  %3327 = vmatpush.bf16.msra.mxu0 %v3197
  %3328 = vmatpush.bf16.msra.mxu0 %v3196
  %3329 = vmatpush.bf16.msra.mxu0 %v3195
  %3330 = vmatpush.bf16.msra.mxu0 %v3194
  %3331 = vmatpush.bf16.msra.mxu0 %v3193
  %3332 = vmatpush.bf16.msra.mxu0 %v3192
  %3333 = vmatmul.bf16.gmra.mxu0 %v2772
  %v3334 = vpop.f32.mrf.mxu0
  %v3335 = vadd.f32 %v3322, %v3334
  %v3336 = vpop.f32.mrf.mxu0
  %3337 = vdwg.mxu0
  %3338 = vmatpush.bf16.msra.mxu0 %v3207
  %3339 = vmatpush.bf16.msra.mxu0 %v3206
  %3340 = vmatpush.bf16.msra.mxu0 %v3205
  %3341 = vmatpush.bf16.msra.mxu0 %v3204
  %3342 = vmatpush.bf16.msra.mxu0 %v3203
  %3343 = vmatpush.bf16.msra.mxu0 %v3202
  %3344 = vmatpush.bf16.msra.mxu0 %v3201
  %3345 = vmatpush.bf16.msra.mxu0 %v3200
  %3346 = vmatmul.bf16.gmra.mxu0 %v2778
  %v3347 = vpop.f32.mrf.mxu0
  %v3348 = vadd.f32 %v3335, %v3347
  %v3349 = vpop.f32.mrf.mxu0
  %3350 = vdwg.mxu0
  %3351 = vmatpush.bf16.msra.mxu0 %v3215
  %3352 = vmatpush.bf16.msra.mxu0 %v3214
  %3353 = vmatpush.bf16.msra.mxu0 %v3213
  %3354 = vmatpush.bf16.msra.mxu0 %v3212
  %3355 = vmatpush.bf16.msra.mxu0 %v3211
  %3356 = vmatpush.bf16.msra.mxu0 %v3210
  %3357 = vmatpush.bf16.msra.mxu0 %v3209
  %3358 = vmatpush.bf16.msra.mxu0 %v3208
  %3359 = vmatmul.bf16.gmra.mxu0 %v2779
  %v3360 = vpop.f32.mrf.mxu0
  %v3361 = vadd.f32 %v3348, %v3360
  %v3362 = vpop.f32.mrf.mxu0
  %3363 = vdwg.mxu0
  %3364 = vmatpush.bf16.msra.mxu0 %v3223
  %3365 = vmatpush.bf16.msra.mxu0 %v3222
  %3366 = vmatpush.bf16.msra.mxu0 %v3221
  %3367 = vmatpush.bf16.msra.mxu0 %v3220
  %3368 = vmatpush.bf16.msra.mxu0 %v3219
  %3369 = vmatpush.bf16.msra.mxu0 %v3218
  %3370 = vmatpush.bf16.msra.mxu0 %v3217
  %3371 = vmatpush.bf16.msra.mxu0 %v3216
  %3372 = vmatmul.bf16.gmra.mxu0 %v2785
  %v3373 = vpop.f32.mrf.mxu0
  %v3374 = vadd.f32 %v3361, %v3373
  %v3375 = vpop.f32.mrf.mxu0
  %3376 = vdwg.mxu0
  %3377 = vmatpush.bf16.msra.mxu0 %v3231
  %3378 = vmatpush.bf16.msra.mxu0 %v3230
  %3379 = vmatpush.bf16.msra.mxu0 %v3229
  %3380 = vmatpush.bf16.msra.mxu0 %v3228
  %3381 = vmatpush.bf16.msra.mxu0 %v3227
  %3382 = vmatpush.bf16.msra.mxu0 %v3226
  %3383 = vmatpush.bf16.msra.mxu0 %v3225
  %3384 = vmatpush.bf16.msra.mxu0 %v3224
  %3385 = vmatmul.bf16.gmra.mxu0 %v2786
  %v3386 = vpop.f32.mrf.mxu0
  %v3387 = vadd.f32 %v3374, %v3386
  %v3388 = vpop.f32.mrf.mxu0
  %3389 = vdwg.mxu0
  %3390 = vmatpush.bf16.msra.mxu0 %v3239
  %3391 = vmatpush.bf16.msra.mxu0 %v3238
  %3392 = vmatpush.bf16.msra.mxu0 %v3237
  %3393 = vmatpush.bf16.msra.mxu0 %v3236
  %3394 = vmatpush.bf16.msra.mxu0 %v3235
  %3395 = vmatpush.bf16.msra.mxu0 %v3234
  %3396 = vmatpush.bf16.msra.mxu0 %v3233
  %3397 = vmatpush.bf16.msra.mxu0 %v3232
  %3398 = vmatmul.bf16.gmra.mxu0 %v2792
  %v3399 = vpop.f32.mrf.mxu0
  %v3400 = vadd.f32 %v3387, %v3399
  %v3401 = vpop.f32.mrf.mxu0
  %3402 = vdwg.mxu0
  %3403 = vmatpush.bf16.msra.mxu0 %v3247
  %3404 = vmatpush.bf16.msra.mxu0 %v3246
  %3405 = vmatpush.bf16.msra.mxu0 %v3245
  %3406 = vmatpush.bf16.msra.mxu0 %v3244
  %3407 = vmatpush.bf16.msra.mxu0 %v3243
  %3408 = vmatpush.bf16.msra.mxu0 %v3242
  %3409 = vmatpush.bf16.msra.mxu0 %v3241
  %3410 = vmatpush.bf16.msra.mxu0 %v3240
  %3411 = vmatmul.bf16.gmra.mxu0 %v2793
  %v3412 = vpop.f32.mrf.mxu0
  %v3413 = vadd.f32 %v3400, %v3412
  %v3414 = vpop.f32.mrf.mxu0
  %3415 = vdwg.mxu0
  %3416 = vst [vmem:[%s16] sm:$0xff] %v3413
  // Predicated region
  $region66: #{encoder_forward.1} parent=0 // pred_check
    _
  $region67: #{encoder_forward.1} parent=0 // pred_check_branch
    %3418 = sbr.rel (0) target = $region69
  $region68: #{encoder_forward.1} parent=0 // pred_region
    _
  $region69: #{encoder_forward.1} parent=0 // pred_fallthru
    _
  // Predicated region
  $region70: #{encoder_forward.1} parent=0 // pred_check
    _
  $region71: #{encoder_forward.1} parent=0 // pred_check_branch
    %3420 = sbr.rel (0) target = $region73
  $region72: #{encoder_forward.1} parent=0 // pred_region
    _
  $region73: #{encoder_forward.1} parent=0 // pred_fallthru
    _

</llo_original>
